<compile_context>
chip_gen: v7x
topology: tpu7x:2x2x1
jax: 0.10.0
libtpu: 0.0.40
codegen_flags: <defaults>
</compile_context>

<pallas_src>
import functools

import numpy as np
import jax
import jax.numpy as jnp
from jax import lax
from jax.experimental import pallas as pl
from jax.experimental.pallas import tpu as pltpu


def _round_up(a, b):
    return (a + b - 1) // b * b


def _choose_tb(B, tb_max=512):
    # Batch is on the lane axis: TB is a multiple of 128 (lane-dense loads, stores and
    # VPU ops).  Prefer >= 2 grid steps once there is enough work so both v7x TensorCores
    # are used; otherwise one fat tile (per-step fixed overhead dominates this workload).
    if B <= 128:
        return 128
    per_step = _round_up((B + 1) // 2, 128)
    return min(tb_max, per_step)


# ----------------------------------------------------------------------------
# Kernel 1 (fused): pairwise squared distances + Prim MST (dim-0 persistence deaths)
#   in : x  (C, V, TB)            joint means, batch on lanes
#   out: deaths (VP, TB)          squared H0 death values (rows >= V-1 are zero padding)
#        mx     (1, 1, TB)        per-lane max of the squared distance matrix
# ----------------------------------------------------------------------------
def _dist_prim_kernel(x_ref, deaths_ref, mx_ref):
    C, V, TB = x_ref.shape
    VP = deaths_ref.shape[0]
    x = x_ref[...]                                        # (C, V, TB)

    # Pairwise *squared* distances d2[i, j, b] via direct VPU differences
    # (no MXU, no gram-matrix cancellation).  sqrt is deferred to the V-1 deaths.
    d2 = None
    for c in range(C):
        diff = x[c, :, None, :] - x[c, None, :, :]        # (V, V, TB)
        sq = diff * diff
        d2 = sq if d2 is None else d2 + sq

    # Per-lane block max of the squared distances for the global normalisation
    # (global min is always 0: zero diagonal), reduced further in the wrapper.
    mx_ref[...] = jnp.max(jnp.max(d2, axis=0), axis=0).reshape(mx_ref.shape)

    BIG = jnp.float32(3.0e38)
    row_ids = lax.broadcasted_iota(jnp.int32, (V, TB), 0)        # joint ids on sublanes
    lead_ids = lax.broadcasted_iota(jnp.int32, (V, 1, TB), 0)    # row ids on the major axis

    # Prim's MST == dim-0 persistence deaths.  Fully unrolled (V-1 static) and
    # vectorised across the TB batches sitting on the lane axis.  sqrt is monotone,
    # so running on squared distances yields the identical edge / bar multiset.
    key = d2[0]                              # (V, TB): squared dist of every joint to tree {0}
    intree = row_ids == 0                    # joint 0 seeds each tree
    deaths = []
    for _ in range(V - 1):
        masked = jnp.where(intree, BIG, key)                                 # (V, TB)
        w = jnp.min(masked, axis=0, keepdims=True)                           # (1, TB)
        # lowest-index tie-break (matches argmin in the reference); relies on finite dists
        jsel = jnp.min(jnp.where(masked == w, row_ids, jnp.int32(V)),
                       axis=0, keepdims=True)                                # (1, TB)
        intree = jnp.logical_or(intree, row_ids == jsel)
        onehot = lead_ids == jsel[:, None, :]                                # (V, 1, TB)
        row_j = jnp.min(jnp.where(onehot, d2, BIG), axis=0)                  # (V, TB) == d2[jsel[b], :, b]
        key = jnp.minimum(key, row_j)
        deaths.append(w)

    out = jnp.concatenate(deaths, axis=0)                                    # (V-1, TB)
    if VP > V - 1:
        out = jnp.concatenate(
            [out, jnp.zeros((VP - (V - 1), TB), jnp.float32)], axis=0)
    deaths_ref[...] = out
    # TODO(synk): ph_dims > 0 (higher-dimensional Vietoris-Rips persistence via boundary
    # matrix reduction) has no clean Pallas equivalent; only dim-0 (the module default).


# ----------------------------------------------------------------------------
# Kernel 2 (tiny): normalise deaths + StructureElementLayer
#   out[e, b] = sum over the V-1 bars w of
#       exp(-( s0[e]^2 * (0 - c0[e])^2 + s1[e]^2 * (sqrt(w)/max - c1[e])^2 ))
#   E sits on sublanes (no 128-lane padding waste), batch on lanes.
# ----------------------------------------------------------------------------
def _sel_kernel(scale_ref, deaths_ref, params_ref, out_ref, *, n_bars):
    EP, TB = out_ref.shape
    inv_max = scale_ref[0]                                   # 1 / max distance (0 if degenerate)

    # hoisted broadcasts (JAX does not CSE broadcast_in_dim inside the loop)
    term0 = jnp.broadcast_to(params_ref[0], (EP, TB))        # s0^2 * (0 - c0)^2
    c1 = jnp.broadcast_to(params_ref[1], (EP, TB))           # death centres
    s1sq = jnp.broadcast_to(params_ref[2], (EP, TB))         # s1^2

    acc = jnp.zeros((EP, TB), jnp.float32)
    for k in range(n_bars):                                  # only real bars -> no wasted exp
        wn = jnp.sqrt(deaths_ref[k:k + 1, :]) * inv_max      # (1, TB) normalised death
        acc = acc + jnp.exp(-(term0 + s1sq * (wn - c1) ** 2))
    out_ref[...] = acc


# ----------------------------------------------------------------------------
# Wrapper
# ----------------------------------------------------------------------------
def d_topo_encoder(x, centres, sharpness, tb_max=512):
    """x: (N, M, C, T, V); centres/sharpness: (E, 2). Returns (N*M, E) float32."""
    N, M, C, T, V = x.shape
    B = N * M
    E = centres.shape[0]

    # mean over T + transpose to (C, V, B): tiny, plain XLA.  Keeps the kernel's input
    # DMA contiguous and lane-dense with the batch on the lane axis.
    xm = jnp.mean(x.reshape(B, C, T, V).astype(jnp.float32), axis=2)   # (B, C, V)
    xm = jnp.transpose(xm, (1, 2, 0))                                   # (C, V, B)

    TB = _choose_tb(B, tb_max)
    B_pad = _round_up(B, TB)
    G = B_pad // TB
    if B_pad != B:
        # zero-padded batches give all-zero distance matrices: their deaths are 0 and they
        # cannot raise the (non-negative) global max; padded columns are sliced off below.
        xm = jnp.pad(xm, ((0, 0), (0, 0), (0, B_pad - B)))

    VP = _round_up(V - 1, 8)

    deaths, stats = pl.pallas_call(
        _dist_prim_kernel,
        out_shape=(
            jax.ShapeDtypeStruct((VP, B_pad), jnp.float32),   # squared H0 deaths
            jax.ShapeDtypeStruct((G, 1, TB), jnp.float32),    # per-block per-lane max (squared)
        ),
        grid=(G,),
        in_specs=[pl.BlockSpec((C, V, TB), lambda g: (0, 0, g))],
        out_specs=(
            pl.BlockSpec((VP, TB), lambda g: (0, g)),
            pl.BlockSpec((1, 1, TB), lambda g: (g, 0, 0)),
        ),
        compiler_params=pltpu.CompilerParams(dimension_semantics=("parallel",)),
    )(xm)

    # Global normalisation: min is always 0 (zero diagonal), so only the max is needed.
    mx = jnp.sqrt(jnp.max(stats))
    inv = jnp.where(mx > 0, 1.0 / jnp.maximum(mx, jnp.float32(1e-30)), 0.0)
    scale = jnp.reshape(inv, (1,)).astype(jnp.float32)        # (1,) -> SMEM

    # StructureElementLayer parameters with E on sublanes (pad only to a multiple of 8).
    EP = _round_up(E, 8)
    cen = centres.astype(jnp.float32)
    s_sq = sharpness.astype(jnp.float32) ** 2
    term0 = s_sq[:, 0] * cen[:, 0] ** 2                       # s0^2 * (0 - c0)^2
    params = jnp.stack([term0, cen[:, 1], s_sq[:, 1]], axis=0)   # (3, E)
    if EP != E:
        params = jnp.pad(params, ((0, 0), (0, EP - E)))
    params = params[..., None]                                # (3, EP, 1)

    out = pl.pallas_call(
        functools.partial(_sel_kernel, n_bars=V - 1),
        out_shape=jax.ShapeDtypeStruct((EP, B_pad), jnp.float32),
        grid=(G,),
        in_specs=[
            pl.BlockSpec(memory_space=pltpu.MemorySpace.SMEM),   # scale (1,)
            pl.BlockSpec((VP, TB), lambda g: (0, g)),            # deaths
            pl.BlockSpec((3, EP, 1), lambda g: (0, 0, 0)),       # params (whole array)
        ],
        out_specs=pl.BlockSpec((EP, TB), lambda g: (0, g)),
        compiler_params=pltpu.CompilerParams(dimension_semantics=("parallel",)),
    )(scale, deaths, params)

    return out[:E, :B].T                                      # (B, E)


# ----------------------------------------------------------------------------
# Pure numpy reference (same math) for a correctness check
# ----------------------------------------------------------------------------
def _reference(x, centres, sharpness):
    x = np.asarray(x, np.float64)
    N, M, C, T, V = x.shape
    B = N * M
    xm = x.reshape(B, C, T, V).mean(axis=2)                    # (B, C, V)
    diff = xm[:, :, :, None] - xm[:, :, None, :]
    dist = np.sqrt((diff ** 2).sum(axis=1))                    # (B, V, V)
    dist = (dist - dist.min()) / (dist.max() - dist.min())
    cen = np.asarray(centres, np.float64)
    shp = np.asarray(sharpness, np.float64) ** 2
    E = cen.shape[0]
    out = np.zeros((B, E))
    for b in range(B):
        d = dist[b]
        intree = np.zeros(V, bool)
        intree[0] = True
        key = d[0].copy()
        deaths = []
        for _ in range(V - 1):                                 # Prim's MST == H0 deaths
            masked = np.where(intree, np.inf, key)
            j = int(np.argmin(masked))
            deaths.append(masked[j])
            intree[j] = True
            key = np.minimum(key, d[j])
        deaths = np.asarray(deaths)
        for e in range(E):
            out[b, e] = np.exp(-(shp[e, 0] * (0.0 - cen[e, 0]) ** 2
                                 + shp[e, 1] * (deaths - cen[e, 1]) ** 2)).sum()
    return out


if __name__ == "__main__":
    N, M, C, T, V = 2, 1, 3, 8, 16          # small shapes; M == n_people == 1
    out_features = 64                        # StructureElementLayer n_elements

    key = jax.random.PRNGKey(0)
    kx, kc = jax.random.split(key)
    x = jax.random.normal(kx, (N, M, C, T, V), dtype=jnp.float32)
    centres = jax.random.uniform(kc, (out_features, 2), dtype=jnp.float32)   # ~ torch.rand
    sharpness = jnp.full((out_features, 2), 3.0, dtype=jnp.float32)          # ~ torch.ones * 3

    y = d_topo_encoder(x, centres, sharpness)
    y = jax.block_until_ready(y)
    assert y.shape == (N * M, out_features)

    y_ref = _reference(np.asarray(x), np.asarray(centres), np.asarray(sharpness))
    np.testing.assert_allclose(np.asarray(y), y_ref, rtol=1e-3, atol=1e-3)

    print("KERNEL_OK")
</pallas_src>

<mosaic_0001>
module attributes {stable_mosaic.version = 11 : i64} {
  func.func @_dist_prim_kernel(%arg0: i32, %arg1: memref<3x16x128xf32, #tpu.memory_space<vmem>>, %arg2: memref<16x128xf32, #tpu.memory_space<vmem>>, %arg3: memref<1x1x128xf32, #tpu.memory_space<vmem>>) attributes {dimension_semantics = [#tpu.dimension_semantics<parallel>], iteration_bounds = array<i64: 1>, scalar_prefetch = 0 : i64, scratch_operands = 0 : i64, tpu.core_type = #tpu.core_type<tc>, window_params = [{transform_indices = @transform_0, window_bounds = array<i64: 3, 16, 128>}, {transform_indices = @transform_1, window_bounds = array<i64: 16, 128>}, {transform_indices = @transform_2, window_bounds = array<i64: 1, 1, 128>}]} {
    %c0 = arith.constant 0 : index
    %c0_0 = arith.constant 0 : index
    %c0_1 = arith.constant 0 : index
    %0 = vector.load %arg1[%c0, %c0_0, %c0_1] : memref<3x16x128xf32, #tpu.memory_space<vmem>>, vector<3x16x128xf32>
    %1 = vector.extract_strided_slice %0 {offsets = [0, 0, 0], sizes = [1, 16, 128], strides = [1, 1, 1]} : vector<3x16x128xf32> to vector<1x16x128xf32>
    %2 = vector.shape_cast %1 : vector<1x16x128xf32> to vector<16x128xf32>
    %3 = vector.shape_cast %2 : vector<16x128xf32> to vector<16x1x128xf32>
    %4 = vector.extract_strided_slice %0 {offsets = [0, 0, 0], sizes = [1, 16, 128], strides = [1, 1, 1]} : vector<3x16x128xf32> to vector<1x16x128xf32>
    %5 = vector.shape_cast %4 : vector<1x16x128xf32> to vector<16x128xf32>
    %6 = vector.shape_cast %5 : vector<16x128xf32> to vector<1x16x128xf32>
    %7 = vector.broadcast %3 : vector<16x1x128xf32> to vector<16x16x128xf32>
    %8 = vector.broadcast %6 : vector<1x16x128xf32> to vector<16x16x128xf32>
    %9 = arith.subf %7, %8 : vector<16x16x128xf32>
    %10 = arith.mulf %9, %9 : vector<16x16x128xf32>
    %11 = vector.extract_strided_slice %0 {offsets = [1, 0, 0], sizes = [1, 16, 128], strides = [1, 1, 1]} : vector<3x16x128xf32> to vector<1x16x128xf32>
    %12 = vector.shape_cast %11 : vector<1x16x128xf32> to vector<16x128xf32>
    %13 = vector.shape_cast %12 : vector<16x128xf32> to vector<16x1x128xf32>
    %14 = vector.extract_strided_slice %0 {offsets = [1, 0, 0], sizes = [1, 16, 128], strides = [1, 1, 1]} : vector<3x16x128xf32> to vector<1x16x128xf32>
    %15 = vector.shape_cast %14 : vector<1x16x128xf32> to vector<16x128xf32>
    %16 = vector.shape_cast %15 : vector<16x128xf32> to vector<1x16x128xf32>
    %17 = vector.broadcast %13 : vector<16x1x128xf32> to vector<16x16x128xf32>
    %18 = vector.broadcast %16 : vector<1x16x128xf32> to vector<16x16x128xf32>
    %19 = arith.subf %17, %18 : vector<16x16x128xf32>
    %20 = arith.mulf %19, %19 : vector<16x16x128xf32>
    %21 = arith.addf %10, %20 : vector<16x16x128xf32>
    %22 = vector.extract_strided_slice %0 {offsets = [2, 0, 0], sizes = [1, 16, 128], strides = [1, 1, 1]} : vector<3x16x128xf32> to vector<1x16x128xf32>
    %23 = vector.shape_cast %22 : vector<1x16x128xf32> to vector<16x128xf32>
    %24 = vector.shape_cast %23 : vector<16x128xf32> to vector<16x1x128xf32>
    %25 = vector.extract_strided_slice %0 {offsets = [2, 0, 0], sizes = [1, 16, 128], strides = [1, 1, 1]} : vector<3x16x128xf32> to vector<1x16x128xf32>
    %26 = vector.shape_cast %25 : vector<1x16x128xf32> to vector<16x128xf32>
    %27 = vector.shape_cast %26 : vector<16x128xf32> to vector<1x16x128xf32>
    %28 = vector.broadcast %24 : vector<16x1x128xf32> to vector<16x16x128xf32>
    %29 = vector.broadcast %27 : vector<1x16x128xf32> to vector<16x16x128xf32>
    %30 = arith.subf %28, %29 : vector<16x16x128xf32>
    %31 = arith.mulf %30, %30 : vector<16x16x128xf32>
    %32 = arith.addf %21, %31 : vector<16x16x128xf32>
    %cst = arith.constant dense<0xFF800000> : vector<16x128xf32>
    %33 = vector.multi_reduction <maximumf>, %32, %cst [0] : vector<16x16x128xf32> to vector<16x128xf32>
    %cst_2 = arith.constant dense<0xFF800000> : vector<128xf32>
    %34 = vector.multi_reduction <maximumf>, %33, %cst_2 [0] : vector<16x128xf32> to vector<128xf32>
    %35 = vector.shape_cast %34 : vector<128xf32> to vector<1x1x128xf32>
    %c0_3 = arith.constant 0 : index
    %c0_4 = arith.constant 0 : index
    %c0_5 = arith.constant 0 : index
    %36 = vector.load %arg3[%c0_3, %c0_4, %c0_5] : memref<1x1x128xf32, #tpu.memory_space<vmem>>, vector<1x1x128xf32>
    tpu.vector_store %arg3[%c0_3, %c0_4, %c0_5], %35 {strides = array<i32>} : memref<1x1x128xf32, #tpu.memory_space<vmem>>, vector<1x1x128xf32>,
    %37 = tpu.iota {dimensions = array<i32: 0>} : vector<16x128xi32>
    %38 = tpu.iota {dimensions = array<i32: 0>} : vector<16x1x128xi32>
    %39 = vector.extract_strided_slice %32 {offsets = [0, 0, 0], sizes = [1, 16, 128], strides = [1, 1, 1]} : vector<16x16x128xf32> to vector<1x16x128xf32>
    %40 = vector.shape_cast %39 : vector<1x16x128xf32> to vector<16x128xf32>
    %c0_i32 = arith.constant 0 : i32
    %41 = vector.broadcast %c0_i32 : i32 to vector<16x128xi32>
    %42 = arith.cmpi eq, %37, %41 : vector<16x128xi32>
    %cst_6 = arith.constant 3.000000e+38 : f32
    %43 = vector.broadcast %cst_6 : f32 to vector<16x128xf32>
    %44 = arith.select %42, %43, %40 : vector<16x128xi1>, vector<16x128xf32>
    %cst_7 = arith.constant dense<0x7F800000> : vector<128xf32>
    %45 = vector.multi_reduction <minimumf>, %44, %cst_7 [0] : vector<16x128xf32> to vector<128xf32>
    %46 = vector.shape_cast %45 : vector<128xf32> to vector<1x128xf32>
    %47 = vector.broadcast %46 : vector<1x128xf32> to vector<16x128xf32>
    %48 = arith.cmpf oeq, %44, %47 : vector<16x128xf32>
    %c16_i32 = arith.constant 16 : i32
    %49 = vector.broadcast %c16_i32 : i32 to vector<16x128xi32>
    %50 = arith.select %48, %37, %49 : vector<16x128xi1>, vector<16x128xi32>
    %cst_8 = arith.constant dense<2147483647> : vector<128xi32>
    %51 = vector.multi_reduction <minsi>, %50, %cst_8 [0] : vector<16x128xi32> to vector<128xi32>
    %52 = vector.shape_cast %51 : vector<128xi32> to vector<1x128xi32>
    %53 = vector.broadcast %52 : vector<1x128xi32> to vector<16x128xi32>
    %54 = arith.cmpi eq, %37, %53 : vector<16x128xi32>
    %55 = arith.ori %42, %54 : vector<16x128xi1>
    %56 = vector.shape_cast %52 : vector<1x128xi32> to vector<1x1x128xi32>
    %57 = vector.broadcast %56 : vector<1x1x128xi32> to vector<16x1x128xi32>
    %58 = arith.cmpi eq, %38, %57 : vector<16x1x128xi32>
    %cst_9 = arith.constant 3.000000e+38 : f32
    %59 = vector.shape_cast %58 : vector<16x1x128xi1> to vector<16x1x128xi1>
    %60 = vector.broadcast %59 : vector<16x1x128xi1> to vector<16x16x128xi1>
    %61 = vector.broadcast %cst_9 : f32 to vector<16x16x128xf32>
    %62 = arith.select %60, %32, %61 : vector<16x16x128xi1>, vector<16x16x128xf32>
    %cst_10 = arith.constant dense<0x7F800000> : vector<16x128xf32>
    %63 = vector.multi_reduction <minimumf>, %62, %cst_10 [0] : vector<16x16x128xf32> to vector<16x128xf32>
    %64 = arith.minimumf %40, %63 : vector<16x128xf32>
    %cst_11 = arith.constant 3.000000e+38 : f32
    %65 = vector.broadcast %cst_11 : f32 to vector<16x128xf32>
    %66 = arith.select %55, %65, %64 : vector<16x128xi1>, vector<16x128xf32>
    %cst_12 = arith.constant dense<0x7F800000> : vector<128xf32>
    %67 = vector.multi_reduction <minimumf>, %66, %cst_12 [0] : vector<16x128xf32> to vector<128xf32>
    %68 = vector.shape_cast %67 : vector<128xf32> to vector<1x128xf32>
    %69 = vector.broadcast %68 : vector<1x128xf32> to vector<16x128xf32>
    %70 = arith.cmpf oeq, %66, %69 : vector<16x128xf32>
    %c16_i32_13 = arith.constant 16 : i32
    %71 = vector.broadcast %c16_i32_13 : i32 to vector<16x128xi32>
    %72 = arith.select %70, %37, %71 : vector<16x128xi1>, vector<16x128xi32>
    %cst_14 = arith.constant dense<2147483647> : vector<128xi32>
    %73 = vector.multi_reduction <minsi>, %72, %cst_14 [0] : vector<16x128xi32> to vector<128xi32>
    %74 = vector.shape_cast %73 : vector<128xi32> to vector<1x128xi32>
    %75 = vector.broadcast %74 : vector<1x128xi32> to vector<16x128xi32>
    %76 = arith.cmpi eq, %37, %75 : vector<16x128xi32>
    %77 = arith.ori %55, %76 : vector<16x128xi1>
    %78 = vector.shape_cast %74 : vector<1x128xi32> to vector<1x1x128xi32>
    %79 = vector.broadcast %78 : vector<1x1x128xi32> to vector<16x1x128xi32>
    %80 = arith.cmpi eq, %38, %79 : vector<16x1x128xi32>
    %cst_15 = arith.constant 3.000000e+38 : f32
    %81 = vector.shape_cast %80 : vector<16x1x128xi1> to vector<16x1x128xi1>
    %82 = vector.broadcast %81 : vector<16x1x128xi1> to vector<16x16x128xi1>
    %83 = vector.broadcast %cst_15 : f32 to vector<16x16x128xf32>
    %84 = arith.select %82, %32, %83 : vector<16x16x128xi1>, vector<16x16x128xf32>
    %cst_16 = arith.constant dense<0x7F800000> : vector<16x128xf32>
    %85 = vector.multi_reduction <minimumf>, %84, %cst_16 [0] : vector<16x16x128xf32> to vector<16x128xf32>
    %86 = arith.minimumf %64, %85 : vector<16x128xf32>
    %cst_17 = arith.constant 3.000000e+38 : f32
    %87 = vector.broadcast %cst_17 : f32 to vector<16x128xf32>
    %88 = arith.select %77, %87, %86 : vector<16x128xi1>, vector<16x128xf32>
    %cst_18 = arith.constant dense<0x7F800000> : vector<128xf32>
    %89 = vector.multi_reduction <minimumf>, %88, %cst_18 [0] : vector<16x128xf32> to vector<128xf32>
    %90 = vector.shape_cast %89 : vector<128xf32> to vector<1x128xf32>
    %91 = vector.broadcast %90 : vector<1x128xf32> to vector<16x128xf32>
    %92 = arith.cmpf oeq, %88, %91 : vector<16x128xf32>
    %c16_i32_19 = arith.constant 16 : i32
    %93 = vector.broadcast %c16_i32_19 : i32 to vector<16x128xi32>
    %94 = arith.select %92, %37, %93 : vector<16x128xi1>, vector<16x128xi32>
    %cst_20 = arith.constant dense<2147483647> : vector<128xi32>
    %95 = vector.multi_reduction <minsi>, %94, %cst_20 [0] : vector<16x128xi32> to vector<128xi32>
    %96 = vector.shape_cast %95 : vector<128xi32> to vector<1x128xi32>
    %97 = vector.broadcast %96 : vector<1x128xi32> to vector<16x128xi32>
    %98 = arith.cmpi eq, %37, %97 : vector<16x128xi32>
    %99 = arith.ori %77, %98 : vector<16x128xi1>
    %100 = vector.shape_cast %96 : vector<1x128xi32> to vector<1x1x128xi32>
    %101 = vector.broadcast %100 : vector<1x1x128xi32> to vector<16x1x128xi32>
    %102 = arith.cmpi eq, %38, %101 : vector<16x1x128xi32>
    %cst_21 = arith.constant 3.000000e+38 : f32
    %103 = vector.shape_cast %102 : vector<16x1x128xi1> to vector<16x1x128xi1>
    %104 = vector.broadcast %103 : vector<16x1x128xi1> to vector<16x16x128xi1>
    %105 = vector.broadcast %cst_21 : f32 to vector<16x16x128xf32>
    %106 = arith.select %104, %32, %105 : vector<16x16x128xi1>, vector<16x16x128xf32>
    %cst_22 = arith.constant dense<0x7F800000> : vector<16x128xf32>
    %107 = vector.multi_reduction <minimumf>, %106, %cst_22 [0] : vector<16x16x128xf32> to vector<16x128xf32>
    %108 = arith.minimumf %86, %107 : vector<16x128xf32>
    %cst_23 = arith.constant 3.000000e+38 : f32
    %109 = vector.broadcast %cst_23 : f32 to vector<16x128xf32>
    %110 = arith.select %99, %109, %108 : vector<16x128xi1>, vector<16x128xf32>
    %cst_24 = arith.constant dense<0x7F800000> : vector<128xf32>
    %111 = vector.multi_reduction <minimumf>, %110, %cst_24 [0] : vector<16x128xf32> to vector<128xf32>
    %112 = vector.shape_cast %111 : vector<128xf32> to vector<1x128xf32>
    %113 = vector.broadcast %112 : vector<1x128xf32> to vector<16x128xf32>
    %114 = arith.cmpf oeq, %110, %113 : vector<16x128xf32>
    %c16_i32_25 = arith.constant 16 : i32
    %115 = vector.broadcast %c16_i32_25 : i32 to vector<16x128xi32>
    %116 = arith.select %114, %37, %115 : vector<16x128xi1>, vector<16x128xi32>
    %cst_26 = arith.constant dense<2147483647> : vector<128xi32>
    %117 = vector.multi_reduction <minsi>, %116, %cst_26 [0] : vector<16x128xi32> to vector<128xi32>
    %118 = vector.shape_cast %117 : vector<128xi32> to vector<1x128xi32>
    %119 = vector.broadcast %118 : vector<1x128xi32> to vector<16x128xi32>
    %120 = arith.cmpi eq, %37, %119 : vector<16x128xi32>
    %121 = arith.ori %99, %120 : vector<16x128xi1>
    %122 = vector.shape_cast %118 : vector<1x128xi32> to vector<1x1x128xi32>
    %123 = vector.broadcast %122 : vector<1x1x128xi32> to vector<16x1x128xi32>
    %124 = arith.cmpi eq, %38, %123 : vector<16x1x128xi32>
    %cst_27 = arith.constant 3.000000e+38 : f32
    %125 = vector.shape_cast %124 : vector<16x1x128xi1> to vector<16x1x128xi1>
    %126 = vector.broadcast %125 : vector<16x1x128xi1> to vector<16x16x128xi1>
    %127 = vector.broadcast %cst_27 : f32 to vector<16x16x128xf32>
    %128 = arith.select %126, %32, %127 : vector<16x16x128xi1>, vector<16x16x128xf32>
    %cst_28 = arith.constant dense<0x7F800000> : vector<16x128xf32>
    %129 = vector.multi_reduction <minimumf>, %128, %cst_28 [0] : vector<16x16x128xf32> to vector<16x128xf32>
    %130 = arith.minimumf %108, %129 : vector<16x128xf32>
    %cst_29 = arith.constant 3.000000e+38 : f32
    %131 = vector.broadcast %cst_29 : f32 to vector<16x128xf32>
    %132 = arith.select %121, %131, %130 : vector<16x128xi1>, vector<16x128xf32>
    %cst_30 = arith.constant dense<0x7F800000> : vector<128xf32>
    %133 = vector.multi_reduction <minimumf>, %132, %cst_30 [0] : vector<16x128xf32> to vector<128xf32>
    %134 = vector.shape_cast %133 : vector<128xf32> to vector<1x128xf32>
    %135 = vector.broadcast %134 : vector<1x128xf32> to vector<16x128xf32>
    %136 = arith.cmpf oeq, %132, %135 : vector<16x128xf32>
    %c16_i32_31 = arith.constant 16 : i32
    %137 = vector.broadcast %c16_i32_31 : i32 to vector<16x128xi32>
    %138 = arith.select %136, %37, %137 : vector<16x128xi1>, vector<16x128xi32>
    %cst_32 = arith.constant dense<2147483647> : vector<128xi32>
    %139 = vector.multi_reduction <minsi>, %138, %cst_32 [0] : vector<16x128xi32> to vector<128xi32>
    %140 = vector.shape_cast %139 : vector<128xi32> to vector<1x128xi32>
    %141 = vector.broadcast %140 : vector<1x128xi32> to vector<16x128xi32>
    %142 = arith.cmpi eq, %37, %141 : vector<16x128xi32>
    %143 = arith.ori %121, %142 : vector<16x128xi1>
    %144 = vector.shape_cast %140 : vector<1x128xi32> to vector<1x1x128xi32>
    %145 = vector.broadcast %144 : vector<1x1x128xi32> to vector<16x1x128xi32>
    %146 = arith.cmpi eq, %38, %145 : vector<16x1x128xi32>
    %cst_33 = arith.constant 3.000000e+38 : f32
    %147 = vector.shape_cast %146 : vector<16x1x128xi1> to vector<16x1x128xi1>
    %148 = vector.broadcast %147 : vector<16x1x128xi1> to vector<16x16x128xi1>
    %149 = vector.broadcast %cst_33 : f32 to vector<16x16x128xf32>
    %150 = arith.select %148, %32, %149 : vector<16x16x128xi1>, vector<16x16x128xf32>
    %cst_34 = arith.constant dense<0x7F800000> : vector<16x128xf32>
    %151 = vector.multi_reduction <minimumf>, %150, %cst_34 [0] : vector<16x16x128xf32> to vector<16x128xf32>
    %152 = arith.minimumf %130, %151 : vector<16x128xf32>
    %cst_35 = arith.constant 3.000000e+38 : f32
    %153 = vector.broadcast %cst_35 : f32 to vector<16x128xf32>
    %154 = arith.select %143, %153, %152 : vector<16x128xi1>, vector<16x128xf32>
    %cst_36 = arith.constant dense<0x7F800000> : vector<128xf32>
    %155 = vector.multi_reduction <minimumf>, %154, %cst_36 [0] : vector<16x128xf32> to vector<128xf32>
    %156 = vector.shape_cast %155 : vector<128xf32> to vector<1x128xf32>
    %157 = vector.broadcast %156 : vector<1x128xf32> to vector<16x128xf32>
    %158 = arith.cmpf oeq, %154, %157 : vector<16x128xf32>
    %c16_i32_37 = arith.constant 16 : i32
    %159 = vector.broadcast %c16_i32_37 : i32 to vector<16x128xi32>
    %160 = arith.select %158, %37, %159 : vector<16x128xi1>, vector<16x128xi32>
    %cst_38 = arith.constant dense<2147483647> : vector<128xi32>
    %161 = vector.multi_reduction <minsi>, %160, %cst_38 [0] : vector<16x128xi32> to vector<128xi32>
    %162 = vector.shape_cast %161 : vector<128xi32> to vector<1x128xi32>
    %163 = vector.broadcast %162 : vector<1x128xi32> to vector<16x128xi32>
    %164 = arith.cmpi eq, %37, %163 : vector<16x128xi32>
    %165 = arith.ori %143, %164 : vector<16x128xi1>
    %166 = vector.shape_cast %162 : vector<1x128xi32> to vector<1x1x128xi32>
    %167 = vector.broadcast %166 : vector<1x1x128xi32> to vector<16x1x128xi32>
    %168 = arith.cmpi eq, %38, %167 : vector<16x1x128xi32>
    %cst_39 = arith.constant 3.000000e+38 : f32
    %169 = vector.shape_cast %168 : vector<16x1x128xi1> to vector<16x1x128xi1>
    %170 = vector.broadcast %169 : vector<16x1x128xi1> to vector<16x16x128xi1>
    %171 = vector.broadcast %cst_39 : f32 to vector<16x16x128xf32>
    %172 = arith.select %170, %32, %171 : vector<16x16x128xi1>, vector<16x16x128xf32>
    %cst_40 = arith.constant dense<0x7F800000> : vector<16x128xf32>
    %173 = vector.multi_reduction <minimumf>, %172, %cst_40 [0] : vector<16x16x128xf32> to vector<16x128xf32>
    %174 = arith.minimumf %152, %173 : vector<16x128xf32>
    %cst_41 = arith.constant 3.000000e+38 : f32
    %175 = vector.broadcast %cst_41 : f32 to vector<16x128xf32>
    %176 = arith.select %165, %175, %174 : vector<16x128xi1>, vector<16x128xf32>
    %cst_42 = arith.constant dense<0x7F800000> : vector<128xf32>
    %177 = vector.multi_reduction <minimumf>, %176, %cst_42 [0] : vector<16x128xf32> to vector<128xf32>
    %178 = vector.shape_cast %177 : vector<128xf32> to vector<1x128xf32>
    %179 = vector.broadcast %178 : vector<1x128xf32> to vector<16x128xf32>
    %180 = arith.cmpf oeq, %176, %179 : vector<16x128xf32>
    %c16_i32_43 = arith.constant 16 : i32
    %181 = vector.broadcast %c16_i32_43 : i32 to vector<16x128xi32>
    %182 = arith.select %180, %37, %181 : vector<16x128xi1>, vector<16x128xi32>
    %cst_44 = arith.constant dense<2147483647> : vector<128xi32>
    %183 = vector.multi_reduction <minsi>, %182, %cst_44 [0] : vector<16x128xi32> to vector<128xi32>
    %184 = vector.shape_cast %183 : vector<128xi32> to vector<1x128xi32>
    %185 = vector.broadcast %184 : vector<1x128xi32> to vector<16x128xi32>
    %186 = arith.cmpi eq, %37, %185 : vector<16x128xi32>
    %187 = arith.ori %165, %186 : vector<16x128xi1>
    %188 = vector.shape_cast %184 : vector<1x128xi32> to vector<1x1x128xi32>
    %189 = vector.broadcast %188 : vector<1x1x128xi32> to vector<16x1x128xi32>
    %190 = arith.cmpi eq, %38, %189 : vector<16x1x128xi32>
    %cst_45 = arith.constant 3.000000e+38 : f32
    %191 = vector.shape_cast %190 : vector<16x1x128xi1> to vector<16x1x128xi1>
    %192 = vector.broadcast %191 : vector<16x1x128xi1> to vector<16x16x128xi1>
    %193 = vector.broadcast %cst_45 : f32 to vector<16x16x128xf32>
    %194 = arith.select %192, %32, %193 : vector<16x16x128xi1>, vector<16x16x128xf32>
    %cst_46 = arith.constant dense<0x7F800000> : vector<16x128xf32>
    %195 = vector.multi_reduction <minimumf>, %194, %cst_46 [0] : vector<16x16x128xf32> to vector<16x128xf32>
    %196 = arith.minimumf %174, %195 : vector<16x128xf32>
    %cst_47 = arith.constant 3.000000e+38 : f32
    %197 = vector.broadcast %cst_47 : f32 to vector<16x128xf32>
    %198 = arith.select %187, %197, %196 : vector<16x128xi1>, vector<16x128xf32>
    %cst_48 = arith.constant dense<0x7F800000> : vector<128xf32>
    %199 = vector.multi_reduction <minimumf>, %198, %cst_48 [0] : vector<16x128xf32> to vector<128xf32>
    %200 = vector.shape_cast %199 : vector<128xf32> to vector<1x128xf32>
    %201 = vector.broadcast %200 : vector<1x128xf32> to vector<16x128xf32>
    %202 = arith.cmpf oeq, %198, %201 : vector<16x128xf32>
    %c16_i32_49 = arith.constant 16 : i32
    %203 = vector.broadcast %c16_i32_49 : i32 to vector<16x128xi32>
    %204 = arith.select %202, %37, %203 : vector<16x128xi1>, vector<16x128xi32>
    %cst_50 = arith.constant dense<2147483647> : vector<128xi32>
    %205 = vector.multi_reduction <minsi>, %204, %cst_50 [0] : vector<16x128xi32> to vector<128xi32>
    %206 = vector.shape_cast %205 : vector<128xi32> to vector<1x128xi32>
    %207 = vector.broadcast %206 : vector<1x128xi32> to vector<16x128xi32>
    %208 = arith.cmpi eq, %37, %207 : vector<16x128xi32>
    %209 = arith.ori %187, %208 : vector<16x128xi1>
    %210 = vector.shape_cast %206 : vector<1x128xi32> to vector<1x1x128xi32>
    %211 = vector.broadcast %210 : vector<1x1x128xi32> to vector<16x1x128xi32>
    %212 = arith.cmpi eq, %38, %211 : vector<16x1x128xi32>
    %cst_51 = arith.constant 3.000000e+38 : f32
    %213 = vector.shape_cast %212 : vector<16x1x128xi1> to vector<16x1x128xi1>
    %214 = vector.broadcast %213 : vector<16x1x128xi1> to vector<16x16x128xi1>
    %215 = vector.broadcast %cst_51 : f32 to vector<16x16x128xf32>
    %216 = arith.select %214, %32, %215 : vector<16x16x128xi1>, vector<16x16x128xf32>
    %cst_52 = arith.constant dense<0x7F800000> : vector<16x128xf32>
    %217 = vector.multi_reduction <minimumf>, %216, %cst_52 [0] : vector<16x16x128xf32> to vector<16x128xf32>
    %218 = arith.minimumf %196, %217 : vector<16x128xf32>
    %cst_53 = arith.constant 3.000000e+38 : f32
    %219 = vector.broadcast %cst_53 : f32 to vector<16x128xf32>
    %220 = arith.select %209, %219, %218 : vector<16x128xi1>, vector<16x128xf32>
    %cst_54 = arith.constant dense<0x7F800000> : vector<128xf32>
    %221 = vector.multi_reduction <minimumf>, %220, %cst_54 [0] : vector<16x128xf32> to vector<128xf32>
    %222 = vector.shape_cast %221 : vector<128xf32> to vector<1x128xf32>
    %223 = vector.broadcast %222 : vector<1x128xf32> to vector<16x128xf32>
    %224 = arith.cmpf oeq, %220, %223 : vector<16x128xf32>
    %c16_i32_55 = arith.constant 16 : i32
    %225 = vector.broadcast %c16_i32_55 : i32 to vector<16x128xi32>
    %226 = arith.select %224, %37, %225 : vector<16x128xi1>, vector<16x128xi32>
    %cst_56 = arith.constant dense<2147483647> : vector<128xi32>
    %227 = vector.multi_reduction <minsi>, %226, %cst_56 [0] : vector<16x128xi32> to vector<128xi32>
    %228 = vector.shape_cast %227 : vector<128xi32> to vector<1x128xi32>
    %229 = vector.broadcast %228 : vector<1x128xi32> to vector<16x128xi32>
    %230 = arith.cmpi eq, %37, %229 : vector<16x128xi32>
    %231 = arith.ori %209, %230 : vector<16x128xi1>
    %232 = vector.shape_cast %228 : vector<1x128xi32> to vector<1x1x128xi32>
    %233 = vector.broadcast %232 : vector<1x1x128xi32> to vector<16x1x128xi32>
    %234 = arith.cmpi eq, %38, %233 : vector<16x1x128xi32>
    %cst_57 = arith.constant 3.000000e+38 : f32
    %235 = vector.shape_cast %234 : vector<16x1x128xi1> to vector<16x1x128xi1>
    %236 = vector.broadcast %235 : vector<16x1x128xi1> to vector<16x16x128xi1>
    %237 = vector.broadcast %cst_57 : f32 to vector<16x16x128xf32>
    %238 = arith.select %236, %32, %237 : vector<16x16x128xi1>, vector<16x16x128xf32>
    %cst_58 = arith.constant dense<0x7F800000> : vector<16x128xf32>
    %239 = vector.multi_reduction <minimumf>, %238, %cst_58 [0] : vector<16x16x128xf32> to vector<16x128xf32>
    %240 = arith.minimumf %218, %239 : vector<16x128xf32>
    %cst_59 = arith.constant 3.000000e+38 : f32
    %241 = vector.broadcast %cst_59 : f32 to vector<16x128xf32>
    %242 = arith.select %231, %241, %240 : vector<16x128xi1>, vector<16x128xf32>
    %cst_60 = arith.constant dense<0x7F800000> : vector<128xf32>
    %243 = vector.multi_reduction <minimumf>, %242, %cst_60 [0] : vector<16x128xf32> to vector<128xf32>
    %244 = vector.shape_cast %243 : vector<128xf32> to vector<1x128xf32>
    %245 = vector.broadcast %244 : vector<1x128xf32> to vector<16x128xf32>
    %246 = arith.cmpf oeq, %242, %245 : vector<16x128xf32>
    %c16_i32_61 = arith.constant 16 : i32
    %247 = vector.broadcast %c16_i32_61 : i32 to vector<16x128xi32>
    %248 = arith.select %246, %37, %247 : vector<16x128xi1>, vector<16x128xi32>
    %cst_62 = arith.constant dense<2147483647> : vector<128xi32>
    %249 = vector.multi_reduction <minsi>, %248, %cst_62 [0] : vector<16x128xi32> to vector<128xi32>
    %250 = vector.shape_cast %249 : vector<128xi32> to vector<1x128xi32>
    %251 = vector.broadcast %250 : vector<1x128xi32> to vector<16x128xi32>
    %252 = arith.cmpi eq, %37, %251 : vector<16x128xi32>
    %253 = arith.ori %231, %252 : vector<16x128xi1>
    %254 = vector.shape_cast %250 : vector<1x128xi32> to vector<1x1x128xi32>
    %255 = vector.broadcast %254 : vector<1x1x128xi32> to vector<16x1x128xi32>
    %256 = arith.cmpi eq, %38, %255 : vector<16x1x128xi32>
    %cst_63 = arith.constant 3.000000e+38 : f32
    %257 = vector.shape_cast %256 : vector<16x1x128xi1> to vector<16x1x128xi1>
    %258 = vector.broadcast %257 : vector<16x1x128xi1> to vector<16x16x128xi1>
    %259 = vector.broadcast %cst_63 : f32 to vector<16x16x128xf32>
    %260 = arith.select %258, %32, %259 : vector<16x16x128xi1>, vector<16x16x128xf32>
    %cst_64 = arith.constant dense<0x7F800000> : vector<16x128xf32>
    %261 = vector.multi_reduction <minimumf>, %260, %cst_64 [0] : vector<16x16x128xf32> to vector<16x128xf32>
    %262 = arith.minimumf %240, %261 : vector<16x128xf32>
    %cst_65 = arith.constant 3.000000e+38 : f32
    %263 = vector.broadcast %cst_65 : f32 to vector<16x128xf32>
    %264 = arith.select %253, %263, %262 : vector<16x128xi1>, vector<16x128xf32>
    %cst_66 = arith.constant dense<0x7F800000> : vector<128xf32>
    %265 = vector.multi_reduction <minimumf>, %264, %cst_66 [0] : vector<16x128xf32> to vector<128xf32>
    %266 = vector.shape_cast %265 : vector<128xf32> to vector<1x128xf32>
    %267 = vector.broadcast %266 : vector<1x128xf32> to vector<16x128xf32>
    %268 = arith.cmpf oeq, %264, %267 : vector<16x128xf32>
    %c16_i32_67 = arith.constant 16 : i32
    %269 = vector.broadcast %c16_i32_67 : i32 to vector<16x128xi32>
    %270 = arith.select %268, %37, %269 : vector<16x128xi1>, vector<16x128xi32>
    %cst_68 = arith.constant dense<2147483647> : vector<128xi32>
    %271 = vector.multi_reduction <minsi>, %270, %cst_68 [0] : vector<16x128xi32> to vector<128xi32>
    %272 = vector.shape_cast %271 : vector<128xi32> to vector<1x128xi32>
    %273 = vector.broadcast %272 : vector<1x128xi32> to vector<16x128xi32>
    %274 = arith.cmpi eq, %37, %273 : vector<16x128xi32>
    %275 = arith.ori %253, %274 : vector<16x128xi1>
    %276 = vector.shape_cast %272 : vector<1x128xi32> to vector<1x1x128xi32>
    %277 = vector.broadcast %276 : vector<1x1x128xi32> to vector<16x1x128xi32>
    %278 = arith.cmpi eq, %38, %277 : vector<16x1x128xi32>
    %cst_69 = arith.constant 3.000000e+38 : f32
    %279 = vector.shape_cast %278 : vector<16x1x128xi1> to vector<16x1x128xi1>
    %280 = vector.broadcast %279 : vector<16x1x128xi1> to vector<16x16x128xi1>
    %281 = vector.broadcast %cst_69 : f32 to vector<16x16x128xf32>
    %282 = arith.select %280, %32, %281 : vector<16x16x128xi1>, vector<16x16x128xf32>
    %cst_70 = arith.constant dense<0x7F800000> : vector<16x128xf32>
    %283 = vector.multi_reduction <minimumf>, %282, %cst_70 [0] : vector<16x16x128xf32> to vector<16x128xf32>
    %284 = arith.minimumf %262, %283 : vector<16x128xf32>
    %cst_71 = arith.constant 3.000000e+38 : f32
    %285 = vector.broadcast %cst_71 : f32 to vector<16x128xf32>
    %286 = arith.select %275, %285, %284 : vector<16x128xi1>, vector<16x128xf32>
    %cst_72 = arith.constant dense<0x7F800000> : vector<128xf32>
    %287 = vector.multi_reduction <minimumf>, %286, %cst_72 [0] : vector<16x128xf32> to vector<128xf32>
    %288 = vector.shape_cast %287 : vector<128xf32> to vector<1x128xf32>
    %289 = vector.broadcast %288 : vector<1x128xf32> to vector<16x128xf32>
    %290 = arith.cmpf oeq, %286, %289 : vector<16x128xf32>
    %c16_i32_73 = arith.constant 16 : i32
    %291 = vector.broadcast %c16_i32_73 : i32 to vector<16x128xi32>
    %292 = arith.select %290, %37, %291 : vector<16x128xi1>, vector<16x128xi32>
    %cst_74 = arith.constant dense<2147483647> : vector<128xi32>
    %293 = vector.multi_reduction <minsi>, %292, %cst_74 [0] : vector<16x128xi32> to vector<128xi32>
    %294 = vector.shape_cast %293 : vector<128xi32> to vector<1x128xi32>
    %295 = vector.broadcast %294 : vector<1x128xi32> to vector<16x128xi32>
    %296 = arith.cmpi eq, %37, %295 : vector<16x128xi32>
    %297 = arith.ori %275, %296 : vector<16x128xi1>
    %298 = vector.shape_cast %294 : vector<1x128xi32> to vector<1x1x128xi32>
    %299 = vector.broadcast %298 : vector<1x1x128xi32> to vector<16x1x128xi32>
    %300 = arith.cmpi eq, %38, %299 : vector<16x1x128xi32>
    %cst_75 = arith.constant 3.000000e+38 : f32
    %301 = vector.shape_cast %300 : vector<16x1x128xi1> to vector<16x1x128xi1>
    %302 = vector.broadcast %301 : vector<16x1x128xi1> to vector<16x16x128xi1>
    %303 = vector.broadcast %cst_75 : f32 to vector<16x16x128xf32>
    %304 = arith.select %302, %32, %303 : vector<16x16x128xi1>, vector<16x16x128xf32>
    %cst_76 = arith.constant dense<0x7F800000> : vector<16x128xf32>
    %305 = vector.multi_reduction <minimumf>, %304, %cst_76 [0] : vector<16x16x128xf32> to vector<16x128xf32>
    %306 = arith.minimumf %284, %305 : vector<16x128xf32>
    %cst_77 = arith.constant 3.000000e+38 : f32
    %307 = vector.broadcast %cst_77 : f32 to vector<16x128xf32>
    %308 = arith.select %297, %307, %306 : vector<16x128xi1>, vector<16x128xf32>
    %cst_78 = arith.constant dense<0x7F800000> : vector<128xf32>
    %309 = vector.multi_reduction <minimumf>, %308, %cst_78 [0] : vector<16x128xf32> to vector<128xf32>
    %310 = vector.shape_cast %309 : vector<128xf32> to vector<1x128xf32>
    %311 = vector.broadcast %310 : vector<1x128xf32> to vector<16x128xf32>
    %312 = arith.cmpf oeq, %308, %311 : vector<16x128xf32>
    %c16_i32_79 = arith.constant 16 : i32
    %313 = vector.broadcast %c16_i32_79 : i32 to vector<16x128xi32>
    %314 = arith.select %312, %37, %313 : vector<16x128xi1>, vector<16x128xi32>
    %cst_80 = arith.constant dense<2147483647> : vector<128xi32>
    %315 = vector.multi_reduction <minsi>, %314, %cst_80 [0] : vector<16x128xi32> to vector<128xi32>
    %316 = vector.shape_cast %315 : vector<128xi32> to vector<1x128xi32>
    %317 = vector.broadcast %316 : vector<1x128xi32> to vector<16x128xi32>
    %318 = arith.cmpi eq, %37, %317 : vector<16x128xi32>
    %319 = arith.ori %297, %318 : vector<16x128xi1>
    %320 = vector.shape_cast %316 : vector<1x128xi32> to vector<1x1x128xi32>
    %321 = vector.broadcast %320 : vector<1x1x128xi32> to vector<16x1x128xi32>
    %322 = arith.cmpi eq, %38, %321 : vector<16x1x128xi32>
    %cst_81 = arith.constant 3.000000e+38 : f32
    %323 = vector.shape_cast %322 : vector<16x1x128xi1> to vector<16x1x128xi1>
    %324 = vector.broadcast %323 : vector<16x1x128xi1> to vector<16x16x128xi1>
    %325 = vector.broadcast %cst_81 : f32 to vector<16x16x128xf32>
    %326 = arith.select %324, %32, %325 : vector<16x16x128xi1>, vector<16x16x128xf32>
    %cst_82 = arith.constant dense<0x7F800000> : vector<16x128xf32>
    %327 = vector.multi_reduction <minimumf>, %326, %cst_82 [0] : vector<16x16x128xf32> to vector<16x128xf32>
    %328 = arith.minimumf %306, %327 : vector<16x128xf32>
    %cst_83 = arith.constant 3.000000e+38 : f32
    %329 = vector.broadcast %cst_83 : f32 to vector<16x128xf32>
    %330 = arith.select %319, %329, %328 : vector<16x128xi1>, vector<16x128xf32>
    %cst_84 = arith.constant dense<0x7F800000> : vector<128xf32>
    %331 = vector.multi_reduction <minimumf>, %330, %cst_84 [0] : vector<16x128xf32> to vector<128xf32>
    %332 = vector.shape_cast %331 : vector<128xf32> to vector<1x128xf32>
    %333 = vector.broadcast %332 : vector<1x128xf32> to vector<16x128xf32>
    %334 = arith.cmpf oeq, %330, %333 : vector<16x128xf32>
    %c16_i32_85 = arith.constant 16 : i32
    %335 = vector.broadcast %c16_i32_85 : i32 to vector<16x128xi32>
    %336 = arith.select %334, %37, %335 : vector<16x128xi1>, vector<16x128xi32>
    %cst_86 = arith.constant dense<2147483647> : vector<128xi32>
    %337 = vector.multi_reduction <minsi>, %336, %cst_86 [0] : vector<16x128xi32> to vector<128xi32>
    %338 = vector.shape_cast %337 : vector<128xi32> to vector<1x128xi32>
    %339 = vector.broadcast %338 : vector<1x128xi32> to vector<16x128xi32>
    %340 = arith.cmpi eq, %37, %339 : vector<16x128xi32>
    %341 = arith.ori %319, %340 : vector<16x128xi1>
    %342 = vector.shape_cast %338 : vector<1x128xi32> to vector<1x1x128xi32>
    %343 = vector.broadcast %342 : vector<1x1x128xi32> to vector<16x1x128xi32>
    %344 = arith.cmpi eq, %38, %343 : vector<16x1x128xi32>
    %cst_87 = arith.constant 3.000000e+38 : f32
    %345 = vector.shape_cast %344 : vector<16x1x128xi1> to vector<16x1x128xi1>
    %346 = vector.broadcast %345 : vector<16x1x128xi1> to vector<16x16x128xi1>
    %347 = vector.broadcast %cst_87 : f32 to vector<16x16x128xf32>
    %348 = arith.select %346, %32, %347 : vector<16x16x128xi1>, vector<16x16x128xf32>
    %cst_88 = arith.constant dense<0x7F800000> : vector<16x128xf32>
    %349 = vector.multi_reduction <minimumf>, %348, %cst_88 [0] : vector<16x16x128xf32> to vector<16x128xf32>
    %350 = arith.minimumf %328, %349 : vector<16x128xf32>
    %cst_89 = arith.constant 3.000000e+38 : f32
    %351 = vector.broadcast %cst_89 : f32 to vector<16x128xf32>
    %352 = arith.select %341, %351, %350 : vector<16x128xi1>, vector<16x128xf32>
    %cst_90 = arith.constant dense<0x7F800000> : vector<128xf32>
    %353 = vector.multi_reduction <minimumf>, %352, %cst_90 [0] : vector<16x128xf32> to vector<128xf32>
    %354 = vector.shape_cast %353 : vector<128xf32> to vector<1x128xf32>
    %355 = tpu.concatenate %46, %68, %90, %112, %134, %156, %178, %200, %222, %244, %266, %288, %310, %332, %354 in 0 : vector<1x128xf32>, vector<1x128xf32>, vector<1x128xf32>, vector<1x128xf32>, vector<1x128xf32>, vector<1x128xf32>, vector<1x128xf32>, vector<1x128xf32>, vector<1x128xf32>, vector<1x128xf32>, vector<1x128xf32>, vector<1x128xf32>, vector<1x128xf32>, vector<1x128xf32>, vector<1x128xf32> -> vector<15x128xf32>
    %cst_91 = arith.constant 0.000000e+00 : f32
    %356 = vector.broadcast %cst_91 : f32 to vector<1x128xf32>
    %357 = tpu.concatenate %355, %356 in 0 : vector<15x128xf32>, vector<1x128xf32> -> vector<16x128xf32>
    %c0_92 = arith.constant 0 : index
    %c0_93 = arith.constant 0 : index
    %358 = vector.load %arg2[%c0_92, %c0_93] : memref<16x128xf32, #tpu.memory_space<vmem>>, vector<16x128xf32>
    tpu.vector_store %arg2[%c0_92, %c0_93], %357 {strides = array<i32>} : memref<16x128xf32, #tpu.memory_space<vmem>>, vector<16x128xf32>,
    return
  }
  func.func @transform_0(%arg0: i32) -> (i32, i32, i32) {
    %c0_i32 = arith.constant 0 : i32
    %c0_i32_0 = arith.constant 0 : i32
    %c0_i32_1 = arith.constant 0 : i32
    return %c0_i32, %c0_i32_0, %arg0 : i32, i32, i32
  }
  func.func @transform_1(%arg0: i32) -> (i32, i32) {
    %c0_i32 = arith.constant 0 : i32
    %c0_i32_0 = arith.constant 0 : i32
    return %c0_i32, %arg0 : i32, i32
  }
  func.func @transform_2(%arg0: i32) -> (i32, i32, i32) {
    %c0_i32 = arith.constant 0 : i32
    %c0_i32_0 = arith.constant 0 : i32
    %c0_i32_1 = arith.constant 0 : i32
    return %arg0, %c0_i32, %c0_i32_0 : i32, i32, i32
  }
}

</mosaic_0001>

<llo_original>
// kernel: tpu_custom_call.1
$region0: #{tpu_custom_call.1}
  #allocation0 [shape = 'u32[]', space=smem, size = 0x4, offset = 0x4, fixed_abs, tag = 'smem constant byte address 0x4 - core index']
  #allocation1 [shape = 'u32[144,128]{1,0:T(1,128)}', space=vmem, size = 0x12000, scoped, tag = 'internal scratch']
  %s0 = inlined_call_operand.hbm [shape: f32[3,16,128], index: 0, kind: input, shape index: {}]
  %s1 = inlined_call_operand.hbm [shape: f32[16,128], index: 1, kind: output, shape index: {0}]
  %s2 = inlined_call_operand.hbm [shape: f32[1,1,128], index: 2, kind: output, shape index: {1}]
  %3 = xla_tuple %s1, %s2
  %s4 = sld [smem:[#allocation0]]
  $region26: #{tpu_custom_call.1} parent=0
    _
  %s6 = ssub.s32 1, %s4
  %s7 = scalar_select 0, %s6, %s4
  $region1: #{tpu_custom_call.1} parent=0
    #allocation2 [shape = 'u8[24576]{0}', space=vmem, size = 0x6000, scoped, tag = 'input window, operand 0, single buffered']
    #allocation3 [shape = 's32[1]{0}', space=sflag, size = 0x4, scoped, tag = 'scoped memory for tpu_custom_call.1']
    #allocation4 [shape = 's32[1]{0}', space=sflag, size = 0x4, scoped, tag = 'scoped memory for tpu_custom_call.1']
    #allocation5 [shape = 'u8[8192]{0}', space=vmem, size = 0x2000, scoped, tag = 'output window, operand 0, single buffered']
    #allocation6 [shape = 'u8[512]{0}', space=vmem, size = 0x400, scoped, tag = 'output window, operand 1, single buffered']
    #allocation7 [shape = 's32[1]{0}', space=sflag, size = 0x4, scoped, tag = 'scoped memory for tpu_custom_call.1']
    %8 = vsyncpa [#allocation3], 0
    %9 = vsyncpa [#allocation4], 0
    %10 = vsyncpa [#allocation7], 0
    // Predicated region
    $region2: #{tpu_custom_call.1} parent=1 // pred_check
      _
    $region3: #{tpu_custom_call.1} parent=1 // pred_check_branch
      %12 = sbr.rel (0) target = $region5
    $region4: #{tpu_custom_call.1} parent=1 // pred_region
      %s14 = ssub.s32 768, 768
      %15 = vsyncadd [#allocation3], %s14
      %s16 = sshll.u32 [#allocation2], 4
      %s17 = int_to_ptr.vmem [resolvable:$true] %s16
      %22 = dma.hbm_to_vmem [thread:$0]  %s0, 768, %s17, [#allocation3], 128, 128, 8
    $region5: #{tpu_custom_call.1} parent=1 // pred_fallthru
      _
    // Predicated region
    $region6: #{tpu_custom_call.1} parent=1 // pred_check
      _
    $region7: #{tpu_custom_call.1} parent=1 // pred_check_branch
      %24 = sbr.rel (0) target = $region9
    $region8: #{tpu_custom_call.1} parent=1 // pred_region
      %25 = dma.done [#allocation3], 768
    $region9: #{tpu_custom_call.1} parent=1 // pred_fallthru
      _
    %v26 = vld [vmem:[#allocation2] sm:$0xff]
    %v27 = vld [vmem:[#allocation2 + $0x8] sm:$0xff]
    %v28 = vld [vmem:[#allocation2 + $0x10] sm:$0xff]
    %v29 = vld [vmem:[#allocation2 + $0x18] sm:$0xff]
    %v30 = vld [vmem:[#allocation2 + $0x20] sm:$0xff]
    %v31 = vld [vmem:[#allocation2 + $0x28] sm:$0xff]
    %v34 = vcombine.high %v26, %v26
    %v36 = vunpack.c.l.s4 1966171168
    %v37 = vunpack.c.0.s8 %v36
    %v38 = vlaneseq
    %v39 = vshrl.u32 %v38, 7
    %v40 = vsub.s32 %v37, %v39
    %v41 = vrot.slane %v26, %v40
    %v43 = vunpack.c.l.s4 1966171168
    %v44 = vunpack.c.0.s8 %v43
    %v45 = vlaneseq
    %v46 = vshrl.u32 %v45, 7
    %v47 = vsub.s32 %v44, %v46
    %v48 = vrot.slane %v34, %v47
    %v49 = vcombine.high %v41, %v41
    %v50 = vcombine.high %v48, %v48
    %v52 = vunpack.c.l.s4 1966171168
    %v53 = vunpack.c.0.s8 %v52
    %v54 = vlaneseq
    %v55 = vshrl.u32 %v54, 7
    %v56 = vsub.s32 %v53, %v55
    %v57 = vrot.slane %v41, %v56
    %v59 = vunpack.c.l.s4 1966171168
    %v60 = vunpack.c.0.s8 %v59
    %v61 = vlaneseq
    %v62 = vshrl.u32 %v61, 7
    %v63 = vsub.s32 %v60, %v62
    %v64 = vrot.slane %v48, %v63
    %v66 = vunpack.c.l.s4 1966171168
    %v67 = vunpack.c.0.s8 %v66
    %v68 = vlaneseq
    %v69 = vshrl.u32 %v68, 7
    %v70 = vsub.s32 %v67, %v69
    %v71 = vrot.slane %v49, %v70
    %v73 = vunpack.c.l.s4 1966171168
    %v74 = vunpack.c.0.s8 %v73
    %v75 = vlaneseq
    %v76 = vshrl.u32 %v75, 7
    %v77 = vsub.s32 %v74, %v76
    %v78 = vrot.slane %v50, %v77
    %v79 = vcombine.high %v57, %v57
    %v80 = vcombine.high %v64, %v64
    %v81 = vcombine.high %v71, %v71
    %v82 = vcombine.high %v78, %v78
    %v83 = vcombine.high %v27, %v27
    %v85 = vunpack.c.l.s4 1966171168
    %v86 = vunpack.c.0.s8 %v85
    %v87 = vlaneseq
    %v88 = vshrl.u32 %v87, 7
    %v89 = vsub.s32 %v86, %v88
    %v90 = vrot.slane %v27, %v89
    %v92 = vunpack.c.l.s4 1966171168
    %v93 = vunpack.c.0.s8 %v92
    %v94 = vlaneseq
    %v95 = vshrl.u32 %v94, 7
    %v96 = vsub.s32 %v93, %v95
    %v97 = vrot.slane %v83, %v96
    %v98 = vcombine.high %v90, %v90
    %v99 = vcombine.high %v97, %v97
    %v101 = vunpack.c.l.s4 1966171168
    %v102 = vunpack.c.0.s8 %v101
    %v103 = vlaneseq
    %v104 = vshrl.u32 %v103, 7
    %v105 = vsub.s32 %v102, %v104
    %v106 = vrot.slane %v90, %v105
    %v108 = vunpack.c.l.s4 1966171168
    %v109 = vunpack.c.0.s8 %v108
    %v110 = vlaneseq
    %v111 = vshrl.u32 %v110, 7
    %v112 = vsub.s32 %v109, %v111
    %v113 = vrot.slane %v97, %v112
    %v115 = vunpack.c.l.s4 1966171168
    %v116 = vunpack.c.0.s8 %v115
    %v117 = vlaneseq
    %v118 = vshrl.u32 %v117, 7
    %v119 = vsub.s32 %v116, %v118
    %v120 = vrot.slane %v98, %v119
    %v122 = vunpack.c.l.s4 1966171168
    %v123 = vunpack.c.0.s8 %v122
    %v124 = vlaneseq
    %v125 = vshrl.u32 %v124, 7
    %v126 = vsub.s32 %v123, %v125
    %v127 = vrot.slane %v99, %v126
    %v128 = vcombine.high %v106, %v106
    %v129 = vcombine.high %v113, %v113
    %v130 = vcombine.high %v120, %v120
    %v131 = vcombine.high %v127, %v127
    %v132 = vlaneseq
    %v133 = vshrl.u32 %v132, 7
    %v134 = vsub.s32 0, %v133
    %v135 = vrot.slane %v57, %v134
    %v136 = vlaneseq
    %v137 = vshrl.u32 %v136, 7
    %v138 = vsub.s32 0, %v137
    %v139 = vrot.slane %v71, %v138
    %v140 = vlaneseq
    %v141 = vshrl.u32 %v140, 7
    %v142 = vsub.s32 0, %v141
    %v143 = vrot.slane %v79, %v142
    %v144 = vlaneseq
    %v145 = vshrl.u32 %v144, 7
    %v146 = vsub.s32 0, %v145
    %v147 = vrot.slane %v81, %v146
    %v148 = vlaneseq
    %v149 = vshrl.u32 %v148, 7
    %v150 = vsub.s32 0, %v149
    %v151 = vrot.slane %v64, %v150
    %v152 = vlaneseq
    %v153 = vshrl.u32 %v152, 7
    %v154 = vsub.s32 0, %v153
    %v155 = vrot.slane %v78, %v154
    %v156 = vlaneseq
    %v157 = vshrl.u32 %v156, 7
    %v158 = vsub.s32 0, %v157
    %v159 = vrot.slane %v80, %v158
    %v160 = vlaneseq
    %v161 = vshrl.u32 %v160, 7
    %v162 = vsub.s32 0, %v161
    %v163 = vrot.slane %v82, %v162
    %v164 = vlaneseq
    %v165 = vshrl.u32 %v164, 7
    %v166 = vsub.s32 0, %v165
    %v167 = vrot.slane %v106, %v166
    %v168 = vlaneseq
    %v169 = vshrl.u32 %v168, 7
    %v170 = vsub.s32 0, %v169
    %v171 = vrot.slane %v120, %v170
    %v172 = vlaneseq
    %v173 = vshrl.u32 %v172, 7
    %v174 = vsub.s32 0, %v173
    %v175 = vrot.slane %v128, %v174
    %v176 = vlaneseq
    %v177 = vshrl.u32 %v176, 7
    %v178 = vsub.s32 0, %v177
    %v179 = vrot.slane %v130, %v178
    %v180 = vlaneseq
    %v181 = vshrl.u32 %v180, 7
    %v182 = vsub.s32 0, %v181
    %v183 = vrot.slane %v113, %v182
    %v184 = vlaneseq
    %v185 = vshrl.u32 %v184, 7
    %v186 = vsub.s32 0, %v185
    %v187 = vrot.slane %v127, %v186
    %v188 = vlaneseq
    %v189 = vshrl.u32 %v188, 7
    %v190 = vsub.s32 0, %v189
    %v191 = vrot.slane %v129, %v190
    %v192 = vlaneseq
    %v193 = vshrl.u32 %v192, 7
    %v194 = vsub.s32 0, %v193
    %v195 = vrot.slane %v131, %v194
    %v212 = vsub.f32 %v135, %v26
    %v213 = vsub.f32 %v135, %v27
    %v214 = vsub.f32 %v139, %v26
    %v215 = vsub.f32 %v139, %v27
    %v216 = vsub.f32 %v143, %v26
    %v217 = vsub.f32 %v143, %v27
    %v218 = vsub.f32 %v147, %v26
    %v219 = vsub.f32 %v147, %v27
    %v220 = vsub.f32 %v151, %v26
    %v221 = vsub.f32 %v151, %v27
    %v222 = vsub.f32 %v155, %v26
    %v223 = vsub.f32 %v155, %v27
    %v224 = vsub.f32 %v159, %v26
    %v225 = vsub.f32 %v159, %v27
    %v226 = vsub.f32 %v163, %v26
    %v227 = vsub.f32 %v163, %v27
    %v228 = vsub.f32 %v167, %v26
    %v229 = vsub.f32 %v167, %v27
    %v230 = vsub.f32 %v171, %v26
    %v231 = vsub.f32 %v171, %v27
    %v232 = vsub.f32 %v175, %v26
    %v233 = vsub.f32 %v175, %v27
    %v234 = vsub.f32 %v179, %v26
    %v235 = vsub.f32 %v179, %v27
    %v236 = vsub.f32 %v183, %v26
    %v237 = vsub.f32 %v183, %v27
    %v238 = vsub.f32 %v187, %v26
    %v239 = vsub.f32 %v187, %v27
    %v240 = vsub.f32 %v191, %v26
    %v241 = vsub.f32 %v191, %v27
    %v242 = vsub.f32 %v195, %v26
    %v243 = vsub.f32 %v195, %v27
    %v244 = vmul.f32 %v212, %v212
    %v245 = vmul.f32 %v213, %v213
    %v246 = vmul.f32 %v214, %v214
    %v247 = vmul.f32 %v215, %v215
    %v248 = vmul.f32 %v216, %v216
    %v249 = vmul.f32 %v217, %v217
    %v250 = vmul.f32 %v218, %v218
    %v251 = vmul.f32 %v219, %v219
    %v252 = vmul.f32 %v220, %v220
    %v253 = vmul.f32 %v221, %v221
    %v254 = vmul.f32 %v222, %v222
    %v255 = vmul.f32 %v223, %v223
    %v256 = vmul.f32 %v224, %v224
    %v257 = vmul.f32 %v225, %v225
    %v258 = vmul.f32 %v226, %v226
    %v259 = vmul.f32 %v227, %v227
    %v260 = vmul.f32 %v228, %v228
    %v261 = vmul.f32 %v229, %v229
    %v262 = vmul.f32 %v230, %v230
    %v263 = vmul.f32 %v231, %v231
    %v264 = vmul.f32 %v232, %v232
    %v265 = vmul.f32 %v233, %v233
    %v266 = vmul.f32 %v234, %v234
    %v267 = vmul.f32 %v235, %v235
    %v268 = vmul.f32 %v236, %v236
    %v269 = vmul.f32 %v237, %v237
    %v270 = vmul.f32 %v238, %v238
    %v271 = vmul.f32 %v239, %v239
    %v272 = vmul.f32 %v240, %v240
    %v273 = vmul.f32 %v241, %v241
    %v274 = vmul.f32 %v242, %v242
    %v275 = vmul.f32 %v243, %v243
    %v278 = vcombine.high %v28, %v28
    %v280 = vunpack.c.l.s4 1966171168
    %v281 = vunpack.c.0.s8 %v280
    %v282 = vlaneseq
    %v283 = vshrl.u32 %v282, 7
    %v284 = vsub.s32 %v281, %v283
    %v285 = vrot.slane %v28, %v284
    %v287 = vunpack.c.l.s4 1966171168
    %v288 = vunpack.c.0.s8 %v287
    %v289 = vlaneseq
    %v290 = vshrl.u32 %v289, 7
    %v291 = vsub.s32 %v288, %v290
    %v292 = vrot.slane %v278, %v291
    %v293 = vcombine.high %v285, %v285
    %v294 = vcombine.high %v292, %v292
    %v296 = vunpack.c.l.s4 1966171168
    %v297 = vunpack.c.0.s8 %v296
    %v298 = vlaneseq
    %v299 = vshrl.u32 %v298, 7
    %v300 = vsub.s32 %v297, %v299
    %v301 = vrot.slane %v285, %v300
    %v303 = vunpack.c.l.s4 1966171168
    %v304 = vunpack.c.0.s8 %v303
    %v305 = vlaneseq
    %v306 = vshrl.u32 %v305, 7
    %v307 = vsub.s32 %v304, %v306
    %v308 = vrot.slane %v292, %v307
    %v310 = vunpack.c.l.s4 1966171168
    %v311 = vunpack.c.0.s8 %v310
    %v312 = vlaneseq
    %v313 = vshrl.u32 %v312, 7
    %v314 = vsub.s32 %v311, %v313
    %v315 = vrot.slane %v293, %v314
    %v317 = vunpack.c.l.s4 1966171168
    %v318 = vunpack.c.0.s8 %v317
    %v319 = vlaneseq
    %v320 = vshrl.u32 %v319, 7
    %v321 = vsub.s32 %v318, %v320
    %v322 = vrot.slane %v294, %v321
    %v323 = vcombine.high %v301, %v301
    %v324 = vcombine.high %v308, %v308
    %v325 = vcombine.high %v315, %v315
    %v326 = vcombine.high %v322, %v322
    %v327 = vcombine.high %v29, %v29
    %v329 = vunpack.c.l.s4 1966171168
    %v330 = vunpack.c.0.s8 %v329
    %v331 = vlaneseq
    %v332 = vshrl.u32 %v331, 7
    %v333 = vsub.s32 %v330, %v332
    %v334 = vrot.slane %v29, %v333
    %v336 = vunpack.c.l.s4 1966171168
    %v337 = vunpack.c.0.s8 %v336
    %v338 = vlaneseq
    %v339 = vshrl.u32 %v338, 7
    %v340 = vsub.s32 %v337, %v339
    %v341 = vrot.slane %v327, %v340
    %v342 = vcombine.high %v334, %v334
    %v343 = vcombine.high %v341, %v341
    %v345 = vunpack.c.l.s4 1966171168
    %v346 = vunpack.c.0.s8 %v345
    %v347 = vlaneseq
    %v348 = vshrl.u32 %v347, 7
    %v349 = vsub.s32 %v346, %v348
    %v350 = vrot.slane %v334, %v349
    %v352 = vunpack.c.l.s4 1966171168
    %v353 = vunpack.c.0.s8 %v352
    %v354 = vlaneseq
    %v355 = vshrl.u32 %v354, 7
    %v356 = vsub.s32 %v353, %v355
    %v357 = vrot.slane %v341, %v356
    %v359 = vunpack.c.l.s4 1966171168
    %v360 = vunpack.c.0.s8 %v359
    %v361 = vlaneseq
    %v362 = vshrl.u32 %v361, 7
    %v363 = vsub.s32 %v360, %v362
    %v364 = vrot.slane %v342, %v363
    %v366 = vunpack.c.l.s4 1966171168
    %v367 = vunpack.c.0.s8 %v366
    %v368 = vlaneseq
    %v369 = vshrl.u32 %v368, 7
    %v370 = vsub.s32 %v367, %v369
    %v371 = vrot.slane %v343, %v370
    %v372 = vcombine.high %v350, %v350
    %v373 = vcombine.high %v357, %v357
    %v374 = vcombine.high %v364, %v364
    %v375 = vcombine.high %v371, %v371
    %v376 = vlaneseq
    %v377 = vshrl.u32 %v376, 7
    %v378 = vsub.s32 0, %v377
    %v379 = vrot.slane %v301, %v378
    %v380 = vlaneseq
    %v381 = vshrl.u32 %v380, 7
    %v382 = vsub.s32 0, %v381
    %v383 = vrot.slane %v315, %v382
    %v384 = vlaneseq
    %v385 = vshrl.u32 %v384, 7
    %v386 = vsub.s32 0, %v385
    %v387 = vrot.slane %v323, %v386
    %v388 = vlaneseq
    %v389 = vshrl.u32 %v388, 7
    %v390 = vsub.s32 0, %v389
    %v391 = vrot.slane %v325, %v390
    %v392 = vlaneseq
    %v393 = vshrl.u32 %v392, 7
    %v394 = vsub.s32 0, %v393
    %v395 = vrot.slane %v308, %v394
    %v396 = vlaneseq
    %v397 = vshrl.u32 %v396, 7
    %v398 = vsub.s32 0, %v397
    %v399 = vrot.slane %v322, %v398
    %v400 = vlaneseq
    %v401 = vshrl.u32 %v400, 7
    %v402 = vsub.s32 0, %v401
    %v403 = vrot.slane %v324, %v402
    %v404 = vlaneseq
    %v405 = vshrl.u32 %v404, 7
    %v406 = vsub.s32 0, %v405
    %v407 = vrot.slane %v326, %v406
    %v408 = vlaneseq
    %v409 = vshrl.u32 %v408, 7
    %v410 = vsub.s32 0, %v409
    %v411 = vrot.slane %v350, %v410
    %v412 = vlaneseq
    %v413 = vshrl.u32 %v412, 7
    %v414 = vsub.s32 0, %v413
    %v415 = vrot.slane %v364, %v414
    %v416 = vlaneseq
    %v417 = vshrl.u32 %v416, 7
    %v418 = vsub.s32 0, %v417
    %v419 = vrot.slane %v372, %v418
    %v420 = vlaneseq
    %v421 = vshrl.u32 %v420, 7
    %v422 = vsub.s32 0, %v421
    %v423 = vrot.slane %v374, %v422
    %v424 = vlaneseq
    %v425 = vshrl.u32 %v424, 7
    %v426 = vsub.s32 0, %v425
    %v427 = vrot.slane %v357, %v426
    %v428 = vlaneseq
    %v429 = vshrl.u32 %v428, 7
    %v430 = vsub.s32 0, %v429
    %v431 = vrot.slane %v371, %v430
    %v432 = vlaneseq
    %v433 = vshrl.u32 %v432, 7
    %v434 = vsub.s32 0, %v433
    %v435 = vrot.slane %v373, %v434
    %v436 = vlaneseq
    %v437 = vshrl.u32 %v436, 7
    %v438 = vsub.s32 0, %v437
    %v439 = vrot.slane %v375, %v438
    %v456 = vsub.f32 %v379, %v28
    %v457 = vsub.f32 %v379, %v29
    %v458 = vsub.f32 %v383, %v28
    %v459 = vsub.f32 %v383, %v29
    %v460 = vsub.f32 %v387, %v28
    %v461 = vsub.f32 %v387, %v29
    %v462 = vsub.f32 %v391, %v28
    %v463 = vsub.f32 %v391, %v29
    %v464 = vsub.f32 %v395, %v28
    %v465 = vsub.f32 %v395, %v29
    %v466 = vsub.f32 %v399, %v28
    %v467 = vsub.f32 %v399, %v29
    %v468 = vsub.f32 %v403, %v28
    %v469 = vsub.f32 %v403, %v29
    %v470 = vsub.f32 %v407, %v28
    %v471 = vsub.f32 %v407, %v29
    %v472 = vsub.f32 %v411, %v28
    %v473 = vsub.f32 %v411, %v29
    %v474 = vsub.f32 %v415, %v28
    %v475 = vsub.f32 %v415, %v29
    %v476 = vsub.f32 %v419, %v28
    %v477 = vsub.f32 %v419, %v29
    %v478 = vsub.f32 %v423, %v28
    %v479 = vsub.f32 %v423, %v29
    %v480 = vsub.f32 %v427, %v28
    %v481 = vsub.f32 %v427, %v29
    %v482 = vsub.f32 %v431, %v28
    %v483 = vsub.f32 %v431, %v29
    %v484 = vsub.f32 %v435, %v28
    %v485 = vsub.f32 %v435, %v29
    %v486 = vsub.f32 %v439, %v28
    %v487 = vsub.f32 %v439, %v29
    %v488 = vmul.f32 %v456, %v456
    %v489 = vmul.f32 %v457, %v457
    %v490 = vmul.f32 %v458, %v458
    %v491 = vmul.f32 %v459, %v459
    %v492 = vmul.f32 %v460, %v460
    %v493 = vmul.f32 %v461, %v461
    %v494 = vmul.f32 %v462, %v462
    %v495 = vmul.f32 %v463, %v463
    %v496 = vmul.f32 %v464, %v464
    %v497 = vmul.f32 %v465, %v465
    %v498 = vmul.f32 %v466, %v466
    %v499 = vmul.f32 %v467, %v467
    %v500 = vmul.f32 %v468, %v468
    %v501 = vmul.f32 %v469, %v469
    %v502 = vmul.f32 %v470, %v470
    %v503 = vmul.f32 %v471, %v471
    %v504 = vmul.f32 %v472, %v472
    %v505 = vmul.f32 %v473, %v473
    %v506 = vmul.f32 %v474, %v474
    %v507 = vmul.f32 %v475, %v475
    %v508 = vmul.f32 %v476, %v476
    %v509 = vmul.f32 %v477, %v477
    %v510 = vmul.f32 %v478, %v478
    %v511 = vmul.f32 %v479, %v479
    %v512 = vmul.f32 %v480, %v480
    %v513 = vmul.f32 %v481, %v481
    %v514 = vmul.f32 %v482, %v482
    %v515 = vmul.f32 %v483, %v483
    %v516 = vmul.f32 %v484, %v484
    %v517 = vmul.f32 %v485, %v485
    %v518 = vmul.f32 %v486, %v486
    %v519 = vmul.f32 %v487, %v487
    %v520 = vadd.f32 %v244, %v488
    %v521 = vadd.f32 %v245, %v489
    %v522 = vadd.f32 %v246, %v490
    %v523 = vadd.f32 %v247, %v491
    %v524 = vadd.f32 %v248, %v492
    %v525 = vadd.f32 %v249, %v493
    %v526 = vadd.f32 %v250, %v494
    %v527 = vadd.f32 %v251, %v495
    %v528 = vadd.f32 %v252, %v496
    %v529 = vadd.f32 %v253, %v497
    %v530 = vadd.f32 %v254, %v498
    %v531 = vadd.f32 %v255, %v499
    %v532 = vadd.f32 %v256, %v500
    %v533 = vadd.f32 %v257, %v501
    %v534 = vadd.f32 %v258, %v502
    %v535 = vadd.f32 %v259, %v503
    %v536 = vadd.f32 %v260, %v504
    %v537 = vadd.f32 %v261, %v505
    %v538 = vadd.f32 %v262, %v506
    %v539 = vadd.f32 %v263, %v507
    %v540 = vadd.f32 %v264, %v508
    %v541 = vadd.f32 %v265, %v509
    %v542 = vadd.f32 %v266, %v510
    %v543 = vadd.f32 %v267, %v511
    %v544 = vadd.f32 %v268, %v512
    %v545 = vadd.f32 %v269, %v513
    %v546 = vadd.f32 %v270, %v514
    %v547 = vadd.f32 %v271, %v515
    %v548 = vadd.f32 %v272, %v516
    %v549 = vadd.f32 %v273, %v517
    %v550 = vadd.f32 %v274, %v518
    %v551 = vadd.f32 %v275, %v519
    %v554 = vcombine.high %v30, %v30
    %v556 = vunpack.c.l.s4 1966171168
    %v557 = vunpack.c.0.s8 %v556
    %v558 = vlaneseq
    %v559 = vshrl.u32 %v558, 7
    %v560 = vsub.s32 %v557, %v559
    %v561 = vrot.slane %v30, %v560
    %v563 = vunpack.c.l.s4 1966171168
    %v564 = vunpack.c.0.s8 %v563
    %v565 = vlaneseq
    %v566 = vshrl.u32 %v565, 7
    %v567 = vsub.s32 %v564, %v566
    %v568 = vrot.slane %v554, %v567
    %v569 = vcombine.high %v561, %v561
    %v570 = vcombine.high %v568, %v568
    %v572 = vunpack.c.l.s4 1966171168
    %v573 = vunpack.c.0.s8 %v572
    %v574 = vlaneseq
    %v575 = vshrl.u32 %v574, 7
    %v576 = vsub.s32 %v573, %v575
    %v577 = vrot.slane %v561, %v576
    %v579 = vunpack.c.l.s4 1966171168
    %v580 = vunpack.c.0.s8 %v579
    %v581 = vlaneseq
    %v582 = vshrl.u32 %v581, 7
    %v583 = vsub.s32 %v580, %v582
    %v584 = vrot.slane %v568, %v583
    %v586 = vunpack.c.l.s4 1966171168
    %v587 = vunpack.c.0.s8 %v586
    %v588 = vlaneseq
    %v589 = vshrl.u32 %v588, 7
    %v590 = vsub.s32 %v587, %v589
    %v591 = vrot.slane %v569, %v590
    %v593 = vunpack.c.l.s4 1966171168
    %v594 = vunpack.c.0.s8 %v593
    %v595 = vlaneseq
    %v596 = vshrl.u32 %v595, 7
    %v597 = vsub.s32 %v594, %v596
    %v598 = vrot.slane %v570, %v597
    %v599 = vcombine.high %v577, %v577
    %v600 = vcombine.high %v584, %v584
    %v601 = vcombine.high %v591, %v591
    %v602 = vcombine.high %v598, %v598
    %v603 = vcombine.high %v31, %v31
    %v605 = vunpack.c.l.s4 1966171168
    %v606 = vunpack.c.0.s8 %v605
    %v607 = vlaneseq
    %v608 = vshrl.u32 %v607, 7
    %v609 = vsub.s32 %v606, %v608
    %v610 = vrot.slane %v31, %v609
    %v612 = vunpack.c.l.s4 1966171168
    %v613 = vunpack.c.0.s8 %v612
    %v614 = vlaneseq
    %v615 = vshrl.u32 %v614, 7
    %v616 = vsub.s32 %v613, %v615
    %v617 = vrot.slane %v603, %v616
    %v618 = vcombine.high %v610, %v610
    %v619 = vcombine.high %v617, %v617
    %v621 = vunpack.c.l.s4 1966171168
    %v622 = vunpack.c.0.s8 %v621
    %v623 = vlaneseq
    %v624 = vshrl.u32 %v623, 7
    %v625 = vsub.s32 %v622, %v624
    %v626 = vrot.slane %v610, %v625
    %v628 = vunpack.c.l.s4 1966171168
    %v629 = vunpack.c.0.s8 %v628
    %v630 = vlaneseq
    %v631 = vshrl.u32 %v630, 7
    %v632 = vsub.s32 %v629, %v631
    %v633 = vrot.slane %v617, %v632
    %v635 = vunpack.c.l.s4 1966171168
    %v636 = vunpack.c.0.s8 %v635
    %v637 = vlaneseq
    %v638 = vshrl.u32 %v637, 7
    %v639 = vsub.s32 %v636, %v638
    %v640 = vrot.slane %v618, %v639
    %v642 = vunpack.c.l.s4 1966171168
    %v643 = vunpack.c.0.s8 %v642
    %v644 = vlaneseq
    %v645 = vshrl.u32 %v644, 7
    %v646 = vsub.s32 %v643, %v645
    %v647 = vrot.slane %v619, %v646
    %v648 = vcombine.high %v626, %v626
    %v649 = vcombine.high %v633, %v633
    %v650 = vcombine.high %v640, %v640
    %v651 = vcombine.high %v647, %v647
    %v652 = vlaneseq
    %v653 = vshrl.u32 %v652, 7
    %v654 = vsub.s32 0, %v653
    %v655 = vrot.slane %v577, %v654
    %v656 = vlaneseq
    %v657 = vshrl.u32 %v656, 7
    %v658 = vsub.s32 0, %v657
    %v659 = vrot.slane %v591, %v658
    %v660 = vlaneseq
    %v661 = vshrl.u32 %v660, 7
    %v662 = vsub.s32 0, %v661
    %v663 = vrot.slane %v599, %v662
    %v664 = vlaneseq
    %v665 = vshrl.u32 %v664, 7
    %v666 = vsub.s32 0, %v665
    %v667 = vrot.slane %v601, %v666
    %v668 = vlaneseq
    %v669 = vshrl.u32 %v668, 7
    %v670 = vsub.s32 0, %v669
    %v671 = vrot.slane %v584, %v670
    %v672 = vlaneseq
    %v673 = vshrl.u32 %v672, 7
    %v674 = vsub.s32 0, %v673
    %v675 = vrot.slane %v598, %v674
    %v676 = vlaneseq
    %v677 = vshrl.u32 %v676, 7
    %v678 = vsub.s32 0, %v677
    %v679 = vrot.slane %v600, %v678
    %v680 = vlaneseq
    %v681 = vshrl.u32 %v680, 7
    %v682 = vsub.s32 0, %v681
    %v683 = vrot.slane %v602, %v682
    %v684 = vlaneseq
    %v685 = vshrl.u32 %v684, 7
    %v686 = vsub.s32 0, %v685
    %v687 = vrot.slane %v626, %v686
    %v688 = vlaneseq
    %v689 = vshrl.u32 %v688, 7
    %v690 = vsub.s32 0, %v689
    %v691 = vrot.slane %v640, %v690
    %v692 = vlaneseq
    %v693 = vshrl.u32 %v692, 7
    %v694 = vsub.s32 0, %v693
    %v695 = vrot.slane %v648, %v694
    %v696 = vlaneseq
    %v697 = vshrl.u32 %v696, 7
    %v698 = vsub.s32 0, %v697
    %v699 = vrot.slane %v650, %v698
    %v700 = vlaneseq
    %v701 = vshrl.u32 %v700, 7
    %v702 = vsub.s32 0, %v701
    %v703 = vrot.slane %v633, %v702
    %v704 = vlaneseq
    %v705 = vshrl.u32 %v704, 7
    %v706 = vsub.s32 0, %v705
    %v707 = vrot.slane %v647, %v706
    %v708 = vlaneseq
    %v709 = vshrl.u32 %v708, 7
    %v710 = vsub.s32 0, %v709
    %v711 = vrot.slane %v649, %v710
    %v712 = vlaneseq
    %v713 = vshrl.u32 %v712, 7
    %v714 = vsub.s32 0, %v713
    %v715 = vrot.slane %v651, %v714
    %v732 = vsub.f32 %v655, %v30
    %v733 = vsub.f32 %v655, %v31
    %v734 = vsub.f32 %v659, %v30
    %v735 = vsub.f32 %v659, %v31
    %v736 = vsub.f32 %v663, %v30
    %v737 = vsub.f32 %v663, %v31
    %v738 = vsub.f32 %v667, %v30
    %v739 = vsub.f32 %v667, %v31
    %v740 = vsub.f32 %v671, %v30
    %v741 = vsub.f32 %v671, %v31
    %v742 = vsub.f32 %v675, %v30
    %v743 = vsub.f32 %v675, %v31
    %v744 = vsub.f32 %v679, %v30
    %v745 = vsub.f32 %v679, %v31
    %v746 = vsub.f32 %v683, %v30
    %v747 = vsub.f32 %v683, %v31
    %v748 = vsub.f32 %v687, %v30
    %v749 = vsub.f32 %v687, %v31
    %v750 = vsub.f32 %v691, %v30
    %v751 = vsub.f32 %v691, %v31
    %v752 = vsub.f32 %v695, %v30
    %v753 = vsub.f32 %v695, %v31
    %v754 = vsub.f32 %v699, %v30
    %v755 = vsub.f32 %v699, %v31
    %v756 = vsub.f32 %v703, %v30
    %v757 = vsub.f32 %v703, %v31
    %v758 = vsub.f32 %v707, %v30
    %v759 = vsub.f32 %v707, %v31
    %v760 = vsub.f32 %v711, %v30
    %v761 = vsub.f32 %v711, %v31
    %v762 = vsub.f32 %v715, %v30
    %v763 = vsub.f32 %v715, %v31
    %v764 = vmul.f32 %v732, %v732
    %v765 = vmul.f32 %v733, %v733
    %v766 = vmul.f32 %v734, %v734
    %v767 = vmul.f32 %v735, %v735
    %v768 = vmul.f32 %v736, %v736
    %v769 = vmul.f32 %v737, %v737
    %v770 = vmul.f32 %v738, %v738
    %v771 = vmul.f32 %v739, %v739
    %v772 = vmul.f32 %v740, %v740
    %v773 = vmul.f32 %v741, %v741
    %v774 = vmul.f32 %v742, %v742
    %v775 = vmul.f32 %v743, %v743
    %v776 = vmul.f32 %v744, %v744
    %v777 = vmul.f32 %v745, %v745
    %v778 = vmul.f32 %v746, %v746
    %v779 = vmul.f32 %v747, %v747
    %v780 = vmul.f32 %v748, %v748
    %v781 = vmul.f32 %v749, %v749
    %v782 = vmul.f32 %v750, %v750
    %v783 = vmul.f32 %v751, %v751
    %v784 = vmul.f32 %v752, %v752
    %v785 = vmul.f32 %v753, %v753
    %v786 = vmul.f32 %v754, %v754
    %v787 = vmul.f32 %v755, %v755
    %v788 = vmul.f32 %v756, %v756
    %v789 = vmul.f32 %v757, %v757
    %v790 = vmul.f32 %v758, %v758
    %v791 = vmul.f32 %v759, %v759
    %v792 = vmul.f32 %v760, %v760
    %v793 = vmul.f32 %v761, %v761
    %v794 = vmul.f32 %v762, %v762
    %v795 = vmul.f32 %v763, %v763
    %v796 = vadd.f32 %v520, %v764
    %v797 = vadd.f32 %v521, %v765
    %v798 = vadd.f32 %v522, %v766
    %v799 = vadd.f32 %v523, %v767
    %v800 = vadd.f32 %v524, %v768
    %v801 = vadd.f32 %v525, %v769
    %v802 = vadd.f32 %v526, %v770
    %v803 = vadd.f32 %v527, %v771
    %v804 = vadd.f32 %v528, %v772
    %v805 = vadd.f32 %v529, %v773
    %v806 = vadd.f32 %v530, %v774
    %v807 = vadd.f32 %v531, %v775
    %v808 = vadd.f32 %v532, %v776
    %v809 = vadd.f32 %v533, %v777
    %v810 = vadd.f32 %v534, %v778
    %v811 = vadd.f32 %v535, %v779
    %v812 = vadd.f32 %v536, %v780
    %v813 = vadd.f32 %v537, %v781
    %v814 = vadd.f32 %v538, %v782
    %v815 = vadd.f32 %v539, %v783
    %v816 = vadd.f32 %v540, %v784
    %v817 = vadd.f32 %v541, %v785
    %v818 = vadd.f32 %v542, %v786
    %v819 = vadd.f32 %v543, %v787
    %v820 = vadd.f32 %v544, %v788
    %v821 = vadd.f32 %v545, %v789
    %v822 = vadd.f32 %v546, %v790
    %v823 = vadd.f32 %v547, %v791
    %v824 = vadd.f32 %v548, %v792
    %v825 = vadd.f32 %v549, %v793
    %v826 = vadd.f32 %v550, %v794
    %v827 = vadd.f32 %v551, %v795
    %v828 = vmax.f32 %v796, %v800
    %v829 = vmax.f32 %v798, %v802
    %v830 = vmax.f32 %v828, %v804
    %v831 = vmax.f32 %v829, %v806
    %v832 = vmax.f32 %v830, %v808
    %v833 = vmax.f32 %v831, %v810
    %v834 = vmax.f32 %v832, %v812
    %v835 = vmax.f32 %v833, %v814
    %v836 = vmax.f32 %v834, %v816
    %v837 = vmax.f32 %v835, %v818
    %v838 = vmax.f32 %v836, %v820
    %v839 = vmax.f32 %v837, %v822
    %v840 = vmax.f32 %v838, %v824
    %v841 = vmax.f32 %v839, %v826
    %v842 = vmax.f32 %v840, %v841
    %v843 = vmax.f32 %v797, %v801
    %v844 = vmax.f32 %v799, %v803
    %v845 = vmax.f32 %v843, %v805
    %v846 = vmax.f32 %v844, %v807
    %v847 = vmax.f32 %v845, %v809
    %v848 = vmax.f32 %v846, %v811
    %v849 = vmax.f32 %v847, %v813
    %v850 = vmax.f32 %v848, %v815
    %v851 = vmax.f32 %v849, %v817
    %v852 = vmax.f32 %v850, %v819
    %v853 = vmax.f32 %v851, %v821
    %v854 = vmax.f32 %v852, %v823
    %v855 = vmax.f32 %v853, %v825
    %v856 = vmax.f32 %v854, %v827
    %v857 = vmax.f32 %v855, %v856
    %v858 = vmax.f32 %v842, %v857
    %v859 = vrot.slane %v858, 4
    %v860 = vmax.f32 %v858, %v859
    %v861 = vrot.slane %v860, 2
    %v862 = vmax.f32 %v860, %v861
    %v863 = vrot.slane %v862, 1
    %v864 = vmax.f32 %v862, %v863
    %865 = vst [vmem:[#allocation6] sm:$0x1] %v864
    %v866 = vlaneseq
    %v867 = vshrl.u32 %v866, 7
    %v868 = vadd.s32 %v867, 8
    %vm869 = vcmp.eq.s32.totalorder %v867, 0
    %vm870 = vcmp.eq.s32.totalorder %v868, 0
    %v871 = vsel %vm869, 3e+38, %v796
    %v872 = vsel %vm870, 3e+38, %v797
    %v873 = vmin.f32 %v871, %v872
    %v874 = vrot.slane %v873, 4
    %v875 = vmin.f32 %v873, %v874
    %v876 = vrot.slane %v875, 2
    %v877 = vmin.f32 %v875, %v876
    %v878 = vrot.slane %v877, 1
    %v879 = vmin.f32 %v877, %v878
    %vm880 = vcmp.eq.f32.partialorder %v871, %v879
    %vm881 = vcmp.eq.f32.partialorder %v872, %v879
    %v882 = vsel %vm880, %v867, 16
    %v883 = vsel %vm881, %v868, 16
    %vm884 = vcmp.lt.s32.totalorder %v882, %v883
    %v885 = vsel %vm884, %v882, %v883
    %v886 = vrot.slane %v885, 4
    %vm887 = vcmp.lt.s32.totalorder %v885, %v886
    %v888 = vsel %vm887, %v885, %v886
    %v889 = vrot.slane %v888, 2
    %vm890 = vcmp.lt.s32.totalorder %v888, %v889
    %v891 = vsel %vm890, %v888, %v889
    %v892 = vrot.slane %v891, 1
    %vm893 = vcmp.lt.s32.totalorder %v891, %v892
    %v894 = vsel %vm893, %v891, %v892
    %vm895 = vcmp.eq.s32.totalorder %v867, %v894
    %vm896 = vcmp.eq.s32.totalorder %v868, %v894
    %vm897 = vmor %vm869, %vm895
    %vm898 = vmor %vm870, %vm896
    %vm899 = vcmp.eq.s32.totalorder %v894, 0
    %vm900 = vcmp.eq.s32.totalorder %v894, 1
    %vm901 = vcmp.eq.s32.totalorder %v894, 2
    %vm902 = vcmp.eq.s32.totalorder %v894, 3
    %vm903 = vcmp.eq.s32.totalorder %v894, 4
    %vm904 = vcmp.eq.s32.totalorder %v894, 5
    %vm905 = vcmp.eq.s32.totalorder %v894, 6
    %vm906 = vcmp.eq.s32.totalorder %v894, 7
    %vm907 = vcmp.eq.s32.totalorder %v894, 8
    %vm908 = vcmp.eq.s32.totalorder %v894, 9
    %vm909 = vcmp.eq.s32.totalorder %v894, 10
    %vm910 = vcmp.eq.s32.totalorder %v894, 11
    %vm911 = vcmp.eq.s32.totalorder %v894, 12
    %vm912 = vcmp.eq.s32.totalorder %v894, 13
    %vm913 = vcmp.eq.s32.totalorder %v894, 14
    %vm914 = vcmp.eq.s32.totalorder %v894, 15
    %v915 = vsel %vm899, 1, 0
    %v916 = vsel %vm900, 1, 0
    %v917 = vsel %vm901, 1, 0
    %v918 = vsel %vm902, 1, 0
    %v919 = vsel %vm903, 1, 0
    %v920 = vsel %vm904, 1, 0
    %v921 = vsel %vm905, 1, 0
    %v922 = vsel %vm906, 1, 0
    %v923 = vsel %vm907, 1, 0
    %v924 = vsel %vm908, 1, 0
    %v925 = vsel %vm909, 1, 0
    %v926 = vsel %vm910, 1, 0
    %v927 = vsel %vm911, 1, 0
    %v928 = vsel %vm912, 1, 0
    %v929 = vsel %vm913, 1, 0
    %v930 = vsel %vm914, 1, 0
    %vm931 = vcmp.eq.s32.totalorder %v915, 1
    %vm932 = vcmp.eq.s32.totalorder %v916, 1
    %vm933 = vcmp.eq.s32.totalorder %v917, 1
    %vm934 = vcmp.eq.s32.totalorder %v918, 1
    %vm935 = vcmp.eq.s32.totalorder %v919, 1
    %vm936 = vcmp.eq.s32.totalorder %v920, 1
    %vm937 = vcmp.eq.s32.totalorder %v921, 1
    %vm938 = vcmp.eq.s32.totalorder %v922, 1
    %vm939 = vcmp.eq.s32.totalorder %v923, 1
    %vm940 = vcmp.eq.s32.totalorder %v924, 1
    %vm941 = vcmp.eq.s32.totalorder %v925, 1
    %vm942 = vcmp.eq.s32.totalorder %v926, 1
    %vm943 = vcmp.eq.s32.totalorder %v927, 1
    %vm944 = vcmp.eq.s32.totalorder %v928, 1
    %vm945 = vcmp.eq.s32.totalorder %v929, 1
    %vm946 = vcmp.eq.s32.totalorder %v930, 1
    %v947 = vsel %vm931, %v796, 3e+38
    %v948 = vsel %vm931, %v797, 3e+38
    %v949 = vsel %vm932, %v798, 3e+38
    %v950 = vsel %vm932, %v799, 3e+38
    %v951 = vsel %vm933, %v800, 3e+38
    %v952 = vsel %vm933, %v801, 3e+38
    %v953 = vsel %vm934, %v802, 3e+38
    %v954 = vsel %vm934, %v803, 3e+38
    %v955 = vsel %vm935, %v804, 3e+38
    %v956 = vsel %vm935, %v805, 3e+38
    %v957 = vsel %vm936, %v806, 3e+38
    %v958 = vsel %vm936, %v807, 3e+38
    %v959 = vsel %vm937, %v808, 3e+38
    %v960 = vsel %vm937, %v809, 3e+38
    %v961 = vsel %vm938, %v810, 3e+38
    %v962 = vsel %vm938, %v811, 3e+38
    %v963 = vsel %vm939, %v812, 3e+38
    %v964 = vsel %vm939, %v813, 3e+38
    %v965 = vsel %vm940, %v814, 3e+38
    %v966 = vsel %vm940, %v815, 3e+38
    %v967 = vsel %vm941, %v816, 3e+38
    %v968 = vsel %vm941, %v817, 3e+38
    %v969 = vsel %vm942, %v818, 3e+38
    %v970 = vsel %vm942, %v819, 3e+38
    %v971 = vsel %vm943, %v820, 3e+38
    %v972 = vsel %vm943, %v821, 3e+38
    %v973 = vsel %vm944, %v822, 3e+38
    %v974 = vsel %vm944, %v823, 3e+38
    %v975 = vsel %vm945, %v824, 3e+38
    %v976 = vsel %vm945, %v825, 3e+38
    %v977 = vsel %vm946, %v826, 3e+38
    %v978 = vsel %vm946, %v827, 3e+38
    %v979 = vmin.f32 %v947, %v951
    %v980 = vmin.f32 %v949, %v953
    %v981 = vmin.f32 %v979, %v955
    %v982 = vmin.f32 %v980, %v957
    %v983 = vmin.f32 %v981, %v959
    %v984 = vmin.f32 %v982, %v961
    %v985 = vmin.f32 %v983, %v963
    %v986 = vmin.f32 %v984, %v965
    %v987 = vmin.f32 %v985, %v967
    %v988 = vmin.f32 %v986, %v969
    %v989 = vmin.f32 %v987, %v971
    %v990 = vmin.f32 %v988, %v973
    %v991 = vmin.f32 %v989, %v975
    %v992 = vmin.f32 %v990, %v977
    %v993 = vmin.f32 %v991, %v992
    %v994 = vmin.f32 %v948, %v952
    %v995 = vmin.f32 %v950, %v954
    %v996 = vmin.f32 %v994, %v956
    %v997 = vmin.f32 %v995, %v958
    %v998 = vmin.f32 %v996, %v960
    %v999 = vmin.f32 %v997, %v962
    %v1000 = vmin.f32 %v998, %v964
    %v1001 = vmin.f32 %v999, %v966
    %v1002 = vmin.f32 %v1000, %v968
    %v1003 = vmin.f32 %v1001, %v970
    %v1004 = vmin.f32 %v1002, %v972
    %v1005 = vmin.f32 %v1003, %v974
    %v1006 = vmin.f32 %v1004, %v976
    %v1007 = vmin.f32 %v1005, %v978
    %v1008 = vmin.f32 %v1006, %v1007
    %v1009 = vmin.f32 %v796, %v993
    %v1010 = vmin.f32 %v797, %v1008
    %v1011 = vsel %vm897, 3e+38, %v1009
    %v1012 = vsel %vm898, 3e+38, %v1010
    %v1013 = vmin.f32 %v1011, %v1012
    %v1014 = vrot.slane %v1013, 4
    %v1015 = vmin.f32 %v1013, %v1014
    %v1016 = vrot.slane %v1015, 2
    %v1017 = vmin.f32 %v1015, %v1016
    %v1018 = vrot.slane %v1017, 1
    %v1019 = vmin.f32 %v1017, %v1018
    %vm1020 = vcmp.eq.f32.partialorder %v1011, %v1019
    %vm1021 = vcmp.eq.f32.partialorder %v1012, %v1019
    %v1022 = vsel %vm1020, %v867, 16
    %v1023 = vsel %vm1021, %v868, 16
    %vm1024 = vcmp.lt.s32.totalorder %v1022, %v1023
    %v1025 = vsel %vm1024, %v1022, %v1023
    %v1026 = vrot.slane %v1025, 4
    %vm1027 = vcmp.lt.s32.totalorder %v1025, %v1026
    %v1028 = vsel %vm1027, %v1025, %v1026
    %v1029 = vrot.slane %v1028, 2
    %vm1030 = vcmp.lt.s32.totalorder %v1028, %v1029
    %v1031 = vsel %vm1030, %v1028, %v1029
    %v1032 = vrot.slane %v1031, 1
    %vm1033 = vcmp.lt.s32.totalorder %v1031, %v1032
    %v1034 = vsel %vm1033, %v1031, %v1032
    %vm1035 = vcmp.eq.s32.totalorder %v867, %v1034
    %vm1036 = vcmp.eq.s32.totalorder %v868, %v1034
    %vm1037 = vmor %vm897, %vm1035
    %vm1038 = vmor %vm898, %vm1036
    %vm1039 = vcmp.eq.s32.totalorder %v1034, 0
    %vm1040 = vcmp.eq.s32.totalorder %v1034, 1
    %vm1041 = vcmp.eq.s32.totalorder %v1034, 2
    %vm1042 = vcmp.eq.s32.totalorder %v1034, 3
    %vm1043 = vcmp.eq.s32.totalorder %v1034, 4
    %vm1044 = vcmp.eq.s32.totalorder %v1034, 5
    %vm1045 = vcmp.eq.s32.totalorder %v1034, 6
    %vm1046 = vcmp.eq.s32.totalorder %v1034, 7
    %vm1047 = vcmp.eq.s32.totalorder %v1034, 8
    %vm1048 = vcmp.eq.s32.totalorder %v1034, 9
    %vm1049 = vcmp.eq.s32.totalorder %v1034, 10
    %vm1050 = vcmp.eq.s32.totalorder %v1034, 11
    %vm1051 = vcmp.eq.s32.totalorder %v1034, 12
    %vm1052 = vcmp.eq.s32.totalorder %v1034, 13
    %vm1053 = vcmp.eq.s32.totalorder %v1034, 14
    %vm1054 = vcmp.eq.s32.totalorder %v1034, 15
    %v1055 = vsel %vm1039, 1, 0
    %v1056 = vsel %vm1040, 1, 0
    %v1057 = vsel %vm1041, 1, 0
    %v1058 = vsel %vm1042, 1, 0
    %v1059 = vsel %vm1043, 1, 0
    %v1060 = vsel %vm1044, 1, 0
    %v1061 = vsel %vm1045, 1, 0
    %v1062 = vsel %vm1046, 1, 0
    %v1063 = vsel %vm1047, 1, 0
    %v1064 = vsel %vm1048, 1, 0
    %v1065 = vsel %vm1049, 1, 0
    %v1066 = vsel %vm1050, 1, 0
    %v1067 = vsel %vm1051, 1, 0
    %v1068 = vsel %vm1052, 1, 0
    %v1069 = vsel %vm1053, 1, 0
    %v1070 = vsel %vm1054, 1, 0
    %vm1071 = vcmp.eq.s32.totalorder %v1055, 1
    %vm1072 = vcmp.eq.s32.totalorder %v1056, 1
    %vm1073 = vcmp.eq.s32.totalorder %v1057, 1
    %vm1074 = vcmp.eq.s32.totalorder %v1058, 1
    %vm1075 = vcmp.eq.s32.totalorder %v1059, 1
    %vm1076 = vcmp.eq.s32.totalorder %v1060, 1
    %vm1077 = vcmp.eq.s32.totalorder %v1061, 1
    %vm1078 = vcmp.eq.s32.totalorder %v1062, 1
    %vm1079 = vcmp.eq.s32.totalorder %v1063, 1
    %vm1080 = vcmp.eq.s32.totalorder %v1064, 1
    %vm1081 = vcmp.eq.s32.totalorder %v1065, 1
    %vm1082 = vcmp.eq.s32.totalorder %v1066, 1
    %vm1083 = vcmp.eq.s32.totalorder %v1067, 1
    %vm1084 = vcmp.eq.s32.totalorder %v1068, 1
    %vm1085 = vcmp.eq.s32.totalorder %v1069, 1
    %vm1086 = vcmp.eq.s32.totalorder %v1070, 1
    %v1087 = vsel %vm1071, %v796, 3e+38
    %v1088 = vsel %vm1071, %v797, 3e+38
    %v1089 = vsel %vm1072, %v798, 3e+38
    %v1090 = vsel %vm1072, %v799, 3e+38
    %v1091 = vsel %vm1073, %v800, 3e+38
    %v1092 = vsel %vm1073, %v801, 3e+38
    %v1093 = vsel %vm1074, %v802, 3e+38
    %v1094 = vsel %vm1074, %v803, 3e+38
    %v1095 = vsel %vm1075, %v804, 3e+38
    %v1096 = vsel %vm1075, %v805, 3e+38
    %v1097 = vsel %vm1076, %v806, 3e+38
    %v1098 = vsel %vm1076, %v807, 3e+38
    %v1099 = vsel %vm1077, %v808, 3e+38
    %v1100 = vsel %vm1077, %v809, 3e+38
    %v1101 = vsel %vm1078, %v810, 3e+38
    %v1102 = vsel %vm1078, %v811, 3e+38
    %v1103 = vsel %vm1079, %v812, 3e+38
    %v1104 = vsel %vm1079, %v813, 3e+38
    %v1105 = vsel %vm1080, %v814, 3e+38
    %v1106 = vsel %vm1080, %v815, 3e+38
    %v1107 = vsel %vm1081, %v816, 3e+38
    %v1108 = vsel %vm1081, %v817, 3e+38
    %v1109 = vsel %vm1082, %v818, 3e+38
    %v1110 = vsel %vm1082, %v819, 3e+38
    %v1111 = vsel %vm1083, %v820, 3e+38
    %v1112 = vsel %vm1083, %v821, 3e+38
    %v1113 = vsel %vm1084, %v822, 3e+38
    %v1114 = vsel %vm1084, %v823, 3e+38
    %v1115 = vsel %vm1085, %v824, 3e+38
    %v1116 = vsel %vm1085, %v825, 3e+38
    %v1117 = vsel %vm1086, %v826, 3e+38
    %v1118 = vsel %vm1086, %v827, 3e+38
    %v1119 = vmin.f32 %v1087, %v1091
    %v1120 = vmin.f32 %v1089, %v1093
    %v1121 = vmin.f32 %v1119, %v1095
    %v1122 = vmin.f32 %v1120, %v1097
    %v1123 = vmin.f32 %v1121, %v1099
    %v1124 = vmin.f32 %v1122, %v1101
    %v1125 = vmin.f32 %v1123, %v1103
    %v1126 = vmin.f32 %v1124, %v1105
    %v1127 = vmin.f32 %v1125, %v1107
    %v1128 = vmin.f32 %v1126, %v1109
    %v1129 = vmin.f32 %v1127, %v1111
    %v1130 = vmin.f32 %v1128, %v1113
    %v1131 = vmin.f32 %v1129, %v1115
    %v1132 = vmin.f32 %v1130, %v1117
    %v1133 = vmin.f32 %v1131, %v1132
    %v1134 = vmin.f32 %v1088, %v1092
    %v1135 = vmin.f32 %v1090, %v1094
    %v1136 = vmin.f32 %v1134, %v1096
    %v1137 = vmin.f32 %v1135, %v1098
    %v1138 = vmin.f32 %v1136, %v1100
    %v1139 = vmin.f32 %v1137, %v1102
    %v1140 = vmin.f32 %v1138, %v1104
    %v1141 = vmin.f32 %v1139, %v1106
    %v1142 = vmin.f32 %v1140, %v1108
    %v1143 = vmin.f32 %v1141, %v1110
    %v1144 = vmin.f32 %v1142, %v1112
    %v1145 = vmin.f32 %v1143, %v1114
    %v1146 = vmin.f32 %v1144, %v1116
    %v1147 = vmin.f32 %v1145, %v1118
    %v1148 = vmin.f32 %v1146, %v1147
    %v1149 = vmin.f32 %v1009, %v1133
    %v1150 = vmin.f32 %v1010, %v1148
    %v1151 = vsel %vm1037, 3e+38, %v1149
    %v1152 = vsel %vm1038, 3e+38, %v1150
    %v1153 = vmin.f32 %v1151, %v1152
    %v1154 = vrot.slane %v1153, 4
    %v1155 = vmin.f32 %v1153, %v1154
    %v1156 = vrot.slane %v1155, 2
    %v1157 = vmin.f32 %v1155, %v1156
    %v1158 = vrot.slane %v1157, 1
    %v1159 = vmin.f32 %v1157, %v1158
    %vm1160 = vcmp.eq.f32.partialorder %v1151, %v1159
    %vm1161 = vcmp.eq.f32.partialorder %v1152, %v1159
    %v1162 = vsel %vm1160, %v867, 16
    %v1163 = vsel %vm1161, %v868, 16
    %vm1164 = vcmp.lt.s32.totalorder %v1162, %v1163
    %v1165 = vsel %vm1164, %v1162, %v1163
    %v1166 = vrot.slane %v1165, 4
    %vm1167 = vcmp.lt.s32.totalorder %v1165, %v1166
    %v1168 = vsel %vm1167, %v1165, %v1166
    %v1169 = vrot.slane %v1168, 2
    %vm1170 = vcmp.lt.s32.totalorder %v1168, %v1169
    %v1171 = vsel %vm1170, %v1168, %v1169
    %v1172 = vrot.slane %v1171, 1
    %vm1173 = vcmp.lt.s32.totalorder %v1171, %v1172
    %v1174 = vsel %vm1173, %v1171, %v1172
    %vm1175 = vcmp.eq.s32.totalorder %v867, %v1174
    %vm1176 = vcmp.eq.s32.totalorder %v868, %v1174
    %vm1177 = vmor %vm1037, %vm1175
    %vm1178 = vmor %vm1038, %vm1176
    %vm1179 = vcmp.eq.s32.totalorder %v1174, 0
    %vm1180 = vcmp.eq.s32.totalorder %v1174, 1
    %vm1181 = vcmp.eq.s32.totalorder %v1174, 2
    %vm1182 = vcmp.eq.s32.totalorder %v1174, 3
    %vm1183 = vcmp.eq.s32.totalorder %v1174, 4
    %vm1184 = vcmp.eq.s32.totalorder %v1174, 5
    %vm1185 = vcmp.eq.s32.totalorder %v1174, 6
    %vm1186 = vcmp.eq.s32.totalorder %v1174, 7
    %vm1187 = vcmp.eq.s32.totalorder %v1174, 8
    %vm1188 = vcmp.eq.s32.totalorder %v1174, 9
    %vm1189 = vcmp.eq.s32.totalorder %v1174, 10
    %vm1190 = vcmp.eq.s32.totalorder %v1174, 11
    %vm1191 = vcmp.eq.s32.totalorder %v1174, 12
    %vm1192 = vcmp.eq.s32.totalorder %v1174, 13
    %vm1193 = vcmp.eq.s32.totalorder %v1174, 14
    %vm1194 = vcmp.eq.s32.totalorder %v1174, 15
    %v1195 = vsel %vm1179, 1, 0
    %v1196 = vsel %vm1180, 1, 0
    %v1197 = vsel %vm1181, 1, 0
    %v1198 = vsel %vm1182, 1, 0
    %v1199 = vsel %vm1183, 1, 0
    %v1200 = vsel %vm1184, 1, 0
    %v1201 = vsel %vm1185, 1, 0
    %v1202 = vsel %vm1186, 1, 0
    %v1203 = vsel %vm1187, 1, 0
    %v1204 = vsel %vm1188, 1, 0
    %v1205 = vsel %vm1189, 1, 0
    %v1206 = vsel %vm1190, 1, 0
    %v1207 = vsel %vm1191, 1, 0
    %v1208 = vsel %vm1192, 1, 0
    %v1209 = vsel %vm1193, 1, 0
    %v1210 = vsel %vm1194, 1, 0
    %vm1211 = vcmp.eq.s32.totalorder %v1195, 1
    %vm1212 = vcmp.eq.s32.totalorder %v1196, 1
    %vm1213 = vcmp.eq.s32.totalorder %v1197, 1
    %vm1214 = vcmp.eq.s32.totalorder %v1198, 1
    %vm1215 = vcmp.eq.s32.totalorder %v1199, 1
    %vm1216 = vcmp.eq.s32.totalorder %v1200, 1
    %vm1217 = vcmp.eq.s32.totalorder %v1201, 1
    %vm1218 = vcmp.eq.s32.totalorder %v1202, 1
    %vm1219 = vcmp.eq.s32.totalorder %v1203, 1
    %vm1220 = vcmp.eq.s32.totalorder %v1204, 1
    %vm1221 = vcmp.eq.s32.totalorder %v1205, 1
    %vm1222 = vcmp.eq.s32.totalorder %v1206, 1
    %vm1223 = vcmp.eq.s32.totalorder %v1207, 1
    %vm1224 = vcmp.eq.s32.totalorder %v1208, 1
    %vm1225 = vcmp.eq.s32.totalorder %v1209, 1
    %vm1226 = vcmp.eq.s32.totalorder %v1210, 1
    %v1227 = vsel %vm1211, %v796, 3e+38
    %v1228 = vsel %vm1211, %v797, 3e+38
    %v1229 = vsel %vm1212, %v798, 3e+38
    %v1230 = vsel %vm1212, %v799, 3e+38
    %v1231 = vsel %vm1213, %v800, 3e+38
    %v1232 = vsel %vm1213, %v801, 3e+38
    %v1233 = vsel %vm1214, %v802, 3e+38
    %v1234 = vsel %vm1214, %v803, 3e+38
    %v1235 = vsel %vm1215, %v804, 3e+38
    %v1236 = vsel %vm1215, %v805, 3e+38
    %v1237 = vsel %vm1216, %v806, 3e+38
    %v1238 = vsel %vm1216, %v807, 3e+38
    %v1239 = vsel %vm1217, %v808, 3e+38
    %v1240 = vsel %vm1217, %v809, 3e+38
    %v1241 = vsel %vm1218, %v810, 3e+38
    %v1242 = vsel %vm1218, %v811, 3e+38
    %v1243 = vsel %vm1219, %v812, 3e+38
    %v1244 = vsel %vm1219, %v813, 3e+38
    %v1245 = vsel %vm1220, %v814, 3e+38
    %v1246 = vsel %vm1220, %v815, 3e+38
    %v1247 = vsel %vm1221, %v816, 3e+38
    %v1248 = vsel %vm1221, %v817, 3e+38
    %v1249 = vsel %vm1222, %v818, 3e+38
    %v1250 = vsel %vm1222, %v819, 3e+38
    %v1251 = vsel %vm1223, %v820, 3e+38
    %v1252 = vsel %vm1223, %v821, 3e+38
    %v1253 = vsel %vm1224, %v822, 3e+38
    %v1254 = vsel %vm1224, %v823, 3e+38
    %v1255 = vsel %vm1225, %v824, 3e+38
    %v1256 = vsel %vm1225, %v825, 3e+38
    %v1257 = vsel %vm1226, %v826, 3e+38
    %v1258 = vsel %vm1226, %v827, 3e+38
    %v1259 = vmin.f32 %v1227, %v1231
    %v1260 = vmin.f32 %v1229, %v1233
    %v1261 = vmin.f32 %v1259, %v1235
    %v1262 = vmin.f32 %v1260, %v1237
    %v1263 = vmin.f32 %v1261, %v1239
    %v1264 = vmin.f32 %v1262, %v1241
    %v1265 = vmin.f32 %v1263, %v1243
    %v1266 = vmin.f32 %v1264, %v1245
    %v1267 = vmin.f32 %v1265, %v1247
    %v1268 = vmin.f32 %v1266, %v1249
    %v1269 = vmin.f32 %v1267, %v1251
    %v1270 = vmin.f32 %v1268, %v1253
    %v1271 = vmin.f32 %v1269, %v1255
    %v1272 = vmin.f32 %v1270, %v1257
    %v1273 = vmin.f32 %v1271, %v1272
    %v1274 = vmin.f32 %v1228, %v1232
    %v1275 = vmin.f32 %v1230, %v1234
    %v1276 = vmin.f32 %v1274, %v1236
    %v1277 = vmin.f32 %v1275, %v1238
    %v1278 = vmin.f32 %v1276, %v1240
    %v1279 = vmin.f32 %v1277, %v1242
    %v1280 = vmin.f32 %v1278, %v1244
    %v1281 = vmin.f32 %v1279, %v1246
    %v1282 = vmin.f32 %v1280, %v1248
    %v1283 = vmin.f32 %v1281, %v1250
    %v1284 = vmin.f32 %v1282, %v1252
    %v1285 = vmin.f32 %v1283, %v1254
    %v1286 = vmin.f32 %v1284, %v1256
    %v1287 = vmin.f32 %v1285, %v1258
    %v1288 = vmin.f32 %v1286, %v1287
    %v1289 = vmin.f32 %v1149, %v1273
    %v1290 = vmin.f32 %v1150, %v1288
    %v1291 = vsel %vm1177, 3e+38, %v1289
    %v1292 = vsel %vm1178, 3e+38, %v1290
    %v1293 = vmin.f32 %v1291, %v1292
    %v1294 = vrot.slane %v1293, 4
    %v1295 = vmin.f32 %v1293, %v1294
    %v1296 = vrot.slane %v1295, 2
    %v1297 = vmin.f32 %v1295, %v1296
    %v1298 = vrot.slane %v1297, 1
    %v1299 = vmin.f32 %v1297, %v1298
    %vm1300 = vcmp.eq.f32.partialorder %v1291, %v1299
    %vm1301 = vcmp.eq.f32.partialorder %v1292, %v1299
    %v1302 = vsel %vm1300, %v867, 16
    %v1303 = vsel %vm1301, %v868, 16
    %vm1304 = vcmp.lt.s32.totalorder %v1302, %v1303
    %v1305 = vsel %vm1304, %v1302, %v1303
    %v1306 = vrot.slane %v1305, 4
    %vm1307 = vcmp.lt.s32.totalorder %v1305, %v1306
    %v1308 = vsel %vm1307, %v1305, %v1306
    %v1309 = vrot.slane %v1308, 2
    %vm1310 = vcmp.lt.s32.totalorder %v1308, %v1309
    %v1311 = vsel %vm1310, %v1308, %v1309
    %v1312 = vrot.slane %v1311, 1
    %vm1313 = vcmp.lt.s32.totalorder %v1311, %v1312
    %v1314 = vsel %vm1313, %v1311, %v1312
    %vm1315 = vcmp.eq.s32.totalorder %v867, %v1314
    %vm1316 = vcmp.eq.s32.totalorder %v868, %v1314
    %vm1317 = vmor %vm1177, %vm1315
    %vm1318 = vmor %vm1178, %vm1316
    %vm1319 = vcmp.eq.s32.totalorder %v1314, 0
    %vm1320 = vcmp.eq.s32.totalorder %v1314, 1
    %vm1321 = vcmp.eq.s32.totalorder %v1314, 2
    %vm1322 = vcmp.eq.s32.totalorder %v1314, 3
    %vm1323 = vcmp.eq.s32.totalorder %v1314, 4
    %vm1324 = vcmp.eq.s32.totalorder %v1314, 5
    %vm1325 = vcmp.eq.s32.totalorder %v1314, 6
    %vm1326 = vcmp.eq.s32.totalorder %v1314, 7
    %vm1327 = vcmp.eq.s32.totalorder %v1314, 8
    %vm1328 = vcmp.eq.s32.totalorder %v1314, 9
    %vm1329 = vcmp.eq.s32.totalorder %v1314, 10
    %vm1330 = vcmp.eq.s32.totalorder %v1314, 11
    %vm1331 = vcmp.eq.s32.totalorder %v1314, 12
    %vm1332 = vcmp.eq.s32.totalorder %v1314, 13
    %vm1333 = vcmp.eq.s32.totalorder %v1314, 14
    %vm1334 = vcmp.eq.s32.totalorder %v1314, 15
    %v1335 = vsel %vm1319, 1, 0
    %v1336 = vsel %vm1320, 1, 0
    %v1337 = vsel %vm1321, 1, 0
    %v1338 = vsel %vm1322, 1, 0
    %v1339 = vsel %vm1323, 1, 0
    %v1340 = vsel %vm1324, 1, 0
    %v1341 = vsel %vm1325, 1, 0
    %v1342 = vsel %vm1326, 1, 0
    %v1343 = vsel %vm1327, 1, 0
    %v1344 = vsel %vm1328, 1, 0
    %v1345 = vsel %vm1329, 1, 0
    %v1346 = vsel %vm1330, 1, 0
    %v1347 = vsel %vm1331, 1, 0
    %v1348 = vsel %vm1332, 1, 0
    %v1349 = vsel %vm1333, 1, 0
    %v1350 = vsel %vm1334, 1, 0
    %vm1351 = vcmp.eq.s32.totalorder %v1335, 1
    %vm1352 = vcmp.eq.s32.totalorder %v1336, 1
    %vm1353 = vcmp.eq.s32.totalorder %v1337, 1
    %vm1354 = vcmp.eq.s32.totalorder %v1338, 1
    %vm1355 = vcmp.eq.s32.totalorder %v1339, 1
    %vm1356 = vcmp.eq.s32.totalorder %v1340, 1
    %vm1357 = vcmp.eq.s32.totalorder %v1341, 1
    %vm1358 = vcmp.eq.s32.totalorder %v1342, 1
    %vm1359 = vcmp.eq.s32.totalorder %v1343, 1
    %vm1360 = vcmp.eq.s32.totalorder %v1344, 1
    %vm1361 = vcmp.eq.s32.totalorder %v1345, 1
    %vm1362 = vcmp.eq.s32.totalorder %v1346, 1
    %vm1363 = vcmp.eq.s32.totalorder %v1347, 1
    %vm1364 = vcmp.eq.s32.totalorder %v1348, 1
    %vm1365 = vcmp.eq.s32.totalorder %v1349, 1
    %vm1366 = vcmp.eq.s32.totalorder %v1350, 1
    %v1367 = vsel %vm1351, %v796, 3e+38
    %v1368 = vsel %vm1351, %v797, 3e+38
    %v1369 = vsel %vm1352, %v798, 3e+38
    %v1370 = vsel %vm1352, %v799, 3e+38
    %v1371 = vsel %vm1353, %v800, 3e+38
    %v1372 = vsel %vm1353, %v801, 3e+38
    %v1373 = vsel %vm1354, %v802, 3e+38
    %v1374 = vsel %vm1354, %v803, 3e+38
    %v1375 = vsel %vm1355, %v804, 3e+38
    %v1376 = vsel %vm1355, %v805, 3e+38
    %v1377 = vsel %vm1356, %v806, 3e+38
    %v1378 = vsel %vm1356, %v807, 3e+38
    %v1379 = vsel %vm1357, %v808, 3e+38
    %v1380 = vsel %vm1357, %v809, 3e+38
    %v1381 = vsel %vm1358, %v810, 3e+38
    %v1382 = vsel %vm1358, %v811, 3e+38
    %v1383 = vsel %vm1359, %v812, 3e+38
    %v1384 = vsel %vm1359, %v813, 3e+38
    %v1385 = vsel %vm1360, %v814, 3e+38
    %v1386 = vsel %vm1360, %v815, 3e+38
    %v1387 = vsel %vm1361, %v816, 3e+38
    %v1388 = vsel %vm1361, %v817, 3e+38
    %v1389 = vsel %vm1362, %v818, 3e+38
    %v1390 = vsel %vm1362, %v819, 3e+38
    %v1391 = vsel %vm1363, %v820, 3e+38
    %v1392 = vsel %vm1363, %v821, 3e+38
    %v1393 = vsel %vm1364, %v822, 3e+38
    %v1394 = vsel %vm1364, %v823, 3e+38
    %v1395 = vsel %vm1365, %v824, 3e+38
    %v1396 = vsel %vm1365, %v825, 3e+38
    %v1397 = vsel %vm1366, %v826, 3e+38
    %v1398 = vsel %vm1366, %v827, 3e+38
    %v1399 = vmin.f32 %v1367, %v1371
    %v1400 = vmin.f32 %v1369, %v1373
    %v1401 = vmin.f32 %v1399, %v1375
    %v1402 = vmin.f32 %v1400, %v1377
    %v1403 = vmin.f32 %v1401, %v1379
    %v1404 = vmin.f32 %v1402, %v1381
    %v1405 = vmin.f32 %v1403, %v1383
    %v1406 = vmin.f32 %v1404, %v1385
    %v1407 = vmin.f32 %v1405, %v1387
    %v1408 = vmin.f32 %v1406, %v1389
    %v1409 = vmin.f32 %v1407, %v1391
    %v1410 = vmin.f32 %v1408, %v1393
    %v1411 = vmin.f32 %v1409, %v1395
    %v1412 = vmin.f32 %v1410, %v1397
    %v1413 = vmin.f32 %v1411, %v1412
    %v1414 = vmin.f32 %v1368, %v1372
    %v1415 = vmin.f32 %v1370, %v1374
    %v1416 = vmin.f32 %v1414, %v1376
    %v1417 = vmin.f32 %v1415, %v1378
    %v1418 = vmin.f32 %v1416, %v1380
    %v1419 = vmin.f32 %v1417, %v1382
    %v1420 = vmin.f32 %v1418, %v1384
    %v1421 = vmin.f32 %v1419, %v1386
    %v1422 = vmin.f32 %v1420, %v1388
    %v1423 = vmin.f32 %v1421, %v1390
    %v1424 = vmin.f32 %v1422, %v1392
    %v1425 = vmin.f32 %v1423, %v1394
    %v1426 = vmin.f32 %v1424, %v1396
    %v1427 = vmin.f32 %v1425, %v1398
    %v1428 = vmin.f32 %v1426, %v1427
    %v1429 = vmin.f32 %v1289, %v1413
    %v1430 = vmin.f32 %v1290, %v1428
    %v1431 = vsel %vm1317, 3e+38, %v1429
    %v1432 = vsel %vm1318, 3e+38, %v1430
    %v1433 = vmin.f32 %v1431, %v1432
    %v1434 = vrot.slane %v1433, 4
    %v1435 = vmin.f32 %v1433, %v1434
    %v1436 = vrot.slane %v1435, 2
    %v1437 = vmin.f32 %v1435, %v1436
    %v1438 = vrot.slane %v1437, 1
    %v1439 = vmin.f32 %v1437, %v1438
    %vm1440 = vcmp.eq.f32.partialorder %v1431, %v1439
    %vm1441 = vcmp.eq.f32.partialorder %v1432, %v1439
    %v1442 = vsel %vm1440, %v867, 16
    %v1443 = vsel %vm1441, %v868, 16
    %vm1444 = vcmp.lt.s32.totalorder %v1442, %v1443
    %v1445 = vsel %vm1444, %v1442, %v1443
    %v1446 = vrot.slane %v1445, 4
    %vm1447 = vcmp.lt.s32.totalorder %v1445, %v1446
    %v1448 = vsel %vm1447, %v1445, %v1446
    %v1449 = vrot.slane %v1448, 2
    %vm1450 = vcmp.lt.s32.totalorder %v1448, %v1449
    %v1451 = vsel %vm1450, %v1448, %v1449
    %v1452 = vrot.slane %v1451, 1
    %vm1453 = vcmp.lt.s32.totalorder %v1451, %v1452
    %v1454 = vsel %vm1453, %v1451, %v1452
    %vm1455 = vcmp.eq.s32.totalorder %v867, %v1454
    %vm1456 = vcmp.eq.s32.totalorder %v868, %v1454
    %vm1457 = vmor %vm1317, %vm1455
    %vm1458 = vmor %vm1318, %vm1456
    %vm1459 = vcmp.eq.s32.totalorder %v1454, 0
    %vm1460 = vcmp.eq.s32.totalorder %v1454, 1
    %vm1461 = vcmp.eq.s32.totalorder %v1454, 2
    %vm1462 = vcmp.eq.s32.totalorder %v1454, 3
    %vm1463 = vcmp.eq.s32.totalorder %v1454, 4
    %vm1464 = vcmp.eq.s32.totalorder %v1454, 5
    %vm1465 = vcmp.eq.s32.totalorder %v1454, 6
    %vm1466 = vcmp.eq.s32.totalorder %v1454, 7
    %vm1467 = vcmp.eq.s32.totalorder %v1454, 8
    %vm1468 = vcmp.eq.s32.totalorder %v1454, 9
    %vm1469 = vcmp.eq.s32.totalorder %v1454, 10
    %vm1470 = vcmp.eq.s32.totalorder %v1454, 11
    %vm1471 = vcmp.eq.s32.totalorder %v1454, 12
    %vm1472 = vcmp.eq.s32.totalorder %v1454, 13
    %vm1473 = vcmp.eq.s32.totalorder %v1454, 14
    %vm1474 = vcmp.eq.s32.totalorder %v1454, 15
    %v1475 = vsel %vm1459, 1, 0
    %v1476 = vsel %vm1460, 1, 0
    %v1477 = vsel %vm1461, 1, 0
    %v1478 = vsel %vm1462, 1, 0
    %v1479 = vsel %vm1463, 1, 0
    %v1480 = vsel %vm1464, 1, 0
    %v1481 = vsel %vm1465, 1, 0
    %v1482 = vsel %vm1466, 1, 0
    %v1483 = vsel %vm1467, 1, 0
    %v1484 = vsel %vm1468, 1, 0
    %v1485 = vsel %vm1469, 1, 0
    %v1486 = vsel %vm1470, 1, 0
    %v1487 = vsel %vm1471, 1, 0
    %v1488 = vsel %vm1472, 1, 0
    %v1489 = vsel %vm1473, 1, 0
    %v1490 = vsel %vm1474, 1, 0
    %vm1491 = vcmp.eq.s32.totalorder %v1475, 1
    %vm1492 = vcmp.eq.s32.totalorder %v1476, 1
    %vm1493 = vcmp.eq.s32.totalorder %v1477, 1
    %vm1494 = vcmp.eq.s32.totalorder %v1478, 1
    %vm1495 = vcmp.eq.s32.totalorder %v1479, 1
    %vm1496 = vcmp.eq.s32.totalorder %v1480, 1
    %vm1497 = vcmp.eq.s32.totalorder %v1481, 1
    %vm1498 = vcmp.eq.s32.totalorder %v1482, 1
    %vm1499 = vcmp.eq.s32.totalorder %v1483, 1
    %vm1500 = vcmp.eq.s32.totalorder %v1484, 1
    %vm1501 = vcmp.eq.s32.totalorder %v1485, 1
    %vm1502 = vcmp.eq.s32.totalorder %v1486, 1
    %vm1503 = vcmp.eq.s32.totalorder %v1487, 1
    %vm1504 = vcmp.eq.s32.totalorder %v1488, 1
    %vm1505 = vcmp.eq.s32.totalorder %v1489, 1
    %vm1506 = vcmp.eq.s32.totalorder %v1490, 1
    %v1507 = vsel %vm1491, %v796, 3e+38
    %v1508 = vsel %vm1491, %v797, 3e+38
    %v1509 = vsel %vm1492, %v798, 3e+38
    %v1510 = vsel %vm1492, %v799, 3e+38
    %v1511 = vsel %vm1493, %v800, 3e+38
    %v1512 = vsel %vm1493, %v801, 3e+38
    %v1513 = vsel %vm1494, %v802, 3e+38
    %v1514 = vsel %vm1494, %v803, 3e+38
    %v1515 = vsel %vm1495, %v804, 3e+38
    %v1516 = vsel %vm1495, %v805, 3e+38
    %v1517 = vsel %vm1496, %v806, 3e+38
    %v1518 = vsel %vm1496, %v807, 3e+38
    %v1519 = vsel %vm1497, %v808, 3e+38
    %v1520 = vsel %vm1497, %v809, 3e+38
    %v1521 = vsel %vm1498, %v810, 3e+38
    %v1522 = vsel %vm1498, %v811, 3e+38
    %v1523 = vsel %vm1499, %v812, 3e+38
    %v1524 = vsel %vm1499, %v813, 3e+38
    %v1525 = vsel %vm1500, %v814, 3e+38
    %v1526 = vsel %vm1500, %v815, 3e+38
    %v1527 = vsel %vm1501, %v816, 3e+38
    %v1528 = vsel %vm1501, %v817, 3e+38
    %v1529 = vsel %vm1502, %v818, 3e+38
    %v1530 = vsel %vm1502, %v819, 3e+38
    %v1531 = vsel %vm1503, %v820, 3e+38
    %v1532 = vsel %vm1503, %v821, 3e+38
    %v1533 = vsel %vm1504, %v822, 3e+38
    %v1534 = vsel %vm1504, %v823, 3e+38
    %v1535 = vsel %vm1505, %v824, 3e+38
    %v1536 = vsel %vm1505, %v825, 3e+38
    %v1537 = vsel %vm1506, %v826, 3e+38
    %v1538 = vsel %vm1506, %v827, 3e+38
    %v1539 = vmin.f32 %v1507, %v1511
    %v1540 = vmin.f32 %v1509, %v1513
    %v1541 = vmin.f32 %v1539, %v1515
    %v1542 = vmin.f32 %v1540, %v1517
    %v1543 = vmin.f32 %v1541, %v1519
    %v1544 = vmin.f32 %v1542, %v1521
    %v1545 = vmin.f32 %v1543, %v1523
    %v1546 = vmin.f32 %v1544, %v1525
    %v1547 = vmin.f32 %v1545, %v1527
    %v1548 = vmin.f32 %v1546, %v1529
    %v1549 = vmin.f32 %v1547, %v1531
    %v1550 = vmin.f32 %v1548, %v1533
    %v1551 = vmin.f32 %v1549, %v1535
    %v1552 = vmin.f32 %v1550, %v1537
    %v1553 = vmin.f32 %v1551, %v1552
    %v1554 = vmin.f32 %v1508, %v1512
    %v1555 = vmin.f32 %v1510, %v1514
    %v1556 = vmin.f32 %v1554, %v1516
    %v1557 = vmin.f32 %v1555, %v1518
    %v1558 = vmin.f32 %v1556, %v1520
    %v1559 = vmin.f32 %v1557, %v1522
    %v1560 = vmin.f32 %v1558, %v1524
    %v1561 = vmin.f32 %v1559, %v1526
    %v1562 = vmin.f32 %v1560, %v1528
    %v1563 = vmin.f32 %v1561, %v1530
    %v1564 = vmin.f32 %v1562, %v1532
    %v1565 = vmin.f32 %v1563, %v1534
    %v1566 = vmin.f32 %v1564, %v1536
    %v1567 = vmin.f32 %v1565, %v1538
    %v1568 = vmin.f32 %v1566, %v1567
    %v1569 = vmin.f32 %v1429, %v1553
    %v1570 = vmin.f32 %v1430, %v1568
    %v1571 = vsel %vm1457, 3e+38, %v1569
    %v1572 = vsel %vm1458, 3e+38, %v1570
    %v1573 = vmin.f32 %v1571, %v1572
    %v1574 = vrot.slane %v1573, 4
    %v1575 = vmin.f32 %v1573, %v1574
    %v1576 = vrot.slane %v1575, 2
    %v1577 = vmin.f32 %v1575, %v1576
    %v1578 = vrot.slane %v1577, 1
    %v1579 = vmin.f32 %v1577, %v1578
    %vm1580 = vcmp.eq.f32.partialorder %v1571, %v1579
    %vm1581 = vcmp.eq.f32.partialorder %v1572, %v1579
    %v1582 = vsel %vm1580, %v867, 16
    %v1583 = vsel %vm1581, %v868, 16
    %vm1584 = vcmp.lt.s32.totalorder %v1582, %v1583
    %v1585 = vsel %vm1584, %v1582, %v1583
    %v1586 = vrot.slane %v1585, 4
    %vm1587 = vcmp.lt.s32.totalorder %v1585, %v1586
    %v1588 = vsel %vm1587, %v1585, %v1586
    %v1589 = vrot.slane %v1588, 2
    %vm1590 = vcmp.lt.s32.totalorder %v1588, %v1589
    %v1591 = vsel %vm1590, %v1588, %v1589
    %v1592 = vrot.slane %v1591, 1
    %vm1593 = vcmp.lt.s32.totalorder %v1591, %v1592
    %v1594 = vsel %vm1593, %v1591, %v1592
    %vm1595 = vcmp.eq.s32.totalorder %v867, %v1594
    %vm1596 = vcmp.eq.s32.totalorder %v868, %v1594
    %vm1597 = vmor %vm1457, %vm1595
    %vm1598 = vmor %vm1458, %vm1596
    %vm1599 = vcmp.eq.s32.totalorder %v1594, 0
    %vm1600 = vcmp.eq.s32.totalorder %v1594, 1
    %vm1601 = vcmp.eq.s32.totalorder %v1594, 2
    %vm1602 = vcmp.eq.s32.totalorder %v1594, 3
    %vm1603 = vcmp.eq.s32.totalorder %v1594, 4
    %vm1604 = vcmp.eq.s32.totalorder %v1594, 5
    %vm1605 = vcmp.eq.s32.totalorder %v1594, 6
    %vm1606 = vcmp.eq.s32.totalorder %v1594, 7
    %vm1607 = vcmp.eq.s32.totalorder %v1594, 8
    %vm1608 = vcmp.eq.s32.totalorder %v1594, 9
    %vm1609 = vcmp.eq.s32.totalorder %v1594, 10
    %vm1610 = vcmp.eq.s32.totalorder %v1594, 11
    %vm1611 = vcmp.eq.s32.totalorder %v1594, 12
    %vm1612 = vcmp.eq.s32.totalorder %v1594, 13
    %vm1613 = vcmp.eq.s32.totalorder %v1594, 14
    %vm1614 = vcmp.eq.s32.totalorder %v1594, 15
    %v1615 = vsel %vm1599, 1, 0
    %v1616 = vsel %vm1600, 1, 0
    %v1617 = vsel %vm1601, 1, 0
    %v1618 = vsel %vm1602, 1, 0
    %v1619 = vsel %vm1603, 1, 0
    %v1620 = vsel %vm1604, 1, 0
    %v1621 = vsel %vm1605, 1, 0
    %v1622 = vsel %vm1606, 1, 0
    %v1623 = vsel %vm1607, 1, 0
    %v1624 = vsel %vm1608, 1, 0
    %v1625 = vsel %vm1609, 1, 0
    %v1626 = vsel %vm1610, 1, 0
    %v1627 = vsel %vm1611, 1, 0
    %v1628 = vsel %vm1612, 1, 0
    %v1629 = vsel %vm1613, 1, 0
    %v1630 = vsel %vm1614, 1, 0
    %vm1631 = vcmp.eq.s32.totalorder %v1615, 1
    %vm1632 = vcmp.eq.s32.totalorder %v1616, 1
    %vm1633 = vcmp.eq.s32.totalorder %v1617, 1
    %vm1634 = vcmp.eq.s32.totalorder %v1618, 1
    %vm1635 = vcmp.eq.s32.totalorder %v1619, 1
    %vm1636 = vcmp.eq.s32.totalorder %v1620, 1
    %vm1637 = vcmp.eq.s32.totalorder %v1621, 1
    %vm1638 = vcmp.eq.s32.totalorder %v1622, 1
    %vm1639 = vcmp.eq.s32.totalorder %v1623, 1
    %vm1640 = vcmp.eq.s32.totalorder %v1624, 1
    %vm1641 = vcmp.eq.s32.totalorder %v1625, 1
    %vm1642 = vcmp.eq.s32.totalorder %v1626, 1
    %vm1643 = vcmp.eq.s32.totalorder %v1627, 1
    %vm1644 = vcmp.eq.s32.totalorder %v1628, 1
    %vm1645 = vcmp.eq.s32.totalorder %v1629, 1
    %vm1646 = vcmp.eq.s32.totalorder %v1630, 1
    %v1647 = vsel %vm1631, %v796, 3e+38
    %v1648 = vsel %vm1631, %v797, 3e+38
    %v1649 = vsel %vm1632, %v798, 3e+38
    %v1650 = vsel %vm1632, %v799, 3e+38
    %v1651 = vsel %vm1633, %v800, 3e+38
    %v1652 = vsel %vm1633, %v801, 3e+38
    %v1653 = vsel %vm1634, %v802, 3e+38
    %v1654 = vsel %vm1634, %v803, 3e+38
    %v1655 = vsel %vm1635, %v804, 3e+38
    %v1656 = vsel %vm1635, %v805, 3e+38
    %v1657 = vsel %vm1636, %v806, 3e+38
    %v1658 = vsel %vm1636, %v807, 3e+38
    %v1659 = vsel %vm1637, %v808, 3e+38
    %v1660 = vsel %vm1637, %v809, 3e+38
    %v1661 = vsel %vm1638, %v810, 3e+38
    %v1662 = vsel %vm1638, %v811, 3e+38
    %v1663 = vsel %vm1639, %v812, 3e+38
    %v1664 = vsel %vm1639, %v813, 3e+38
    %v1665 = vsel %vm1640, %v814, 3e+38
    %v1666 = vsel %vm1640, %v815, 3e+38
    %v1667 = vsel %vm1641, %v816, 3e+38
    %v1668 = vsel %vm1641, %v817, 3e+38
    %v1669 = vsel %vm1642, %v818, 3e+38
    %v1670 = vsel %vm1642, %v819, 3e+38
    %v1671 = vsel %vm1643, %v820, 3e+38
    %v1672 = vsel %vm1643, %v821, 3e+38
    %v1673 = vsel %vm1644, %v822, 3e+38
    %v1674 = vsel %vm1644, %v823, 3e+38
    %v1675 = vsel %vm1645, %v824, 3e+38
    %v1676 = vsel %vm1645, %v825, 3e+38
    %v1677 = vsel %vm1646, %v826, 3e+38
    %v1678 = vsel %vm1646, %v827, 3e+38
    %v1679 = vmin.f32 %v1647, %v1651
    %v1680 = vmin.f32 %v1649, %v1653
    %v1681 = vmin.f32 %v1679, %v1655
    %v1682 = vmin.f32 %v1680, %v1657
    %v1683 = vmin.f32 %v1681, %v1659
    %v1684 = vmin.f32 %v1682, %v1661
    %v1685 = vmin.f32 %v1683, %v1663
    %v1686 = vmin.f32 %v1684, %v1665
    %v1687 = vmin.f32 %v1685, %v1667
    %v1688 = vmin.f32 %v1686, %v1669
    %v1689 = vmin.f32 %v1687, %v1671
    %v1690 = vmin.f32 %v1688, %v1673
    %v1691 = vmin.f32 %v1689, %v1675
    %v1692 = vmin.f32 %v1690, %v1677
    %v1693 = vmin.f32 %v1691, %v1692
    %v1694 = vmin.f32 %v1648, %v1652
    %v1695 = vmin.f32 %v1650, %v1654
    %v1696 = vmin.f32 %v1694, %v1656
    %v1697 = vmin.f32 %v1695, %v1658
    %v1698 = vmin.f32 %v1696, %v1660
    %v1699 = vmin.f32 %v1697, %v1662
    %v1700 = vmin.f32 %v1698, %v1664
    %v1701 = vmin.f32 %v1699, %v1666
    %v1702 = vmin.f32 %v1700, %v1668
    %v1703 = vmin.f32 %v1701, %v1670
    %v1704 = vmin.f32 %v1702, %v1672
    %v1705 = vmin.f32 %v1703, %v1674
    %v1706 = vmin.f32 %v1704, %v1676
    %v1707 = vmin.f32 %v1705, %v1678
    %v1708 = vmin.f32 %v1706, %v1707
    %v1709 = vmin.f32 %v1569, %v1693
    %v1710 = vmin.f32 %v1570, %v1708
    %v1711 = vsel %vm1597, 3e+38, %v1709
    %v1712 = vsel %vm1598, 3e+38, %v1710
    %v1713 = vmin.f32 %v1711, %v1712
    %v1714 = vrot.slane %v1713, 4
    %v1715 = vmin.f32 %v1713, %v1714
    %v1716 = vrot.slane %v1715, 2
    %v1717 = vmin.f32 %v1715, %v1716
    %v1718 = vrot.slane %v1717, 1
    %v1719 = vmin.f32 %v1717, %v1718
    %vm1720 = vcmp.eq.f32.partialorder %v1711, %v1719
    %vm1721 = vcmp.eq.f32.partialorder %v1712, %v1719
    %v1722 = vsel %vm1720, %v867, 16
    %v1723 = vsel %vm1721, %v868, 16
    %vm1724 = vcmp.lt.s32.totalorder %v1722, %v1723
    %v1725 = vsel %vm1724, %v1722, %v1723
    %v1726 = vrot.slane %v1725, 4
    %vm1727 = vcmp.lt.s32.totalorder %v1725, %v1726
    %v1728 = vsel %vm1727, %v1725, %v1726
    %v1729 = vrot.slane %v1728, 2
    %vm1730 = vcmp.lt.s32.totalorder %v1728, %v1729
    %v1731 = vsel %vm1730, %v1728, %v1729
    %v1732 = vrot.slane %v1731, 1
    %vm1733 = vcmp.lt.s32.totalorder %v1731, %v1732
    %v1734 = vsel %vm1733, %v1731, %v1732
    %vm1735 = vcmp.eq.s32.totalorder %v867, %v1734
    %vm1736 = vcmp.eq.s32.totalorder %v868, %v1734
    %vm1737 = vmor %vm1597, %vm1735
    %vm1738 = vmor %vm1598, %vm1736
    %vm1739 = vcmp.eq.s32.totalorder %v1734, 0
    %vm1740 = vcmp.eq.s32.totalorder %v1734, 1
    %vm1741 = vcmp.eq.s32.totalorder %v1734, 2
    %vm1742 = vcmp.eq.s32.totalorder %v1734, 3
    %vm1743 = vcmp.eq.s32.totalorder %v1734, 4
    %vm1744 = vcmp.eq.s32.totalorder %v1734, 5
    %vm1745 = vcmp.eq.s32.totalorder %v1734, 6
    %vm1746 = vcmp.eq.s32.totalorder %v1734, 7
    %vm1747 = vcmp.eq.s32.totalorder %v1734, 8
    %vm1748 = vcmp.eq.s32.totalorder %v1734, 9
    %vm1749 = vcmp.eq.s32.totalorder %v1734, 10
    %vm1750 = vcmp.eq.s32.totalorder %v1734, 11
    %vm1751 = vcmp.eq.s32.totalorder %v1734, 12
    %vm1752 = vcmp.eq.s32.totalorder %v1734, 13
    %vm1753 = vcmp.eq.s32.totalorder %v1734, 14
    %vm1754 = vcmp.eq.s32.totalorder %v1734, 15
    %v1755 = vsel %vm1739, 1, 0
    %v1756 = vsel %vm1740, 1, 0
    %v1757 = vsel %vm1741, 1, 0
    %v1758 = vsel %vm1742, 1, 0
    %v1759 = vsel %vm1743, 1, 0
    %v1760 = vsel %vm1744, 1, 0
    %v1761 = vsel %vm1745, 1, 0
    %v1762 = vsel %vm1746, 1, 0
    %v1763 = vsel %vm1747, 1, 0
    %v1764 = vsel %vm1748, 1, 0
    %v1765 = vsel %vm1749, 1, 0
    %v1766 = vsel %vm1750, 1, 0
    %v1767 = vsel %vm1751, 1, 0
    %v1768 = vsel %vm1752, 1, 0
    %v1769 = vsel %vm1753, 1, 0
    %v1770 = vsel %vm1754, 1, 0
    %vm1771 = vcmp.eq.s32.totalorder %v1755, 1
    %vm1772 = vcmp.eq.s32.totalorder %v1756, 1
    %vm1773 = vcmp.eq.s32.totalorder %v1757, 1
    %vm1774 = vcmp.eq.s32.totalorder %v1758, 1
    %vm1775 = vcmp.eq.s32.totalorder %v1759, 1
    %vm1776 = vcmp.eq.s32.totalorder %v1760, 1
    %vm1777 = vcmp.eq.s32.totalorder %v1761, 1
    %vm1778 = vcmp.eq.s32.totalorder %v1762, 1
    %vm1779 = vcmp.eq.s32.totalorder %v1763, 1
    %vm1780 = vcmp.eq.s32.totalorder %v1764, 1
    %vm1781 = vcmp.eq.s32.totalorder %v1765, 1
    %vm1782 = vcmp.eq.s32.totalorder %v1766, 1
    %vm1783 = vcmp.eq.s32.totalorder %v1767, 1
    %vm1784 = vcmp.eq.s32.totalorder %v1768, 1
    %vm1785 = vcmp.eq.s32.totalorder %v1769, 1
    %vm1786 = vcmp.eq.s32.totalorder %v1770, 1
    %v1787 = vsel %vm1771, %v796, 3e+38
    %v1788 = vsel %vm1771, %v797, 3e+38
    %v1789 = vsel %vm1772, %v798, 3e+38
    %v1790 = vsel %vm1772, %v799, 3e+38
    %v1791 = vsel %vm1773, %v800, 3e+38
    %v1792 = vsel %vm1773, %v801, 3e+38
    %v1793 = vsel %vm1774, %v802, 3e+38
    %v1794 = vsel %vm1774, %v803, 3e+38
    %v1795 = vsel %vm1775, %v804, 3e+38
    %v1796 = vsel %vm1775, %v805, 3e+38
    %v1797 = vsel %vm1776, %v806, 3e+38
    %v1798 = vsel %vm1776, %v807, 3e+38
    %v1799 = vsel %vm1777, %v808, 3e+38
    %v1800 = vsel %vm1777, %v809, 3e+38
    %v1801 = vsel %vm1778, %v810, 3e+38
    %v1802 = vsel %vm1778, %v811, 3e+38
    %v1803 = vsel %vm1779, %v812, 3e+38
    %v1804 = vsel %vm1779, %v813, 3e+38
    %v1805 = vsel %vm1780, %v814, 3e+38
    %v1806 = vsel %vm1780, %v815, 3e+38
    %v1807 = vsel %vm1781, %v816, 3e+38
    %v1808 = vsel %vm1781, %v817, 3e+38
    %v1809 = vsel %vm1782, %v818, 3e+38
    %v1810 = vsel %vm1782, %v819, 3e+38
    %v1811 = vsel %vm1783, %v820, 3e+38
    %v1812 = vsel %vm1783, %v821, 3e+38
    %v1813 = vsel %vm1784, %v822, 3e+38
    %v1814 = vsel %vm1784, %v823, 3e+38
    %v1815 = vsel %vm1785, %v824, 3e+38
    %v1816 = vsel %vm1785, %v825, 3e+38
    %v1817 = vsel %vm1786, %v826, 3e+38
    %v1818 = vsel %vm1786, %v827, 3e+38
    %v1819 = vmin.f32 %v1787, %v1791
    %v1820 = vmin.f32 %v1789, %v1793
    %v1821 = vmin.f32 %v1819, %v1795
    %v1822 = vmin.f32 %v1820, %v1797
    %v1823 = vmin.f32 %v1821, %v1799
    %v1824 = vmin.f32 %v1822, %v1801
    %v1825 = vmin.f32 %v1823, %v1803
    %v1826 = vmin.f32 %v1824, %v1805
    %v1827 = vmin.f32 %v1825, %v1807
    %v1828 = vmin.f32 %v1826, %v1809
    %v1829 = vmin.f32 %v1827, %v1811
    %v1830 = vmin.f32 %v1828, %v1813
    %v1831 = vmin.f32 %v1829, %v1815
    %v1832 = vmin.f32 %v1830, %v1817
    %v1833 = vmin.f32 %v1831, %v1832
    %v1834 = vmin.f32 %v1788, %v1792
    %v1835 = vmin.f32 %v1790, %v1794
    %v1836 = vmin.f32 %v1834, %v1796
    %v1837 = vmin.f32 %v1835, %v1798
    %v1838 = vmin.f32 %v1836, %v1800
    %v1839 = vmin.f32 %v1837, %v1802
    %v1840 = vmin.f32 %v1838, %v1804
    %v1841 = vmin.f32 %v1839, %v1806
    %v1842 = vmin.f32 %v1840, %v1808
    %v1843 = vmin.f32 %v1841, %v1810
    %v1844 = vmin.f32 %v1842, %v1812
    %v1845 = vmin.f32 %v1843, %v1814
    %v1846 = vmin.f32 %v1844, %v1816
    %v1847 = vmin.f32 %v1845, %v1818
    %v1848 = vmin.f32 %v1846, %v1847
    %v1849 = vmin.f32 %v1709, %v1833
    %v1850 = vmin.f32 %v1710, %v1848
    %v1851 = vsel %vm1737, 3e+38, %v1849
    %v1852 = vsel %vm1738, 3e+38, %v1850
    %v1853 = vmin.f32 %v1851, %v1852
    %v1854 = vrot.slane %v1853, 4
    %v1855 = vmin.f32 %v1853, %v1854
    %v1856 = vrot.slane %v1855, 2
    %v1857 = vmin.f32 %v1855, %v1856
    %v1858 = vrot.slane %v1857, 1
    %v1859 = vmin.f32 %v1857, %v1858
    %vm1860 = vcmp.eq.f32.partialorder %v1851, %v1859
    %vm1861 = vcmp.eq.f32.partialorder %v1852, %v1859
    %v1862 = vsel %vm1860, %v867, 16
    %v1863 = vsel %vm1861, %v868, 16
    %vm1864 = vcmp.lt.s32.totalorder %v1862, %v1863
    %v1865 = vsel %vm1864, %v1862, %v1863
    %v1866 = vrot.slane %v1865, 4
    %vm1867 = vcmp.lt.s32.totalorder %v1865, %v1866
    %v1868 = vsel %vm1867, %v1865, %v1866
    %v1869 = vrot.slane %v1868, 2
    %vm1870 = vcmp.lt.s32.totalorder %v1868, %v1869
    %v1871 = vsel %vm1870, %v1868, %v1869
    %v1872 = vrot.slane %v1871, 1
    %vm1873 = vcmp.lt.s32.totalorder %v1871, %v1872
    %v1874 = vsel %vm1873, %v1871, %v1872
    %vm1875 = vcmp.eq.s32.totalorder %v867, %v1874
    %vm1876 = vcmp.eq.s32.totalorder %v868, %v1874
    %vm1877 = vmor %vm1737, %vm1875
    %vm1878 = vmor %vm1738, %vm1876
    %vm1879 = vcmp.eq.s32.totalorder %v1874, 0
    %vm1880 = vcmp.eq.s32.totalorder %v1874, 1
    %vm1881 = vcmp.eq.s32.totalorder %v1874, 2
    %vm1882 = vcmp.eq.s32.totalorder %v1874, 3
    %vm1883 = vcmp.eq.s32.totalorder %v1874, 4
    %vm1884 = vcmp.eq.s32.totalorder %v1874, 5
    %vm1885 = vcmp.eq.s32.totalorder %v1874, 6
    %vm1886 = vcmp.eq.s32.totalorder %v1874, 7
    %vm1887 = vcmp.eq.s32.totalorder %v1874, 8
    %vm1888 = vcmp.eq.s32.totalorder %v1874, 9
    %vm1889 = vcmp.eq.s32.totalorder %v1874, 10
    %vm1890 = vcmp.eq.s32.totalorder %v1874, 11
    %vm1891 = vcmp.eq.s32.totalorder %v1874, 12
    %vm1892 = vcmp.eq.s32.totalorder %v1874, 13
    %vm1893 = vcmp.eq.s32.totalorder %v1874, 14
    %vm1894 = vcmp.eq.s32.totalorder %v1874, 15
    %v1895 = vsel %vm1879, 1, 0
    %v1896 = vsel %vm1880, 1, 0
    %v1897 = vsel %vm1881, 1, 0
    %v1898 = vsel %vm1882, 1, 0
    %v1899 = vsel %vm1883, 1, 0
    %v1900 = vsel %vm1884, 1, 0
    %v1901 = vsel %vm1885, 1, 0
    %v1902 = vsel %vm1886, 1, 0
    %v1903 = vsel %vm1887, 1, 0
    %v1904 = vsel %vm1888, 1, 0
    %v1905 = vsel %vm1889, 1, 0
    %v1906 = vsel %vm1890, 1, 0
    %v1907 = vsel %vm1891, 1, 0
    %v1908 = vsel %vm1892, 1, 0
    %v1909 = vsel %vm1893, 1, 0
    %v1910 = vsel %vm1894, 1, 0
    %vm1911 = vcmp.eq.s32.totalorder %v1895, 1
    %vm1912 = vcmp.eq.s32.totalorder %v1896, 1
    %vm1913 = vcmp.eq.s32.totalorder %v1897, 1
    %vm1914 = vcmp.eq.s32.totalorder %v1898, 1
    %vm1915 = vcmp.eq.s32.totalorder %v1899, 1
    %vm1916 = vcmp.eq.s32.totalorder %v1900, 1
    %vm1917 = vcmp.eq.s32.totalorder %v1901, 1
    %vm1918 = vcmp.eq.s32.totalorder %v1902, 1
    %vm1919 = vcmp.eq.s32.totalorder %v1903, 1
    %vm1920 = vcmp.eq.s32.totalorder %v1904, 1
    %vm1921 = vcmp.eq.s32.totalorder %v1905, 1
    %vm1922 = vcmp.eq.s32.totalorder %v1906, 1
    %vm1923 = vcmp.eq.s32.totalorder %v1907, 1
    %vm1924 = vcmp.eq.s32.totalorder %v1908, 1
    %vm1925 = vcmp.eq.s32.totalorder %v1909, 1
    %vm1926 = vcmp.eq.s32.totalorder %v1910, 1
    %v1927 = vsel %vm1911, %v796, 3e+38
    %v1928 = vsel %vm1911, %v797, 3e+38
    %v1929 = vsel %vm1912, %v798, 3e+38
    %v1930 = vsel %vm1912, %v799, 3e+38
    %v1931 = vsel %vm1913, %v800, 3e+38
    %v1932 = vsel %vm1913, %v801, 3e+38
    %v1933 = vsel %vm1914, %v802, 3e+38
    %v1934 = vsel %vm1914, %v803, 3e+38
    %v1935 = vsel %vm1915, %v804, 3e+38
    %v1936 = vsel %vm1915, %v805, 3e+38
    %v1937 = vsel %vm1916, %v806, 3e+38
    %v1938 = vsel %vm1916, %v807, 3e+38
    %v1939 = vsel %vm1917, %v808, 3e+38
    %v1940 = vsel %vm1917, %v809, 3e+38
    %v1941 = vsel %vm1918, %v810, 3e+38
    %v1942 = vsel %vm1918, %v811, 3e+38
    %v1943 = vsel %vm1919, %v812, 3e+38
    %v1944 = vsel %vm1919, %v813, 3e+38
    %v1945 = vsel %vm1920, %v814, 3e+38
    %v1946 = vsel %vm1920, %v815, 3e+38
    %v1947 = vsel %vm1921, %v816, 3e+38
    %v1948 = vsel %vm1921, %v817, 3e+38
    %v1949 = vsel %vm1922, %v818, 3e+38
    %v1950 = vsel %vm1922, %v819, 3e+38
    %v1951 = vsel %vm1923, %v820, 3e+38
    %v1952 = vsel %vm1923, %v821, 3e+38
    %v1953 = vsel %vm1924, %v822, 3e+38
    %v1954 = vsel %vm1924, %v823, 3e+38
    %v1955 = vsel %vm1925, %v824, 3e+38
    %v1956 = vsel %vm1925, %v825, 3e+38
    %v1957 = vsel %vm1926, %v826, 3e+38
    %v1958 = vsel %vm1926, %v827, 3e+38
    %v1959 = vmin.f32 %v1927, %v1931
    %v1960 = vmin.f32 %v1929, %v1933
    %v1961 = vmin.f32 %v1959, %v1935
    %v1962 = vmin.f32 %v1960, %v1937
    %v1963 = vmin.f32 %v1961, %v1939
    %v1964 = vmin.f32 %v1962, %v1941
    %v1965 = vmin.f32 %v1963, %v1943
    %v1966 = vmin.f32 %v1964, %v1945
    %v1967 = vmin.f32 %v1965, %v1947
    %v1968 = vmin.f32 %v1966, %v1949
    %v1969 = vmin.f32 %v1967, %v1951
    %v1970 = vmin.f32 %v1968, %v1953
    %v1971 = vmin.f32 %v1969, %v1955
    %v1972 = vmin.f32 %v1970, %v1957
    %v1973 = vmin.f32 %v1971, %v1972
    %v1974 = vmin.f32 %v1928, %v1932
    %v1975 = vmin.f32 %v1930, %v1934
    %v1976 = vmin.f32 %v1974, %v1936
    %v1977 = vmin.f32 %v1975, %v1938
    %v1978 = vmin.f32 %v1976, %v1940
    %v1979 = vmin.f32 %v1977, %v1942
    %v1980 = vmin.f32 %v1978, %v1944
    %v1981 = vmin.f32 %v1979, %v1946
    %v1982 = vmin.f32 %v1980, %v1948
    %v1983 = vmin.f32 %v1981, %v1950
    %v1984 = vmin.f32 %v1982, %v1952
    %v1985 = vmin.f32 %v1983, %v1954
    %v1986 = vmin.f32 %v1984, %v1956
    %v1987 = vmin.f32 %v1985, %v1958
    %v1988 = vmin.f32 %v1986, %v1987
    %v1989 = vmin.f32 %v1849, %v1973
    %v1990 = vmin.f32 %v1850, %v1988
    %v1991 = vsel %vm1877, 3e+38, %v1989
    %v1992 = vsel %vm1878, 3e+38, %v1990
    %v1993 = vmin.f32 %v1991, %v1992
    %v1994 = vrot.slane %v1993, 4
    %v1995 = vmin.f32 %v1993, %v1994
    %v1996 = vrot.slane %v1995, 2
    %v1997 = vmin.f32 %v1995, %v1996
    %v1998 = vrot.slane %v1997, 1
    %v1999 = vmin.f32 %v1997, %v1998
    %vm2000 = vcmp.eq.f32.partialorder %v1991, %v1999
    %vm2001 = vcmp.eq.f32.partialorder %v1992, %v1999
    %v2002 = vsel %vm2000, %v867, 16
    %v2003 = vsel %vm2001, %v868, 16
    %vm2004 = vcmp.lt.s32.totalorder %v2002, %v2003
    %v2005 = vsel %vm2004, %v2002, %v2003
    %v2006 = vrot.slane %v2005, 4
    %vm2007 = vcmp.lt.s32.totalorder %v2005, %v2006
    %v2008 = vsel %vm2007, %v2005, %v2006
    %v2009 = vrot.slane %v2008, 2
    %vm2010 = vcmp.lt.s32.totalorder %v2008, %v2009
    %v2011 = vsel %vm2010, %v2008, %v2009
    %v2012 = vrot.slane %v2011, 1
    %vm2013 = vcmp.lt.s32.totalorder %v2011, %v2012
    %v2014 = vsel %vm2013, %v2011, %v2012
    %vm2015 = vcmp.eq.s32.totalorder %v867, %v2014
    %vm2016 = vcmp.eq.s32.totalorder %v868, %v2014
    %vm2017 = vmor %vm1877, %vm2015
    %vm2018 = vmor %vm1878, %vm2016
    %vm2019 = vcmp.eq.s32.totalorder %v2014, 0
    %vm2020 = vcmp.eq.s32.totalorder %v2014, 1
    %vm2021 = vcmp.eq.s32.totalorder %v2014, 2
    %vm2022 = vcmp.eq.s32.totalorder %v2014, 3
    %vm2023 = vcmp.eq.s32.totalorder %v2014, 4
    %vm2024 = vcmp.eq.s32.totalorder %v2014, 5
    %vm2025 = vcmp.eq.s32.totalorder %v2014, 6
    %vm2026 = vcmp.eq.s32.totalorder %v2014, 7
    %vm2027 = vcmp.eq.s32.totalorder %v2014, 8
    %vm2028 = vcmp.eq.s32.totalorder %v2014, 9
    %vm2029 = vcmp.eq.s32.totalorder %v2014, 10
    %vm2030 = vcmp.eq.s32.totalorder %v2014, 11
    %vm2031 = vcmp.eq.s32.totalorder %v2014, 12
    %vm2032 = vcmp.eq.s32.totalorder %v2014, 13
    %vm2033 = vcmp.eq.s32.totalorder %v2014, 14
    %vm2034 = vcmp.eq.s32.totalorder %v2014, 15
    %v2035 = vsel %vm2019, 1, 0
    %v2036 = vsel %vm2020, 1, 0
    %v2037 = vsel %vm2021, 1, 0
    %v2038 = vsel %vm2022, 1, 0
    %v2039 = vsel %vm2023, 1, 0
    %v2040 = vsel %vm2024, 1, 0
    %v2041 = vsel %vm2025, 1, 0
    %v2042 = vsel %vm2026, 1, 0
    %v2043 = vsel %vm2027, 1, 0
    %v2044 = vsel %vm2028, 1, 0
    %v2045 = vsel %vm2029, 1, 0
    %v2046 = vsel %vm2030, 1, 0
    %v2047 = vsel %vm2031, 1, 0
    %v2048 = vsel %vm2032, 1, 0
    %v2049 = vsel %vm2033, 1, 0
    %v2050 = vsel %vm2034, 1, 0
    %vm2051 = vcmp.eq.s32.totalorder %v2035, 1
    %vm2052 = vcmp.eq.s32.totalorder %v2036, 1
    %vm2053 = vcmp.eq.s32.totalorder %v2037, 1
    %vm2054 = vcmp.eq.s32.totalorder %v2038, 1
    %vm2055 = vcmp.eq.s32.totalorder %v2039, 1
    %vm2056 = vcmp.eq.s32.totalorder %v2040, 1
    %vm2057 = vcmp.eq.s32.totalorder %v2041, 1
    %vm2058 = vcmp.eq.s32.totalorder %v2042, 1
    %vm2059 = vcmp.eq.s32.totalorder %v2043, 1
    %vm2060 = vcmp.eq.s32.totalorder %v2044, 1
    %vm2061 = vcmp.eq.s32.totalorder %v2045, 1
    %vm2062 = vcmp.eq.s32.totalorder %v2046, 1
    %vm2063 = vcmp.eq.s32.totalorder %v2047, 1
    %vm2064 = vcmp.eq.s32.totalorder %v2048, 1
    %vm2065 = vcmp.eq.s32.totalorder %v2049, 1
    %vm2066 = vcmp.eq.s32.totalorder %v2050, 1
    %v2067 = vsel %vm2051, %v796, 3e+38
    %v2068 = vsel %vm2051, %v797, 3e+38
    %v2069 = vsel %vm2052, %v798, 3e+38
    %v2070 = vsel %vm2052, %v799, 3e+38
    %v2071 = vsel %vm2053, %v800, 3e+38
    %v2072 = vsel %vm2053, %v801, 3e+38
    %v2073 = vsel %vm2054, %v802, 3e+38
    %v2074 = vsel %vm2054, %v803, 3e+38
    %v2075 = vsel %vm2055, %v804, 3e+38
    %v2076 = vsel %vm2055, %v805, 3e+38
    %v2077 = vsel %vm2056, %v806, 3e+38
    %v2078 = vsel %vm2056, %v807, 3e+38
    %v2079 = vsel %vm2057, %v808, 3e+38
    %v2080 = vsel %vm2057, %v809, 3e+38
    %v2081 = vsel %vm2058, %v810, 3e+38
    %v2082 = vsel %vm2058, %v811, 3e+38
    %v2083 = vsel %vm2059, %v812, 3e+38
    %v2084 = vsel %vm2059, %v813, 3e+38
    %v2085 = vsel %vm2060, %v814, 3e+38
    %v2086 = vsel %vm2060, %v815, 3e+38
    %v2087 = vsel %vm2061, %v816, 3e+38
    %v2088 = vsel %vm2061, %v817, 3e+38
    %v2089 = vsel %vm2062, %v818, 3e+38
    %v2090 = vsel %vm2062, %v819, 3e+38
    %v2091 = vsel %vm2063, %v820, 3e+38
    %v2092 = vsel %vm2063, %v821, 3e+38
    %v2093 = vsel %vm2064, %v822, 3e+38
    %v2094 = vsel %vm2064, %v823, 3e+38
    %v2095 = vsel %vm2065, %v824, 3e+38
    %v2096 = vsel %vm2065, %v825, 3e+38
    %v2097 = vsel %vm2066, %v826, 3e+38
    %v2098 = vsel %vm2066, %v827, 3e+38
    %v2099 = vmin.f32 %v2067, %v2071
    %v2100 = vmin.f32 %v2069, %v2073
    %v2101 = vmin.f32 %v2099, %v2075
    %v2102 = vmin.f32 %v2100, %v2077
    %v2103 = vmin.f32 %v2101, %v2079
    %v2104 = vmin.f32 %v2102, %v2081
    %v2105 = vmin.f32 %v2103, %v2083
    %v2106 = vmin.f32 %v2104, %v2085
    %v2107 = vmin.f32 %v2105, %v2087
    %v2108 = vmin.f32 %v2106, %v2089
    %v2109 = vmin.f32 %v2107, %v2091
    %v2110 = vmin.f32 %v2108, %v2093
    %v2111 = vmin.f32 %v2109, %v2095
    %v2112 = vmin.f32 %v2110, %v2097
    %v2113 = vmin.f32 %v2111, %v2112
    %v2114 = vmin.f32 %v2068, %v2072
    %v2115 = vmin.f32 %v2070, %v2074
    %v2116 = vmin.f32 %v2114, %v2076
    %v2117 = vmin.f32 %v2115, %v2078
    %v2118 = vmin.f32 %v2116, %v2080
    %v2119 = vmin.f32 %v2117, %v2082
    %v2120 = vmin.f32 %v2118, %v2084
    %v2121 = vmin.f32 %v2119, %v2086
    %v2122 = vmin.f32 %v2120, %v2088
    %v2123 = vmin.f32 %v2121, %v2090
    %v2124 = vmin.f32 %v2122, %v2092
    %v2125 = vmin.f32 %v2123, %v2094
    %v2126 = vmin.f32 %v2124, %v2096
    %v2127 = vmin.f32 %v2125, %v2098
    %v2128 = vmin.f32 %v2126, %v2127
    %v2129 = vmin.f32 %v1989, %v2113
    %v2130 = vmin.f32 %v1990, %v2128
    %v2131 = vsel %vm2017, 3e+38, %v2129
    %v2132 = vsel %vm2018, 3e+38, %v2130
    %v2133 = vmin.f32 %v2131, %v2132
    %v2134 = vrot.slane %v2133, 4
    %v2135 = vmin.f32 %v2133, %v2134
    %v2136 = vrot.slane %v2135, 2
    %v2137 = vmin.f32 %v2135, %v2136
    %v2138 = vrot.slane %v2137, 1
    %v2139 = vmin.f32 %v2137, %v2138
    %vm2140 = vcmp.eq.f32.partialorder %v2131, %v2139
    %vm2141 = vcmp.eq.f32.partialorder %v2132, %v2139
    %v2142 = vsel %vm2140, %v867, 16
    %v2143 = vsel %vm2141, %v868, 16
    %vm2144 = vcmp.lt.s32.totalorder %v2142, %v2143
    %v2145 = vsel %vm2144, %v2142, %v2143
    %v2146 = vrot.slane %v2145, 4
    %vm2147 = vcmp.lt.s32.totalorder %v2145, %v2146
    %v2148 = vsel %vm2147, %v2145, %v2146
    %v2149 = vrot.slane %v2148, 2
    %vm2150 = vcmp.lt.s32.totalorder %v2148, %v2149
    %v2151 = vsel %vm2150, %v2148, %v2149
    %v2152 = vrot.slane %v2151, 1
    %vm2153 = vcmp.lt.s32.totalorder %v2151, %v2152
    %v2154 = vsel %vm2153, %v2151, %v2152
    %vm2155 = vcmp.eq.s32.totalorder %v867, %v2154
    %vm2156 = vcmp.eq.s32.totalorder %v868, %v2154
    %vm2157 = vmor %vm2017, %vm2155
    %vm2158 = vmor %vm2018, %vm2156
    %vm2159 = vcmp.eq.s32.totalorder %v2154, 0
    %vm2160 = vcmp.eq.s32.totalorder %v2154, 1
    %vm2161 = vcmp.eq.s32.totalorder %v2154, 2
    %vm2162 = vcmp.eq.s32.totalorder %v2154, 3
    %vm2163 = vcmp.eq.s32.totalorder %v2154, 4
    %vm2164 = vcmp.eq.s32.totalorder %v2154, 5
    %vm2165 = vcmp.eq.s32.totalorder %v2154, 6
    %vm2166 = vcmp.eq.s32.totalorder %v2154, 7
    %vm2167 = vcmp.eq.s32.totalorder %v2154, 8
    %vm2168 = vcmp.eq.s32.totalorder %v2154, 9
    %vm2169 = vcmp.eq.s32.totalorder %v2154, 10
    %vm2170 = vcmp.eq.s32.totalorder %v2154, 11
    %vm2171 = vcmp.eq.s32.totalorder %v2154, 12
    %vm2172 = vcmp.eq.s32.totalorder %v2154, 13
    %vm2173 = vcmp.eq.s32.totalorder %v2154, 14
    %vm2174 = vcmp.eq.s32.totalorder %v2154, 15
    %v2175 = vsel %vm2159, 1, 0
    %v2176 = vsel %vm2160, 1, 0
    %v2177 = vsel %vm2161, 1, 0
    %v2178 = vsel %vm2162, 1, 0
    %v2179 = vsel %vm2163, 1, 0
    %v2180 = vsel %vm2164, 1, 0
    %v2181 = vsel %vm2165, 1, 0
    %v2182 = vsel %vm2166, 1, 0
    %v2183 = vsel %vm2167, 1, 0
    %v2184 = vsel %vm2168, 1, 0
    %v2185 = vsel %vm2169, 1, 0
    %v2186 = vsel %vm2170, 1, 0
    %v2187 = vsel %vm2171, 1, 0
    %v2188 = vsel %vm2172, 1, 0
    %v2189 = vsel %vm2173, 1, 0
    %v2190 = vsel %vm2174, 1, 0
    %vm2191 = vcmp.eq.s32.totalorder %v2175, 1
    %vm2192 = vcmp.eq.s32.totalorder %v2176, 1
    %vm2193 = vcmp.eq.s32.totalorder %v2177, 1
    %vm2194 = vcmp.eq.s32.totalorder %v2178, 1
    %vm2195 = vcmp.eq.s32.totalorder %v2179, 1
    %vm2196 = vcmp.eq.s32.totalorder %v2180, 1
    %vm2197 = vcmp.eq.s32.totalorder %v2181, 1
    %vm2198 = vcmp.eq.s32.totalorder %v2182, 1
    %vm2199 = vcmp.eq.s32.totalorder %v2183, 1
    %vm2200 = vcmp.eq.s32.totalorder %v2184, 1
    %vm2201 = vcmp.eq.s32.totalorder %v2185, 1
    %vm2202 = vcmp.eq.s32.totalorder %v2186, 1
    %vm2203 = vcmp.eq.s32.totalorder %v2187, 1
    %vm2204 = vcmp.eq.s32.totalorder %v2188, 1
    %vm2205 = vcmp.eq.s32.totalorder %v2189, 1
    %vm2206 = vcmp.eq.s32.totalorder %v2190, 1
    %v2207 = vsel %vm2191, %v796, 3e+38
    %v2208 = vsel %vm2191, %v797, 3e+38
    %v2209 = vsel %vm2192, %v798, 3e+38
    %v2210 = vsel %vm2192, %v799, 3e+38
    %v2211 = vsel %vm2193, %v800, 3e+38
    %v2212 = vsel %vm2193, %v801, 3e+38
    %v2213 = vsel %vm2194, %v802, 3e+38
    %v2214 = vsel %vm2194, %v803, 3e+38
    %v2215 = vsel %vm2195, %v804, 3e+38
    %v2216 = vsel %vm2195, %v805, 3e+38
    %v2217 = vsel %vm2196, %v806, 3e+38
    %v2218 = vsel %vm2196, %v807, 3e+38
    %v2219 = vsel %vm2197, %v808, 3e+38
    %v2220 = vsel %vm2197, %v809, 3e+38
    %v2221 = vsel %vm2198, %v810, 3e+38
    %v2222 = vsel %vm2198, %v811, 3e+38
    %v2223 = vsel %vm2199, %v812, 3e+38
    %v2224 = vsel %vm2199, %v813, 3e+38
    %v2225 = vsel %vm2200, %v814, 3e+38
    %v2226 = vsel %vm2200, %v815, 3e+38
    %v2227 = vsel %vm2201, %v816, 3e+38
    %v2228 = vsel %vm2201, %v817, 3e+38
    %v2229 = vsel %vm2202, %v818, 3e+38
    %v2230 = vsel %vm2202, %v819, 3e+38
    %v2231 = vsel %vm2203, %v820, 3e+38
    %v2232 = vsel %vm2203, %v821, 3e+38
    %v2233 = vsel %vm2204, %v822, 3e+38
    %v2234 = vsel %vm2204, %v823, 3e+38
    %v2235 = vsel %vm2205, %v824, 3e+38
    %v2236 = vsel %vm2205, %v825, 3e+38
    %v2237 = vsel %vm2206, %v826, 3e+38
    %v2238 = vsel %vm2206, %v827, 3e+38
    %v2239 = vmin.f32 %v2207, %v2211
    %v2240 = vmin.f32 %v2209, %v2213
    %v2241 = vmin.f32 %v2239, %v2215
    %v2242 = vmin.f32 %v2240, %v2217
    %v2243 = vmin.f32 %v2241, %v2219
    %v2244 = vmin.f32 %v2242, %v2221
    %v2245 = vmin.f32 %v2243, %v2223
    %v2246 = vmin.f32 %v2244, %v2225
    %v2247 = vmin.f32 %v2245, %v2227
    %v2248 = vmin.f32 %v2246, %v2229
    %v2249 = vmin.f32 %v2247, %v2231
    %v2250 = vmin.f32 %v2248, %v2233
    %v2251 = vmin.f32 %v2249, %v2235
    %v2252 = vmin.f32 %v2250, %v2237
    %v2253 = vmin.f32 %v2251, %v2252
    %v2254 = vmin.f32 %v2208, %v2212
    %v2255 = vmin.f32 %v2210, %v2214
    %v2256 = vmin.f32 %v2254, %v2216
    %v2257 = vmin.f32 %v2255, %v2218
    %v2258 = vmin.f32 %v2256, %v2220
    %v2259 = vmin.f32 %v2257, %v2222
    %v2260 = vmin.f32 %v2258, %v2224
    %v2261 = vmin.f32 %v2259, %v2226
    %v2262 = vmin.f32 %v2260, %v2228
    %v2263 = vmin.f32 %v2261, %v2230
    %v2264 = vmin.f32 %v2262, %v2232
    %v2265 = vmin.f32 %v2263, %v2234
    %v2266 = vmin.f32 %v2264, %v2236
    %v2267 = vmin.f32 %v2265, %v2238
    %v2268 = vmin.f32 %v2266, %v2267
    %v2269 = vmin.f32 %v2129, %v2253
    %v2270 = vmin.f32 %v2130, %v2268
    %v2271 = vsel %vm2157, 3e+38, %v2269
    %v2272 = vsel %vm2158, 3e+38, %v2270
    %v2273 = vmin.f32 %v2271, %v2272
    %v2274 = vrot.slane %v2273, 4
    %v2275 = vmin.f32 %v2273, %v2274
    %v2276 = vrot.slane %v2275, 2
    %v2277 = vmin.f32 %v2275, %v2276
    %v2278 = vrot.slane %v2277, 1
    %v2279 = vmin.f32 %v2277, %v2278
    %vm2280 = vcmp.eq.f32.partialorder %v2271, %v2279
    %vm2281 = vcmp.eq.f32.partialorder %v2272, %v2279
    %v2282 = vsel %vm2280, %v867, 16
    %v2283 = vsel %vm2281, %v868, 16
    %vm2284 = vcmp.lt.s32.totalorder %v2282, %v2283
    %v2285 = vsel %vm2284, %v2282, %v2283
    %v2286 = vrot.slane %v2285, 4
    %vm2287 = vcmp.lt.s32.totalorder %v2285, %v2286
    %v2288 = vsel %vm2287, %v2285, %v2286
    %v2289 = vrot.slane %v2288, 2
    %vm2290 = vcmp.lt.s32.totalorder %v2288, %v2289
    %v2291 = vsel %vm2290, %v2288, %v2289
    %v2292 = vrot.slane %v2291, 1
    %vm2293 = vcmp.lt.s32.totalorder %v2291, %v2292
    %v2294 = vsel %vm2293, %v2291, %v2292
    %vm2295 = vcmp.eq.s32.totalorder %v867, %v2294
    %vm2296 = vcmp.eq.s32.totalorder %v868, %v2294
    %vm2297 = vmor %vm2157, %vm2295
    %vm2298 = vmor %vm2158, %vm2296
    %vm2299 = vcmp.eq.s32.totalorder %v2294, 0
    %vm2300 = vcmp.eq.s32.totalorder %v2294, 1
    %vm2301 = vcmp.eq.s32.totalorder %v2294, 2
    %vm2302 = vcmp.eq.s32.totalorder %v2294, 3
    %vm2303 = vcmp.eq.s32.totalorder %v2294, 4
    %vm2304 = vcmp.eq.s32.totalorder %v2294, 5
    %vm2305 = vcmp.eq.s32.totalorder %v2294, 6
    %vm2306 = vcmp.eq.s32.totalorder %v2294, 7
    %vm2307 = vcmp.eq.s32.totalorder %v2294, 8
    %vm2308 = vcmp.eq.s32.totalorder %v2294, 9
    %vm2309 = vcmp.eq.s32.totalorder %v2294, 10
    %vm2310 = vcmp.eq.s32.totalorder %v2294, 11
    %vm2311 = vcmp.eq.s32.totalorder %v2294, 12
    %vm2312 = vcmp.eq.s32.totalorder %v2294, 13
    %vm2313 = vcmp.eq.s32.totalorder %v2294, 14
    %vm2314 = vcmp.eq.s32.totalorder %v2294, 15
    %v2315 = vsel %vm2299, 1, 0
    %v2316 = vsel %vm2300, 1, 0
    %v2317 = vsel %vm2301, 1, 0
    %v2318 = vsel %vm2302, 1, 0
    %v2319 = vsel %vm2303, 1, 0
    %v2320 = vsel %vm2304, 1, 0
    %v2321 = vsel %vm2305, 1, 0
    %v2322 = vsel %vm2306, 1, 0
    %v2323 = vsel %vm2307, 1, 0
    %v2324 = vsel %vm2308, 1, 0
    %v2325 = vsel %vm2309, 1, 0
    %v2326 = vsel %vm2310, 1, 0
    %v2327 = vsel %vm2311, 1, 0
    %v2328 = vsel %vm2312, 1, 0
    %v2329 = vsel %vm2313, 1, 0
    %v2330 = vsel %vm2314, 1, 0
    %vm2331 = vcmp.eq.s32.totalorder %v2315, 1
    %vm2332 = vcmp.eq.s32.totalorder %v2316, 1
    %vm2333 = vcmp.eq.s32.totalorder %v2317, 1
    %vm2334 = vcmp.eq.s32.totalorder %v2318, 1
    %vm2335 = vcmp.eq.s32.totalorder %v2319, 1
    %vm2336 = vcmp.eq.s32.totalorder %v2320, 1
    %vm2337 = vcmp.eq.s32.totalorder %v2321, 1
    %vm2338 = vcmp.eq.s32.totalorder %v2322, 1
    %vm2339 = vcmp.eq.s32.totalorder %v2323, 1
    %vm2340 = vcmp.eq.s32.totalorder %v2324, 1
    %vm2341 = vcmp.eq.s32.totalorder %v2325, 1
    %vm2342 = vcmp.eq.s32.totalorder %v2326, 1
    %vm2343 = vcmp.eq.s32.totalorder %v2327, 1
    %vm2344 = vcmp.eq.s32.totalorder %v2328, 1
    %vm2345 = vcmp.eq.s32.totalorder %v2329, 1
    %vm2346 = vcmp.eq.s32.totalorder %v2330, 1
    %v2347 = vsel %vm2331, %v796, 3e+38
    %v2348 = vsel %vm2331, %v797, 3e+38
    %v2349 = vsel %vm2332, %v798, 3e+38
    %v2350 = vsel %vm2332, %v799, 3e+38
    %v2351 = vsel %vm2333, %v800, 3e+38
    %v2352 = vsel %vm2333, %v801, 3e+38
    %v2353 = vsel %vm2334, %v802, 3e+38
    %v2354 = vsel %vm2334, %v803, 3e+38
    %v2355 = vsel %vm2335, %v804, 3e+38
    %v2356 = vsel %vm2335, %v805, 3e+38
    %v2357 = vsel %vm2336, %v806, 3e+38
    %v2358 = vsel %vm2336, %v807, 3e+38
    %v2359 = vsel %vm2337, %v808, 3e+38
    %v2360 = vsel %vm2337, %v809, 3e+38
    %v2361 = vsel %vm2338, %v810, 3e+38
    %v2362 = vsel %vm2338, %v811, 3e+38
    %v2363 = vsel %vm2339, %v812, 3e+38
    %v2364 = vsel %vm2339, %v813, 3e+38
    %v2365 = vsel %vm2340, %v814, 3e+38
    %v2366 = vsel %vm2340, %v815, 3e+38
    %v2367 = vsel %vm2341, %v816, 3e+38
    %v2368 = vsel %vm2341, %v817, 3e+38
    %v2369 = vsel %vm2342, %v818, 3e+38
    %v2370 = vsel %vm2342, %v819, 3e+38
    %v2371 = vsel %vm2343, %v820, 3e+38
    %v2372 = vsel %vm2343, %v821, 3e+38
    %v2373 = vsel %vm2344, %v822, 3e+38
    %v2374 = vsel %vm2344, %v823, 3e+38
    %v2375 = vsel %vm2345, %v824, 3e+38
    %v2376 = vsel %vm2345, %v825, 3e+38
    %v2377 = vsel %vm2346, %v826, 3e+38
    %v2378 = vsel %vm2346, %v827, 3e+38
    %v2379 = vmin.f32 %v2347, %v2351
    %v2380 = vmin.f32 %v2349, %v2353
    %v2381 = vmin.f32 %v2379, %v2355
    %v2382 = vmin.f32 %v2380, %v2357
    %v2383 = vmin.f32 %v2381, %v2359
    %v2384 = vmin.f32 %v2382, %v2361
    %v2385 = vmin.f32 %v2383, %v2363
    %v2386 = vmin.f32 %v2384, %v2365
    %v2387 = vmin.f32 %v2385, %v2367
    %v2388 = vmin.f32 %v2386, %v2369
    %v2389 = vmin.f32 %v2387, %v2371
    %v2390 = vmin.f32 %v2388, %v2373
    %v2391 = vmin.f32 %v2389, %v2375
    %v2392 = vmin.f32 %v2390, %v2377
    %v2393 = vmin.f32 %v2391, %v2392
    %v2394 = vmin.f32 %v2348, %v2352
    %v2395 = vmin.f32 %v2350, %v2354
    %v2396 = vmin.f32 %v2394, %v2356
    %v2397 = vmin.f32 %v2395, %v2358
    %v2398 = vmin.f32 %v2396, %v2360
    %v2399 = vmin.f32 %v2397, %v2362
    %v2400 = vmin.f32 %v2398, %v2364
    %v2401 = vmin.f32 %v2399, %v2366
    %v2402 = vmin.f32 %v2400, %v2368
    %v2403 = vmin.f32 %v2401, %v2370
    %v2404 = vmin.f32 %v2402, %v2372
    %v2405 = vmin.f32 %v2403, %v2374
    %v2406 = vmin.f32 %v2404, %v2376
    %v2407 = vmin.f32 %v2405, %v2378
    %v2408 = vmin.f32 %v2406, %v2407
    %v2409 = vmin.f32 %v2269, %v2393
    %v2410 = vmin.f32 %v2270, %v2408
    %v2411 = vsel %vm2297, 3e+38, %v2409
    %v2412 = vsel %vm2298, 3e+38, %v2410
    %v2413 = vmin.f32 %v2411, %v2412
    %v2414 = vrot.slane %v2413, 4
    %v2415 = vmin.f32 %v2413, %v2414
    %v2416 = vrot.slane %v2415, 2
    %v2417 = vmin.f32 %v2415, %v2416
    %v2418 = vrot.slane %v2417, 1
    %v2419 = vmin.f32 %v2417, %v2418
    %vm2420 = vcmp.eq.f32.partialorder %v2411, %v2419
    %vm2421 = vcmp.eq.f32.partialorder %v2412, %v2419
    %v2422 = vsel %vm2420, %v867, 16
    %v2423 = vsel %vm2421, %v868, 16
    %vm2424 = vcmp.lt.s32.totalorder %v2422, %v2423
    %v2425 = vsel %vm2424, %v2422, %v2423
    %v2426 = vrot.slane %v2425, 4
    %vm2427 = vcmp.lt.s32.totalorder %v2425, %v2426
    %v2428 = vsel %vm2427, %v2425, %v2426
    %v2429 = vrot.slane %v2428, 2
    %vm2430 = vcmp.lt.s32.totalorder %v2428, %v2429
    %v2431 = vsel %vm2430, %v2428, %v2429
    %v2432 = vrot.slane %v2431, 1
    %vm2433 = vcmp.lt.s32.totalorder %v2431, %v2432
    %v2434 = vsel %vm2433, %v2431, %v2432
    %vm2435 = vcmp.eq.s32.totalorder %v867, %v2434
    %vm2436 = vcmp.eq.s32.totalorder %v868, %v2434
    %vm2437 = vmor %vm2297, %vm2435
    %vm2438 = vmor %vm2298, %vm2436
    %vm2439 = vcmp.eq.s32.totalorder %v2434, 0
    %vm2440 = vcmp.eq.s32.totalorder %v2434, 1
    %vm2441 = vcmp.eq.s32.totalorder %v2434, 2
    %vm2442 = vcmp.eq.s32.totalorder %v2434, 3
    %vm2443 = vcmp.eq.s32.totalorder %v2434, 4
    %vm2444 = vcmp.eq.s32.totalorder %v2434, 5
    %vm2445 = vcmp.eq.s32.totalorder %v2434, 6
    %vm2446 = vcmp.eq.s32.totalorder %v2434, 7
    %vm2447 = vcmp.eq.s32.totalorder %v2434, 8
    %vm2448 = vcmp.eq.s32.totalorder %v2434, 9
    %vm2449 = vcmp.eq.s32.totalorder %v2434, 10
    %vm2450 = vcmp.eq.s32.totalorder %v2434, 11
    %vm2451 = vcmp.eq.s32.totalorder %v2434, 12
    %vm2452 = vcmp.eq.s32.totalorder %v2434, 13
    %vm2453 = vcmp.eq.s32.totalorder %v2434, 14
    %vm2454 = vcmp.eq.s32.totalorder %v2434, 15
    %v2455 = vsel %vm2439, 1, 0
    %v2456 = vsel %vm2440, 1, 0
    %v2457 = vsel %vm2441, 1, 0
    %v2458 = vsel %vm2442, 1, 0
    %v2459 = vsel %vm2443, 1, 0
    %v2460 = vsel %vm2444, 1, 0
    %v2461 = vsel %vm2445, 1, 0
    %v2462 = vsel %vm2446, 1, 0
    %v2463 = vsel %vm2447, 1, 0
    %v2464 = vsel %vm2448, 1, 0
    %v2465 = vsel %vm2449, 1, 0
    %v2466 = vsel %vm2450, 1, 0
    %v2467 = vsel %vm2451, 1, 0
    %v2468 = vsel %vm2452, 1, 0
    %v2469 = vsel %vm2453, 1, 0
    %v2470 = vsel %vm2454, 1, 0
    %vm2471 = vcmp.eq.s32.totalorder %v2455, 1
    %vm2472 = vcmp.eq.s32.totalorder %v2456, 1
    %vm2473 = vcmp.eq.s32.totalorder %v2457, 1
    %vm2474 = vcmp.eq.s32.totalorder %v2458, 1
    %vm2475 = vcmp.eq.s32.totalorder %v2459, 1
    %vm2476 = vcmp.eq.s32.totalorder %v2460, 1
    %vm2477 = vcmp.eq.s32.totalorder %v2461, 1
    %vm2478 = vcmp.eq.s32.totalorder %v2462, 1
    %vm2479 = vcmp.eq.s32.totalorder %v2463, 1
    %vm2480 = vcmp.eq.s32.totalorder %v2464, 1
    %vm2481 = vcmp.eq.s32.totalorder %v2465, 1
    %vm2482 = vcmp.eq.s32.totalorder %v2466, 1
    %vm2483 = vcmp.eq.s32.totalorder %v2467, 1
    %vm2484 = vcmp.eq.s32.totalorder %v2468, 1
    %vm2485 = vcmp.eq.s32.totalorder %v2469, 1
    %vm2486 = vcmp.eq.s32.totalorder %v2470, 1
    %v2487 = vsel %vm2471, %v796, 3e+38
    %v2488 = vsel %vm2471, %v797, 3e+38
    %v2489 = vsel %vm2472, %v798, 3e+38
    %v2490 = vsel %vm2472, %v799, 3e+38
    %v2491 = vsel %vm2473, %v800, 3e+38
    %v2492 = vsel %vm2473, %v801, 3e+38
    %v2493 = vsel %vm2474, %v802, 3e+38
    %v2494 = vsel %vm2474, %v803, 3e+38
    %v2495 = vsel %vm2475, %v804, 3e+38
    %v2496 = vsel %vm2475, %v805, 3e+38
    %v2497 = vsel %vm2476, %v806, 3e+38
    %v2498 = vsel %vm2476, %v807, 3e+38
    %v2499 = vsel %vm2477, %v808, 3e+38
    %v2500 = vsel %vm2477, %v809, 3e+38
    %v2501 = vsel %vm2478, %v810, 3e+38
    %v2502 = vsel %vm2478, %v811, 3e+38
    %v2503 = vsel %vm2479, %v812, 3e+38
    %v2504 = vsel %vm2479, %v813, 3e+38
    %v2505 = vsel %vm2480, %v814, 3e+38
    %v2506 = vsel %vm2480, %v815, 3e+38
    %v2507 = vsel %vm2481, %v816, 3e+38
    %v2508 = vsel %vm2481, %v817, 3e+38
    %v2509 = vsel %vm2482, %v818, 3e+38
    %v2510 = vsel %vm2482, %v819, 3e+38
    %v2511 = vsel %vm2483, %v820, 3e+38
    %v2512 = vsel %vm2483, %v821, 3e+38
    %v2513 = vsel %vm2484, %v822, 3e+38
    %v2514 = vsel %vm2484, %v823, 3e+38
    %v2515 = vsel %vm2485, %v824, 3e+38
    %v2516 = vsel %vm2485, %v825, 3e+38
    %v2517 = vsel %vm2486, %v826, 3e+38
    %v2518 = vsel %vm2486, %v827, 3e+38
    %v2519 = vmin.f32 %v2487, %v2491
    %v2520 = vmin.f32 %v2489, %v2493
    %v2521 = vmin.f32 %v2519, %v2495
    %v2522 = vmin.f32 %v2520, %v2497
    %v2523 = vmin.f32 %v2521, %v2499
    %v2524 = vmin.f32 %v2522, %v2501
    %v2525 = vmin.f32 %v2523, %v2503
    %v2526 = vmin.f32 %v2524, %v2505
    %v2527 = vmin.f32 %v2525, %v2507
    %v2528 = vmin.f32 %v2526, %v2509
    %v2529 = vmin.f32 %v2527, %v2511
    %v2530 = vmin.f32 %v2528, %v2513
    %v2531 = vmin.f32 %v2529, %v2515
    %v2532 = vmin.f32 %v2530, %v2517
    %v2533 = vmin.f32 %v2531, %v2532
    %v2534 = vmin.f32 %v2488, %v2492
    %v2535 = vmin.f32 %v2490, %v2494
    %v2536 = vmin.f32 %v2534, %v2496
    %v2537 = vmin.f32 %v2535, %v2498
    %v2538 = vmin.f32 %v2536, %v2500
    %v2539 = vmin.f32 %v2537, %v2502
    %v2540 = vmin.f32 %v2538, %v2504
    %v2541 = vmin.f32 %v2539, %v2506
    %v2542 = vmin.f32 %v2540, %v2508
    %v2543 = vmin.f32 %v2541, %v2510
    %v2544 = vmin.f32 %v2542, %v2512
    %v2545 = vmin.f32 %v2543, %v2514
    %v2546 = vmin.f32 %v2544, %v2516
    %v2547 = vmin.f32 %v2545, %v2518
    %v2548 = vmin.f32 %v2546, %v2547
    %v2549 = vmin.f32 %v2409, %v2533
    %v2550 = vmin.f32 %v2410, %v2548
    %v2551 = vsel %vm2437, 3e+38, %v2549
    %v2552 = vsel %vm2438, 3e+38, %v2550
    %v2553 = vmin.f32 %v2551, %v2552
    %v2554 = vrot.slane %v2553, 4
    %v2555 = vmin.f32 %v2553, %v2554
    %v2556 = vrot.slane %v2555, 2
    %v2557 = vmin.f32 %v2555, %v2556
    %v2558 = vrot.slane %v2557, 1
    %v2559 = vmin.f32 %v2557, %v2558
    %vm2560 = vcmp.eq.f32.partialorder %v2551, %v2559
    %vm2561 = vcmp.eq.f32.partialorder %v2552, %v2559
    %v2562 = vsel %vm2560, %v867, 16
    %v2563 = vsel %vm2561, %v868, 16
    %vm2564 = vcmp.lt.s32.totalorder %v2562, %v2563
    %v2565 = vsel %vm2564, %v2562, %v2563
    %v2566 = vrot.slane %v2565, 4
    %vm2567 = vcmp.lt.s32.totalorder %v2565, %v2566
    %v2568 = vsel %vm2567, %v2565, %v2566
    %v2569 = vrot.slane %v2568, 2
    %vm2570 = vcmp.lt.s32.totalorder %v2568, %v2569
    %v2571 = vsel %vm2570, %v2568, %v2569
    %v2572 = vrot.slane %v2571, 1
    %vm2573 = vcmp.lt.s32.totalorder %v2571, %v2572
    %v2574 = vsel %vm2573, %v2571, %v2572
    %vm2575 = vcmp.eq.s32.totalorder %v867, %v2574
    %vm2576 = vcmp.eq.s32.totalorder %v868, %v2574
    %vm2577 = vmor %vm2437, %vm2575
    %vm2578 = vmor %vm2438, %vm2576
    %vm2579 = vcmp.eq.s32.totalorder %v2574, 0
    %vm2580 = vcmp.eq.s32.totalorder %v2574, 1
    %vm2581 = vcmp.eq.s32.totalorder %v2574, 2
    %vm2582 = vcmp.eq.s32.totalorder %v2574, 3
    %vm2583 = vcmp.eq.s32.totalorder %v2574, 4
    %vm2584 = vcmp.eq.s32.totalorder %v2574, 5
    %vm2585 = vcmp.eq.s32.totalorder %v2574, 6
    %vm2586 = vcmp.eq.s32.totalorder %v2574, 7
    %vm2587 = vcmp.eq.s32.totalorder %v2574, 8
    %vm2588 = vcmp.eq.s32.totalorder %v2574, 9
    %vm2589 = vcmp.eq.s32.totalorder %v2574, 10
    %vm2590 = vcmp.eq.s32.totalorder %v2574, 11
    %vm2591 = vcmp.eq.s32.totalorder %v2574, 12
    %vm2592 = vcmp.eq.s32.totalorder %v2574, 13
    %vm2593 = vcmp.eq.s32.totalorder %v2574, 14
    %vm2594 = vcmp.eq.s32.totalorder %v2574, 15
    %v2595 = vsel %vm2579, 1, 0
    %v2596 = vsel %vm2580, 1, 0
    %v2597 = vsel %vm2581, 1, 0
    %v2598 = vsel %vm2582, 1, 0
    %v2599 = vsel %vm2583, 1, 0
    %v2600 = vsel %vm2584, 1, 0
    %v2601 = vsel %vm2585, 1, 0
    %v2602 = vsel %vm2586, 1, 0
    %v2603 = vsel %vm2587, 1, 0
    %v2604 = vsel %vm2588, 1, 0
    %v2605 = vsel %vm2589, 1, 0
    %v2606 = vsel %vm2590, 1, 0
    %v2607 = vsel %vm2591, 1, 0
    %v2608 = vsel %vm2592, 1, 0
    %v2609 = vsel %vm2593, 1, 0
    %v2610 = vsel %vm2594, 1, 0
    %vm2611 = vcmp.eq.s32.totalorder %v2595, 1
    %vm2612 = vcmp.eq.s32.totalorder %v2596, 1
    %vm2613 = vcmp.eq.s32.totalorder %v2597, 1
    %vm2614 = vcmp.eq.s32.totalorder %v2598, 1
    %vm2615 = vcmp.eq.s32.totalorder %v2599, 1
    %vm2616 = vcmp.eq.s32.totalorder %v2600, 1
    %vm2617 = vcmp.eq.s32.totalorder %v2601, 1
    %vm2618 = vcmp.eq.s32.totalorder %v2602, 1
    %vm2619 = vcmp.eq.s32.totalorder %v2603, 1
    %vm2620 = vcmp.eq.s32.totalorder %v2604, 1
    %vm2621 = vcmp.eq.s32.totalorder %v2605, 1
    %vm2622 = vcmp.eq.s32.totalorder %v2606, 1
    %vm2623 = vcmp.eq.s32.totalorder %v2607, 1
    %vm2624 = vcmp.eq.s32.totalorder %v2608, 1
    %vm2625 = vcmp.eq.s32.totalorder %v2609, 1
    %vm2626 = vcmp.eq.s32.totalorder %v2610, 1
    %v2627 = vsel %vm2611, %v796, 3e+38
    %v2628 = vsel %vm2611, %v797, 3e+38
    %v2629 = vsel %vm2612, %v798, 3e+38
    %v2630 = vsel %vm2612, %v799, 3e+38
    %v2631 = vsel %vm2613, %v800, 3e+38
    %v2632 = vsel %vm2613, %v801, 3e+38
    %v2633 = vsel %vm2614, %v802, 3e+38
    %v2634 = vsel %vm2614, %v803, 3e+38
    %v2635 = vsel %vm2615, %v804, 3e+38
    %v2636 = vsel %vm2615, %v805, 3e+38
    %v2637 = vsel %vm2616, %v806, 3e+38
    %v2638 = vsel %vm2616, %v807, 3e+38
    %v2639 = vsel %vm2617, %v808, 3e+38
    %v2640 = vsel %vm2617, %v809, 3e+38
    %v2641 = vsel %vm2618, %v810, 3e+38
    %v2642 = vsel %vm2618, %v811, 3e+38
    %v2643 = vsel %vm2619, %v812, 3e+38
    %v2644 = vsel %vm2619, %v813, 3e+38
    %v2645 = vsel %vm2620, %v814, 3e+38
    %v2646 = vsel %vm2620, %v815, 3e+38
    %v2647 = vsel %vm2621, %v816, 3e+38
    %v2648 = vsel %vm2621, %v817, 3e+38
    %v2649 = vsel %vm2622, %v818, 3e+38
    %v2650 = vsel %vm2622, %v819, 3e+38
    %v2651 = vsel %vm2623, %v820, 3e+38
    %v2652 = vsel %vm2623, %v821, 3e+38
    %v2653 = vsel %vm2624, %v822, 3e+38
    %v2654 = vsel %vm2624, %v823, 3e+38
    %v2655 = vsel %vm2625, %v824, 3e+38
    %v2656 = vsel %vm2625, %v825, 3e+38
    %v2657 = vsel %vm2626, %v826, 3e+38
    %v2658 = vsel %vm2626, %v827, 3e+38
    %v2659 = vmin.f32 %v2627, %v2631
    %v2660 = vmin.f32 %v2629, %v2633
    %v2661 = vmin.f32 %v2659, %v2635
    %v2662 = vmin.f32 %v2660, %v2637
    %v2663 = vmin.f32 %v2661, %v2639
    %v2664 = vmin.f32 %v2662, %v2641
    %v2665 = vmin.f32 %v2663, %v2643
    %v2666 = vmin.f32 %v2664, %v2645
    %v2667 = vmin.f32 %v2665, %v2647
    %v2668 = vmin.f32 %v2666, %v2649
    %v2669 = vmin.f32 %v2667, %v2651
    %v2670 = vmin.f32 %v2668, %v2653
    %v2671 = vmin.f32 %v2669, %v2655
    %v2672 = vmin.f32 %v2670, %v2657
    %v2673 = vmin.f32 %v2671, %v2672
    %v2674 = vmin.f32 %v2628, %v2632
    %v2675 = vmin.f32 %v2630, %v2634
    %v2676 = vmin.f32 %v2674, %v2636
    %v2677 = vmin.f32 %v2675, %v2638
    %v2678 = vmin.f32 %v2676, %v2640
    %v2679 = vmin.f32 %v2677, %v2642
    %v2680 = vmin.f32 %v2678, %v2644
    %v2681 = vmin.f32 %v2679, %v2646
    %v2682 = vmin.f32 %v2680, %v2648
    %v2683 = vmin.f32 %v2681, %v2650
    %v2684 = vmin.f32 %v2682, %v2652
    %v2685 = vmin.f32 %v2683, %v2654
    %v2686 = vmin.f32 %v2684, %v2656
    %v2687 = vmin.f32 %v2685, %v2658
    %v2688 = vmin.f32 %v2686, %v2687
    %v2689 = vmin.f32 %v2549, %v2673
    %v2690 = vmin.f32 %v2550, %v2688
    %v2691 = vsel %vm2577, 3e+38, %v2689
    %v2692 = vsel %vm2578, 3e+38, %v2690
    %v2693 = vmin.f32 %v2691, %v2692
    %v2694 = vrot.slane %v2693, 4
    %v2695 = vmin.f32 %v2693, %v2694
    %v2696 = vrot.slane %v2695, 2
    %v2697 = vmin.f32 %v2695, %v2696
    %v2698 = vrot.slane %v2697, 1
    %v2699 = vmin.f32 %v2697, %v2698
    %vm2700 = vcmp.eq.f32.partialorder %v2691, %v2699
    %vm2701 = vcmp.eq.f32.partialorder %v2692, %v2699
    %v2702 = vsel %vm2700, %v867, 16
    %v2703 = vsel %vm2701, %v868, 16
    %vm2704 = vcmp.lt.s32.totalorder %v2702, %v2703
    %v2705 = vsel %vm2704, %v2702, %v2703
    %v2706 = vrot.slane %v2705, 4
    %vm2707 = vcmp.lt.s32.totalorder %v2705, %v2706
    %v2708 = vsel %vm2707, %v2705, %v2706
    %v2709 = vrot.slane %v2708, 2
    %vm2710 = vcmp.lt.s32.totalorder %v2708, %v2709
    %v2711 = vsel %vm2710, %v2708, %v2709
    %v2712 = vrot.slane %v2711, 1
    %vm2713 = vcmp.lt.s32.totalorder %v2711, %v2712
    %v2714 = vsel %vm2713, %v2711, %v2712
    %vm2715 = vcmp.eq.s32.totalorder %v867, %v2714
    %vm2716 = vcmp.eq.s32.totalorder %v868, %v2714
    %vm2717 = vmor %vm2577, %vm2715
    %vm2718 = vmor %vm2578, %vm2716
    %vm2719 = vcmp.eq.s32.totalorder %v2714, 0
    %vm2720 = vcmp.eq.s32.totalorder %v2714, 1
    %vm2721 = vcmp.eq.s32.totalorder %v2714, 2
    %vm2722 = vcmp.eq.s32.totalorder %v2714, 3
    %vm2723 = vcmp.eq.s32.totalorder %v2714, 4
    %vm2724 = vcmp.eq.s32.totalorder %v2714, 5
    %vm2725 = vcmp.eq.s32.totalorder %v2714, 6
    %vm2726 = vcmp.eq.s32.totalorder %v2714, 7
    %vm2727 = vcmp.eq.s32.totalorder %v2714, 8
    %vm2728 = vcmp.eq.s32.totalorder %v2714, 9
    %vm2729 = vcmp.eq.s32.totalorder %v2714, 10
    %vm2730 = vcmp.eq.s32.totalorder %v2714, 11
    %vm2731 = vcmp.eq.s32.totalorder %v2714, 12
    %vm2732 = vcmp.eq.s32.totalorder %v2714, 13
    %vm2733 = vcmp.eq.s32.totalorder %v2714, 14
    %vm2734 = vcmp.eq.s32.totalorder %v2714, 15
    %v2735 = vsel %vm2719, 1, 0
    %v2736 = vsel %vm2720, 1, 0
    %v2737 = vsel %vm2721, 1, 0
    %v2738 = vsel %vm2722, 1, 0
    %v2739 = vsel %vm2723, 1, 0
    %v2740 = vsel %vm2724, 1, 0
    %v2741 = vsel %vm2725, 1, 0
    %v2742 = vsel %vm2726, 1, 0
    %v2743 = vsel %vm2727, 1, 0
    %v2744 = vsel %vm2728, 1, 0
    %v2745 = vsel %vm2729, 1, 0
    %v2746 = vsel %vm2730, 1, 0
    %v2747 = vsel %vm2731, 1, 0
    %v2748 = vsel %vm2732, 1, 0
    %v2749 = vsel %vm2733, 1, 0
    %v2750 = vsel %vm2734, 1, 0
    %vm2751 = vcmp.eq.s32.totalorder %v2735, 1
    %vm2752 = vcmp.eq.s32.totalorder %v2736, 1
    %vm2753 = vcmp.eq.s32.totalorder %v2737, 1
    %vm2754 = vcmp.eq.s32.totalorder %v2738, 1
    %vm2755 = vcmp.eq.s32.totalorder %v2739, 1
    %vm2756 = vcmp.eq.s32.totalorder %v2740, 1
    %vm2757 = vcmp.eq.s32.totalorder %v2741, 1
    %vm2758 = vcmp.eq.s32.totalorder %v2742, 1
    %vm2759 = vcmp.eq.s32.totalorder %v2743, 1
    %vm2760 = vcmp.eq.s32.totalorder %v2744, 1
    %vm2761 = vcmp.eq.s32.totalorder %v2745, 1
    %vm2762 = vcmp.eq.s32.totalorder %v2746, 1
    %vm2763 = vcmp.eq.s32.totalorder %v2747, 1
    %vm2764 = vcmp.eq.s32.totalorder %v2748, 1
    %vm2765 = vcmp.eq.s32.totalorder %v2749, 1
    %vm2766 = vcmp.eq.s32.totalorder %v2750, 1
    %v2767 = vsel %vm2751, %v796, 3e+38
    %v2768 = vsel %vm2751, %v797, 3e+38
    %v2769 = vsel %vm2752, %v798, 3e+38
    %v2770 = vsel %vm2752, %v799, 3e+38
    %v2771 = vsel %vm2753, %v800, 3e+38
    %v2772 = vsel %vm2753, %v801, 3e+38
    %v2773 = vsel %vm2754, %v802, 3e+38
    %v2774 = vsel %vm2754, %v803, 3e+38
    %v2775 = vsel %vm2755, %v804, 3e+38
    %v2776 = vsel %vm2755, %v805, 3e+38
    %v2777 = vsel %vm2756, %v806, 3e+38
    %v2778 = vsel %vm2756, %v807, 3e+38
    %v2779 = vsel %vm2757, %v808, 3e+38
    %v2780 = vsel %vm2757, %v809, 3e+38
    %v2781 = vsel %vm2758, %v810, 3e+38
    %v2782 = vsel %vm2758, %v811, 3e+38
    %v2783 = vsel %vm2759, %v812, 3e+38
    %v2784 = vsel %vm2759, %v813, 3e+38
    %v2785 = vsel %vm2760, %v814, 3e+38
    %v2786 = vsel %vm2760, %v815, 3e+38
    %v2787 = vsel %vm2761, %v816, 3e+38
    %v2788 = vsel %vm2761, %v817, 3e+38
    %v2789 = vsel %vm2762, %v818, 3e+38
    %v2790 = vsel %vm2762, %v819, 3e+38
    %v2791 = vsel %vm2763, %v820, 3e+38
    %v2792 = vsel %vm2763, %v821, 3e+38
    %v2793 = vsel %vm2764, %v822, 3e+38
    %v2794 = vsel %vm2764, %v823, 3e+38
    %v2795 = vsel %vm2765, %v824, 3e+38
    %v2796 = vsel %vm2765, %v825, 3e+38
    %v2797 = vsel %vm2766, %v826, 3e+38
    %v2798 = vsel %vm2766, %v827, 3e+38
    %v2799 = vmin.f32 %v2767, %v2771
    %v2800 = vmin.f32 %v2769, %v2773
    %v2801 = vmin.f32 %v2799, %v2775
    %v2802 = vmin.f32 %v2800, %v2777
    %v2803 = vmin.f32 %v2801, %v2779
    %v2804 = vmin.f32 %v2802, %v2781
    %v2805 = vmin.f32 %v2803, %v2783
    %v2806 = vmin.f32 %v2804, %v2785
    %v2807 = vmin.f32 %v2805, %v2787
    %v2808 = vmin.f32 %v2806, %v2789
    %v2809 = vmin.f32 %v2807, %v2791
    %v2810 = vmin.f32 %v2808, %v2793
    %v2811 = vmin.f32 %v2809, %v2795
    %v2812 = vmin.f32 %v2810, %v2797
    %v2813 = vmin.f32 %v2811, %v2812
    %v2814 = vmin.f32 %v2768, %v2772
    %v2815 = vmin.f32 %v2770, %v2774
    %v2816 = vmin.f32 %v2814, %v2776
    %v2817 = vmin.f32 %v2815, %v2778
    %v2818 = vmin.f32 %v2816, %v2780
    %v2819 = vmin.f32 %v2817, %v2782
    %v2820 = vmin.f32 %v2818, %v2784
    %v2821 = vmin.f32 %v2819, %v2786
    %v2822 = vmin.f32 %v2820, %v2788
    %v2823 = vmin.f32 %v2821, %v2790
    %v2824 = vmin.f32 %v2822, %v2792
    %v2825 = vmin.f32 %v2823, %v2794
    %v2826 = vmin.f32 %v2824, %v2796
    %v2827 = vmin.f32 %v2825, %v2798
    %v2828 = vmin.f32 %v2826, %v2827
    %v2829 = vmin.f32 %v2689, %v2813
    %v2830 = vmin.f32 %v2690, %v2828
    %v2831 = vsel %vm2717, 3e+38, %v2829
    %v2832 = vsel %vm2718, 3e+38, %v2830
    %v2833 = vmin.f32 %v2831, %v2832
    %v2834 = vrot.slane %v2833, 4
    %v2835 = vmin.f32 %v2833, %v2834
    %v2836 = vrot.slane %v2835, 2
    %v2837 = vmin.f32 %v2835, %v2836
    %v2838 = vrot.slane %v2837, 1
    %v2839 = vmin.f32 %v2837, %v2838
    %vm2840 = vcmask 1040384
    %v2841 = vsel %vm2840, %v879, %v1019
    %vm2842 = vcmask 1041408
    %v2843 = vsel %vm2842, %v2841, %v1159
    %vm2844 = vcmask 1042432
    %v2845 = vsel %vm2844, %v2843, %v1299
    %vm2846 = vcmask 1043456
    %v2847 = vsel %vm2846, %v2845, %v1439
    %vm2848 = vcmask 1044480
    %v2849 = vsel %vm2848, %v2847, %v1579
    %vm2850 = vcmask 1045504
    %v2851 = vsel %vm2850, %v2849, %v1719
    %vm2852 = vcmask 1046528
    %v2853 = vsel %vm2852, %v2851, %v1859
    %v2854 = vsel %vm2840, %v1999, %v2139
    %v2855 = vsel %vm2842, %v2854, %v2279
    %v2856 = vsel %vm2844, %v2855, %v2419
    %v2857 = vsel %vm2846, %v2856, %v2559
    %v2858 = vsel %vm2848, %v2857, %v2699
    %v2859 = vsel %vm2850, %v2858, %v2839
    %v2860 = vsel %vm2852, %v2859, 0.0
    %2861 = vst [vmem:[#allocation5] sm:$0xff] %v2853
    %2862 = vst [vmem:[#allocation5 + $0x8] sm:$0xff] %v2860
    // Predicated region
    $region10: #{tpu_custom_call.1} parent=1 // pred_check
      _
    $region11: #{tpu_custom_call.1} parent=1 // pred_check_branch
      %2864 = sbr.rel (0) target = $region13
    $region12: #{tpu_custom_call.1} parent=1 // pred_region
      %s2866 = ssub.s32 256, 256
      %2867 = vsyncadd [#allocation4], %s2866
      %s2868 = sshll.u32 [#allocation5], 4
      %s2869 = int_to_ptr.vmem [resolvable:$true] %s2868
      %2874 = dma.vmem_to_hbm [thread:$0]  %s2869, 256, %s1, [#allocation4], 128, 128, 8
    $region13: #{tpu_custom_call.1} parent=1 // pred_fallthru
      _
    // Predicated region
    $region14: #{tpu_custom_call.1} parent=1 // pred_check
      _
    $region15: #{tpu_custom_call.1} parent=1 // pred_check_branch
      %2876 = sbr.rel (0) target = $region17
    $region16: #{tpu_custom_call.1} parent=1 // pred_region
      %s2878 = ssub.s32 16, 16
      %2879 = vsyncadd [#allocation7], %s2878
      %s2881 = sshll.u32 [#allocation6], 4
      %s2882 = int_to_ptr.vmem [resolvable:$true] %s2881
      %2884 = dma.vmem_to_hbm [thread:$0]  %s2882, 16, %s2, [#allocation7]
    $region17: #{tpu_custom_call.1} parent=1 // pred_fallthru
      _
    // Predicated region
    $region18: #{tpu_custom_call.1} parent=1 // pred_check
      _
    $region19: #{tpu_custom_call.1} parent=1 // pred_check_branch
      %2886 = sbr.rel (0) target = $region21
    $region20: #{tpu_custom_call.1} parent=1 // pred_region
      %2887 = dma.done [#allocation4], 256
    $region21: #{tpu_custom_call.1} parent=1 // pred_fallthru
      _
    // Predicated region
    $region22: #{tpu_custom_call.1} parent=1 // pred_check
      _
    $region23: #{tpu_custom_call.1} parent=1 // pred_check_branch
      %2889 = sbr.rel (0) target = $region25
    $region24: #{tpu_custom_call.1} parent=1 // pred_region
      %2890 = dma.done [#allocation7], 16
    $region25: #{tpu_custom_call.1} parent=1 // pred_fallthru
      _
    %2891 = vsyncpa [#allocation3], 1
    %2892 = vsyncpa [#allocation4], 1
    %2893 = vsyncpa [#allocation7], 1

</llo_original>
